<compile_context>
chip_gen: v7x
topology: tpu7x:2x2x1
jax: 0.10.0
libtpu: 0.0.40
codegen_flags: <defaults>
</compile_context>

<pallas_src>
import functools

import numpy as np
import jax
import jax.numpy as jnp
from jax import lax
from jax.experimental import pallas as pl
from jax.experimental.pallas import tpu as pltpu

BN_EPS = 1e-5
_VMEM = pl.BlockSpec(memory_space=pltpu.MemorySpace.VMEM)


# ----------------------------------------------------------------------------
# Genotype (static configuration: parameter-free DARTS ops)
# ----------------------------------------------------------------------------
class Genotype:
    # 2 steps, 4 (op, state_index) pairs per step
    multi = [
        ("skip_connect", 0), ("avg_pool_3x3", 1), ("max_pool_3x3", 2), ("skip_connect", 3),
        ("max_pool_3x3", 4), ("skip_connect", 2), ("avg_pool_3x3", 0), ("skip_connect", 1),
    ]
    multi_concat = [4, 5]


# ----------------------------------------------------------------------------
# Fused cell kernel builder
# ----------------------------------------------------------------------------
def _build_cell_kernel(N, H, W, C, rows, p_slot, op_names, indices, concat):
    """rows[i]   = N*Hi  (row count of state i before the H-upsample)
       p_slot[i] = index into the P-matrix inputs (None if no H-upsample)."""
    L = W * C
    NH = N * H
    n_p = sum(1 for s in p_slot if s is not None)
    n_out = len(concat)
    NEG = float("-inf")

    def kernel(*refs):
        o = 0
        x_refs = refs[o:o + 4]; o += 4          # flattened inputs (N*Hi, Wi*Ci) f32
        m_refs = refs[o:o + 4]; o += 4          # bf16 conv weight w/ W-upsample folded in
        g_refs = refs[o:o + 4]; o += 4          # gamma, lane-tiled (1, L)
        b_refs = refs[o:o + 4]; o += 4          # beta,  lane-tiled (1, L)
        p_refs = refs[o:o + n_p]; o += n_p      # H-upsample 0/1 matrices (f32)
        out_refs = refs[o:o + n_out]

        # ---- boundary masks for roll-based 3x3 pooling (hoisted, shared) ----
        # Direction-agnostic: roll the index arrays with the SAME roll calls as
        # the data, then keep only sources that are genuine +/-1 neighbours.
        col = lax.broadcasted_iota(jnp.int32, (NH, L), 1)
        row = lax.broadcasted_iota(jnp.int32, (NH, L), 0)

        colA = pltpu.roll(col, C, axis=1)
        colB = pltpu.roll(col, L - C, axis=1)
        dWA = colA - col
        dWB = colB - col
        mWA = (dWA == C) | (dWA == -C)          # true w+/-1 column (no lane wrap)
        mWB = (dWB == C) | (dWB == -C)

        rowA = pltpu.roll(row, 1, axis=0)
        rowB = pltpu.roll(row, NH - 1, axis=0)
        dHA = rowA - row
        dHB = rowB - row
        hpos = row & (H - 1)                    # h inside each image (H is pow2)
        not_top = hpos != 0
        not_bot = hpos != (H - 1)
        mHA = ((dHA == 1) & not_bot) | ((dHA == -1) & not_top)
        mHB = ((dHB == 1) & not_bot) | ((dHB == -1) & not_top)

        # avg-pool divisor (count_include_pad=False) -> one reciprocal, hoisted.
        cnt = ((1.0 + jnp.where(mWA, 1.0, 0.0) + jnp.where(mWB, 1.0, 0.0)) *
               (1.0 + jnp.where(mHA, 1.0, 0.0) + jnp.where(mHB, 1.0, 0.0)))
        inv_cnt = 1.0 / cnt

        # ---- per-channel lane all-reduce over the W blocks (W is pow2) -------
        def w_allreduce(v):                      # v: (1, L) -> channel totals
            r = v                                #    replicated across all W
            shift = C
            while shift < L:
                r = r + pltpu.roll(r, shift, axis=1)
                shift *= 2
            return r

        # ---- fused ReLU -> 1x1 conv (+ W-upsample) -> BN FMA -> H-upsample ---
        states = []
        for i in range(4):
            x = jnp.maximum(x_refs[i][...], 0.0)                          # ReLU
            y = jnp.dot(x.astype(jnp.bfloat16), m_refs[i][...],           # bf16 MXU
                        preferred_element_type=jnp.float32)               # (rows_i, L)
            inv_n = 1.0 / float(rows[i] * W)
            # one-pass BN stats in f32: sum(y), sum(y*y) -> E[y], E[y^2]
            mean_l = w_allreduce(jnp.sum(y, axis=0, keepdims=True)) * inv_n
            ey2_l = w_allreduce(jnp.sum(y * y, axis=0, keepdims=True)) * inv_n
            var_l = ey2_l - mean_l * mean_l
            scale_l = g_refs[i][...] * lax.rsqrt(var_l + BN_EPS)
            shift_l = b_refs[i][...] - mean_l * scale_l
            ybn = y * scale_l + shift_l                                    # BN FMA
            if p_slot[i] is None:
                states.append(ybn)
            else:  # nearest H-upsample as a 0/1 left matmul (stays in VMEM)
                states.append(jnp.dot(p_refs[p_slot[i]][...], ybn,
                                      preferred_element_type=jnp.float32))

        # ---- separable 3x3 pooling (stride 1, pad 1) via rolls + masks -------
        def pool(s, is_max):
            pv = NEG if is_max else 0.0
            a = jnp.where(mWA, pltpu.roll(s, C, axis=1), pv)
            b = jnp.where(mWB, pltpu.roll(s, L - C, axis=1), pv)
            wp = jnp.maximum(jnp.maximum(a, s), b) if is_max else (a + s + b)
            u = jnp.where(mHA, pltpu.roll(wp, 1, axis=0), pv)
            d = jnp.where(mHB, pltpu.roll(wp, NH - 1, axis=0), pv)
            if is_max:
                return jnp.maximum(jnp.maximum(u, wp), d)
            return (u + wp + d) * inv_cnt        # count_include_pad=False

        def apply_op(name, s):
            if name == "skip_connect":
                return s                          # never padded / copied
            if name == "max_pool_3x3":
                return pool(s, True)
            if name == "avg_pool_3x3":
                return pool(s, False)
            # TODO(synk): other DARTS ops (sep_conv/dil_conv/none) are not used
            # by this genotype and are not implemented.
            raise NotImplementedError(name)

        # ---- DARTS steps:  s = op1(h1) + op2(h2) + op1(h3) + op2(h4) ---------
        for step in range(len(op_names) // 4):
            names = op_names[4 * step:4 * step + 4]
            idx = indices[4 * step:4 * step + 4]
            ops = (names[0], names[1], names[0], names[1])  # op3/op4 unused (as in torch)
            acc = None
            for name, j in zip(ops, idx):
                v = apply_op(name, states[j])
                acc = v if acc is None else acc + v
            states.append(acc)

        for o_ref, j in zip(out_refs, concat):
            o_ref[...] = states[j]                # lane-dense (NH, W*C) store

    return kernel


# ----------------------------------------------------------------------------
# Multi_Scale_Cell wrapper
# ----------------------------------------------------------------------------
class MultiScaleCellPallas:
    """Pallas-TPU implementation of Multi_Scale_Cell forward (training-mode BN)."""

    def __init__(self, genotype, C_in, C, key):
        self.upsample = (1, 2, 4, 8)
        op_names, indices = zip(*genotype.multi)
        assert len(op_names) == len(indices)
        self._steps = len(op_names) // 4
        self._concat = list(genotype.multi_concat)
        self._op_names = op_names
        self._indices = indices
        self.C = C
        self.C_in = list(C_in)

        self.w, self.gamma, self.beta = [], [], []
        for cin in C_in:
            key, k1, k2, k3 = jax.random.split(key, 4)
            self.w.append(jax.random.normal(k1, (cin, C), jnp.float32) / jnp.sqrt(float(cin)))
            self.gamma.append(1.0 + 0.1 * jax.random.normal(k2, (C,), jnp.float32))
            self.beta.append(0.1 * jax.random.normal(k3, (C,), jnp.float32))

        self._cache = {}

    # ---- constant (shape-dependent) operands + the fused pallas_call --------
    def _build(self, shapes):
        N, H, W, _ = shapes[0]
        C = self.C
        L = W * C
        NH = N * H
        # Roll-based pooling masks + lane tree-reduce assume power-of-two H, W.
        assert W >= 4 and (H & (H - 1)) == 0 and (W & (W - 1)) == 0, \
            "TODO(synk): non-power-of-two H/W needs modulo masks / general reduce"

        Ms, Ps, p_slot, rows = [], [], [], []
        for i, (n_, Hi, Wi, Ci) in enumerate(shapes):
            f = self.upsample[i]
            assert n_ == N and Hi * f == H and Wi * f == W and Ci == self.C_in[i]
            rows.append(N * Hi)
            # 1x1-conv weight with nearest W-upsample folded in (bf16 MXU operand):
            #   M[wi*Ci + k, (wi*f + j)*C + c] = w[k, c]
            E = np.repeat(np.eye(Wi, dtype=np.float32), f, axis=1)        # (Wi, W)
            Ms.append(jnp.kron(jnp.asarray(E), self.w[i]).astype(jnp.bfloat16))
            if f == 1:
                p_slot.append(None)
            else:
                p_slot.append(len(Ps))
                # nearest H-upsample as a per-image 0/1 left matmul.
                P = np.kron(np.eye(N, dtype=np.float32),
                            np.repeat(np.eye(Hi, dtype=np.float32), f, axis=0))
                Ps.append(jnp.asarray(P))                                 # (N*H, N*Hi)

        # gamma/beta pre-tiled to lane layout (1, W*C): index w*C + c -> [c].
        gl = [jnp.tile(g, W).reshape(1, L) for g in self.gamma]
        bl = [jnp.tile(b, W).reshape(1, L) for b in self.beta]

        consts = tuple(Ms) + tuple(gl) + tuple(bl) + tuple(Ps)

        kernel = _build_cell_kernel(N, H, W, C, rows, p_slot,
                                    self._op_names, self._indices, self._concat)
        n_in = 4 + len(consts)
        fn = pl.pallas_call(
            kernel,
            out_shape=tuple(jax.ShapeDtypeStruct((NH, L), jnp.float32)
                            for _ in self._concat),
            in_specs=[_VMEM] * n_in,
            out_specs=tuple(_VMEM for _ in self._concat),
            # No grid / scratch needed at these sizes; everything fits in VMEM.
            # TODO(synk): production sizes -> row-tiled grid with pooling halo,
            # dimension_semantics=("parallel",), Buffered(2), vmem_limit_bytes,
            # cross-tile BN-stat accumulation, and kron-split conv for v7x.
        )
        return fn, consts

    def __call__(self, states):
        shapes = tuple(tuple(int(d) for d in s.shape) for s in states)
        if shapes not in self._cache:
            self._cache[shapes] = self._build(shapes)
        fn, consts = self._cache[shapes]

        N, H, W, _ = shapes[0]
        x2 = [s.reshape(s.shape[0] * s.shape[1], s.shape[2] * s.shape[3]) for s in states]
        outs = fn(*x2, *consts)                               # single fused kernel
        outs = [o.reshape(N, H, W, self.C) for o in outs]     # free layout glue
        # TODO(synk): at production sizes, do this channel concat in-kernel (or
        # let downstream consume the two outputs separately) to save HBM traffic.
        return jnp.concatenate(outs, axis=-1)                 # channel concat


# ----------------------------------------------------------------------------
# Pure-JAX reference (sanity check)
# ----------------------------------------------------------------------------
def _ref_relu_conv_bn(x, w, gamma, beta, conv_bf16):
    h = jnp.maximum(x, 0.0)
    if conv_bf16:  # model the kernel's deliberate bf16 MXU operands
        h = h.astype(jnp.bfloat16).astype(jnp.float32)
        w = w.astype(jnp.bfloat16).astype(jnp.float32)
    y = jnp.einsum("nhwc,cd->nhwd", h, w, precision=jax.lax.Precision.HIGHEST)
    mean = y.mean(axis=(0, 1, 2), keepdims=True)
    var = ((y - mean) ** 2).mean(axis=(0, 1, 2), keepdims=True)
    return (y - mean) / jnp.sqrt(var + BN_EPS) * gamma + beta


def _ref_op(x, name):
    if name == "skip_connect":
        return x
    n, H, W, c = x.shape
    pad_val = -jnp.inf if name == "max_pool_3x3" else 0.0
    xp = jnp.pad(x, ((0, 0), (1, 1), (1, 1), (0, 0)), constant_values=pad_val)
    vals = [xp[:, dy:dy + H, dx:dx + W, :] for dy in range(3) for dx in range(3)]
    if name == "max_pool_3x3":
        return functools.reduce(jnp.maximum, vals)
    s = functools.reduce(jnp.add, vals)
    hh = jnp.arange(H)
    ww = jnp.arange(W)
    cnt_h = 1 + jnp.minimum(hh, 1) + jnp.minimum(H - 1 - hh, 1)
    cnt_w = 1 + jnp.minimum(ww, 1) + jnp.minimum(W - 1 - ww, 1)
    cnt = (cnt_h[:, None] * cnt_w[None, :]).astype(x.dtype)
    return s / cnt[None, :, :, None]


def ref_forward(states, cell, genotype, conv_bf16):
    ups = (1, 2, 4, 8)
    sts = []
    for i, x in enumerate(states):
        y = _ref_relu_conv_bn(x, cell.w[i], cell.gamma[i], cell.beta[i], conv_bf16)
        if ups[i] > 1:
            y = jnp.repeat(jnp.repeat(y, ups[i], axis=1), ups[i], axis=2)
        sts.append(y)
    op_names, indices = zip(*genotype.multi)
    for i in range(len(op_names) // 4):
        idx = indices[4 * i:4 * i + 4]
        op1, op2 = op_names[4 * i], op_names[4 * i + 1]
        h = [sts[j] for j in idx]
        sts.append(_ref_op(h[0], op1) + _ref_op(h[1], op2)
                   + _ref_op(h[2], op1) + _ref_op(h[3], op2))
    return jnp.concatenate([sts[i] for i in genotype.multi_concat], axis=-1)


# ----------------------------------------------------------------------------
if __name__ == "__main__":
    key = jax.random.PRNGKey(0)
    N, H, W = 2, 16, 16
    C_in = [8, 16, 32, 64]
    C = 16

    key, *ks = jax.random.split(key, 5)
    states = [
        jax.random.normal(ks[0], (N, H, W, C_in[0]), jnp.float32),
        jax.random.normal(ks[1], (N, H // 2, W // 2, C_in[1]), jnp.float32),
        jax.random.normal(ks[2], (N, H // 4, W // 4, C_in[2]), jnp.float32),
        jax.random.normal(ks[3], (N, H // 8, W // 8, C_in[3]), jnp.float32),
    ]

    key, cell_key = jax.random.split(key)
    cell = MultiScaleCellPallas(Genotype, C_in, C, cell_key)

    out = jax.block_until_ready(cell(states))
    assert out.shape == (N, H, W, C * len(Genotype.multi_concat)), out.shape

    # (1) Algorithmic check: reference with the conv operands quantized to bf16
    #     exactly like the kernel's MXU inputs; remaining gap is accumulation
    #     order / f32-emulated MXU passes in the small 0/1 upsample matmul.
    ref_q = jax.block_until_ready(ref_forward(states, cell, Genotype, conv_bf16=True))
    err_q = float(jnp.max(jnp.abs(out - ref_q)))
    assert err_q < 5e-2, f"mismatch vs bf16-conv reference: {err_q}"

    # (2) End-to-end check vs the pure-f32 reference: the gap is the deliberate
    #     bf16 MXU-operand rounding (perf-review item) on O(1..8) outputs.
    ref_f = jax.block_until_ready(ref_forward(states, cell, Genotype, conv_bf16=False))
    err_f = float(jnp.max(jnp.abs(out - ref_f)))
    assert err_f < 1.5e-1, f"mismatch vs f32 reference: {err_f}"

    print("KERNEL_OK")
</pallas_src>

<mosaic_0001>
module attributes {stable_mosaic.version = 11 : i64} {
  func.func @kernel(%arg0: memref<32x128xf32, #tpu.memory_space<vmem>>, %arg1: memref<16x128xf32, #tpu.memory_space<vmem>>, %arg2: memref<8x128xf32, #tpu.memory_space<vmem>>, %arg3: memref<4x128xf32, #tpu.memory_space<vmem>>, %arg4: memref<128x256xbf16, #tpu.memory_space<vmem>>, %arg5: memref<128x256xbf16, #tpu.memory_space<vmem>>, %arg6: memref<128x256xbf16, #tpu.memory_space<vmem>>, %arg7: memref<128x256xbf16, #tpu.memory_space<vmem>>, %arg8: memref<1x256xf32, #tpu.memory_space<vmem>>, %arg9: memref<1x256xf32, #tpu.memory_space<vmem>>, %arg10: memref<1x256xf32, #tpu.memory_space<vmem>>, %arg11: memref<1x256xf32, #tpu.memory_space<vmem>>, %arg12: memref<1x256xf32, #tpu.memory_space<vmem>>, %arg13: memref<1x256xf32, #tpu.memory_space<vmem>>, %arg14: memref<1x256xf32, #tpu.memory_space<vmem>>, %arg15: memref<1x256xf32, #tpu.memory_space<vmem>>, %arg16: memref<32x16xf32, #tpu.memory_space<vmem>>, %arg17: memref<32x8xf32, #tpu.memory_space<vmem>>, %arg18: memref<32x4xf32, #tpu.memory_space<vmem>>, %arg19: memref<32x256xf32, #tpu.memory_space<vmem>>, %arg20: memref<32x256xf32, #tpu.memory_space<vmem>>) attributes {dimension_semantics = [], scalar_prefetch = 0 : i64, scratch_operands = 0 : i64, tpu.core_type = #tpu.core_type<tc>} {
    %0 = tpu.iota {dimensions = array<i32: 1>} : vector<32x256xi32>
    %1 = tpu.iota {dimensions = array<i32: 0>} : vector<32x256xi32>
    %c16_i32 = arith.constant 16 : i32
    %2 = tpu.dynamic_rotate %0 by %c16_i32 dim 1 : vector<32x256xi32>, i32 -> vector<32x256xi32>
    %c240_i32 = arith.constant 240 : i32
    %3 = tpu.dynamic_rotate %0 by %c240_i32 dim 1 : vector<32x256xi32>, i32 -> vector<32x256xi32>
    %4 = arith.subi %2, %0 : vector<32x256xi32>
    %5 = arith.subi %3, %0 : vector<32x256xi32>
    %c16_i32_0 = arith.constant 16 : i32
    %6 = vector.broadcast %c16_i32_0 : i32 to vector<32x256xi32>
    %7 = arith.cmpi eq, %4, %6 : vector<32x256xi32>
    %c-16_i32 = arith.constant -16 : i32
    %8 = vector.broadcast %c-16_i32 : i32 to vector<32x256xi32>
    %9 = arith.cmpi eq, %4, %8 : vector<32x256xi32>
    %10 = arith.ori %7, %9 : vector<32x256xi1>
    %c16_i32_1 = arith.constant 16 : i32
    %11 = vector.broadcast %c16_i32_1 : i32 to vector<32x256xi32>
    %12 = arith.cmpi eq, %5, %11 : vector<32x256xi32>
    %c-16_i32_2 = arith.constant -16 : i32
    %13 = vector.broadcast %c-16_i32_2 : i32 to vector<32x256xi32>
    %14 = arith.cmpi eq, %5, %13 : vector<32x256xi32>
    %15 = arith.ori %12, %14 : vector<32x256xi1>
    %c1_i32 = arith.constant 1 : i32
    %16 = tpu.dynamic_rotate %1 by %c1_i32 dim 0 : vector<32x256xi32>, i32 -> vector<32x256xi32>
    %c31_i32 = arith.constant 31 : i32
    %17 = tpu.dynamic_rotate %1 by %c31_i32 dim 0 : vector<32x256xi32>, i32 -> vector<32x256xi32>
    %18 = arith.subi %16, %1 : vector<32x256xi32>
    %19 = arith.subi %17, %1 : vector<32x256xi32>
    %c15_i32 = arith.constant 15 : i32
    %20 = vector.broadcast %c15_i32 : i32 to vector<32x256xi32>
    %21 = arith.andi %1, %20 : vector<32x256xi32>
    %c0_i32 = arith.constant 0 : i32
    %22 = vector.broadcast %c0_i32 : i32 to vector<32x256xi32>
    %23 = arith.cmpi ne, %21, %22 : vector<32x256xi32>
    %c15_i32_3 = arith.constant 15 : i32
    %24 = vector.broadcast %c15_i32_3 : i32 to vector<32x256xi32>
    %25 = arith.cmpi ne, %21, %24 : vector<32x256xi32>
    %c1_i32_4 = arith.constant 1 : i32
    %26 = vector.broadcast %c1_i32_4 : i32 to vector<32x256xi32>
    %27 = arith.cmpi eq, %18, %26 : vector<32x256xi32>
    %28 = arith.andi %27, %25 : vector<32x256xi1>
    %c-1_i32 = arith.constant -1 : i32
    %29 = vector.broadcast %c-1_i32 : i32 to vector<32x256xi32>
    %30 = arith.cmpi eq, %18, %29 : vector<32x256xi32>
    %31 = arith.andi %30, %23 : vector<32x256xi1>
    %32 = arith.ori %28, %31 : vector<32x256xi1>
    %c1_i32_5 = arith.constant 1 : i32
    %33 = vector.broadcast %c1_i32_5 : i32 to vector<32x256xi32>
    %34 = arith.cmpi eq, %19, %33 : vector<32x256xi32>
    %35 = arith.andi %34, %25 : vector<32x256xi1>
    %c-1_i32_6 = arith.constant -1 : i32
    %36 = vector.broadcast %c-1_i32_6 : i32 to vector<32x256xi32>
    %37 = arith.cmpi eq, %19, %36 : vector<32x256xi32>
    %38 = arith.andi %37, %23 : vector<32x256xi1>
    %39 = arith.ori %35, %38 : vector<32x256xi1>
    %cst = arith.constant 1.000000e+00 : f32
    %cst_7 = arith.constant 0.000000e+00 : f32
    %40 = vector.broadcast %cst : f32 to vector<32x256xf32>
    %41 = vector.broadcast %cst_7 : f32 to vector<32x256xf32>
    %42 = arith.select %10, %40, %41 : vector<32x256xi1>, vector<32x256xf32>
    %cst_8 = arith.constant 1.000000e+00 : f32
    %43 = vector.broadcast %cst_8 : f32 to vector<32x256xf32>
    %44 = arith.addf %43, %42 : vector<32x256xf32>
    %cst_9 = arith.constant 1.000000e+00 : f32
    %cst_10 = arith.constant 0.000000e+00 : f32
    %45 = vector.broadcast %cst_9 : f32 to vector<32x256xf32>
    %46 = vector.broadcast %cst_10 : f32 to vector<32x256xf32>
    %47 = arith.select %15, %45, %46 : vector<32x256xi1>, vector<32x256xf32>
    %48 = arith.addf %44, %47 : vector<32x256xf32>
    %cst_11 = arith.constant 1.000000e+00 : f32
    %cst_12 = arith.constant 0.000000e+00 : f32
    %49 = vector.broadcast %cst_11 : f32 to vector<32x256xf32>
    %50 = vector.broadcast %cst_12 : f32 to vector<32x256xf32>
    %51 = arith.select %32, %49, %50 : vector<32x256xi1>, vector<32x256xf32>
    %cst_13 = arith.constant 1.000000e+00 : f32
    %52 = vector.broadcast %cst_13 : f32 to vector<32x256xf32>
    %53 = arith.addf %52, %51 : vector<32x256xf32>
    %cst_14 = arith.constant 1.000000e+00 : f32
    %cst_15 = arith.constant 0.000000e+00 : f32
    %54 = vector.broadcast %cst_14 : f32 to vector<32x256xf32>
    %55 = vector.broadcast %cst_15 : f32 to vector<32x256xf32>
    %56 = arith.select %39, %54, %55 : vector<32x256xi1>, vector<32x256xf32>
    %57 = arith.addf %53, %56 : vector<32x256xf32>
    %58 = arith.mulf %48, %57 : vector<32x256xf32>
    %cst_16 = arith.constant 1.000000e+00 : f32
    %59 = vector.broadcast %cst_16 : f32 to vector<32x256xf32>
    %60 = arith.divf %59, %58 : vector<32x256xf32>
    %c0 = arith.constant 0 : index
    %c0_17 = arith.constant 0 : index
    %61 = vector.load %arg0[%c0, %c0_17] : memref<32x128xf32, #tpu.memory_space<vmem>>, vector<32x128xf32>
    %cst_18 = arith.constant 0.000000e+00 : f32
    %62 = vector.broadcast %cst_18 : f32 to vector<32x128xf32>
    %63 = arith.maximumf %61, %62 : vector<32x128xf32>
    %64 = arith.truncf %63 : vector<32x128xf32> to vector<32x128xbf16>
    %c0_19 = arith.constant 0 : index
    %c0_20 = arith.constant 0 : index
    %65 = vector.load %arg4[%c0_19, %c0_20] : memref<128x256xbf16, #tpu.memory_space<vmem>>, vector<128x256xbf16>
    %cst_21 = arith.constant dense<0.000000e+00> : vector<32x256xf32>
    %66 = tpu.matmul %64, %65, %cst_21 {dimension_numbers = #tpu.dot_dimension_numbers<[1], [0], [0], [1], [0, 0, 1, 1], [], []>} : vector<32x128xbf16>, vector<128x256xbf16>, vector<32x256xf32> -> vector<32x256xf32>
    %cst_22 = arith.constant dense<0.000000e+00> : vector<256xf32>
    %67 = vector.multi_reduction <add>, %66, %cst_22 [0] : vector<32x256xf32> to vector<256xf32>
    %68 = vector.shape_cast %67 : vector<256xf32> to vector<1x256xf32>
    %c16_i32_23 = arith.constant 16 : i32
    %69 = tpu.dynamic_rotate %68 by %c16_i32_23 dim 1 : vector<1x256xf32>, i32 -> vector<1x256xf32>
    %70 = arith.addf %68, %69 : vector<1x256xf32>
    %c32_i32 = arith.constant 32 : i32
    %71 = tpu.dynamic_rotate %70 by %c32_i32 dim 1 : vector<1x256xf32>, i32 -> vector<1x256xf32>
    %72 = arith.addf %70, %71 : vector<1x256xf32>
    %c64_i32 = arith.constant 64 : i32
    %73 = tpu.dynamic_rotate %72 by %c64_i32 dim 1 : vector<1x256xf32>, i32 -> vector<1x256xf32>
    %74 = arith.addf %72, %73 : vector<1x256xf32>
    %c128_i32 = arith.constant 128 : i32
    %75 = tpu.dynamic_rotate %74 by %c128_i32 dim 1 : vector<1x256xf32>, i32 -> vector<1x256xf32>
    %76 = arith.addf %74, %75 : vector<1x256xf32>
    %cst_24 = arith.constant 0.001953125 : f32
    %77 = vector.broadcast %cst_24 : f32 to vector<1x256xf32>
    %78 = arith.mulf %76, %77 : vector<1x256xf32>
    %79 = arith.mulf %66, %66 : vector<32x256xf32>
    %cst_25 = arith.constant dense<0.000000e+00> : vector<256xf32>
    %80 = vector.multi_reduction <add>, %79, %cst_25 [0] : vector<32x256xf32> to vector<256xf32>
    %81 = vector.shape_cast %80 : vector<256xf32> to vector<1x256xf32>
    %c16_i32_26 = arith.constant 16 : i32
    %82 = tpu.dynamic_rotate %81 by %c16_i32_26 dim 1 : vector<1x256xf32>, i32 -> vector<1x256xf32>
    %83 = arith.addf %81, %82 : vector<1x256xf32>
    %c32_i32_27 = arith.constant 32 : i32
    %84 = tpu.dynamic_rotate %83 by %c32_i32_27 dim 1 : vector<1x256xf32>, i32 -> vector<1x256xf32>
    %85 = arith.addf %83, %84 : vector<1x256xf32>
    %c64_i32_28 = arith.constant 64 : i32
    %86 = tpu.dynamic_rotate %85 by %c64_i32_28 dim 1 : vector<1x256xf32>, i32 -> vector<1x256xf32>
    %87 = arith.addf %85, %86 : vector<1x256xf32>
    %c128_i32_29 = arith.constant 128 : i32
    %88 = tpu.dynamic_rotate %87 by %c128_i32_29 dim 1 : vector<1x256xf32>, i32 -> vector<1x256xf32>
    %89 = arith.addf %87, %88 : vector<1x256xf32>
    %cst_30 = arith.constant 0.001953125 : f32
    %90 = vector.broadcast %cst_30 : f32 to vector<1x256xf32>
    %91 = arith.mulf %89, %90 : vector<1x256xf32>
    %92 = arith.mulf %78, %78 : vector<1x256xf32>
    %93 = arith.subf %91, %92 : vector<1x256xf32>
    %c0_31 = arith.constant 0 : index
    %c0_32 = arith.constant 0 : index
    %94 = vector.load %arg8[%c0_31, %c0_32] : memref<1x256xf32, #tpu.memory_space<vmem>>, vector<1x256xf32>
    %cst_33 = arith.constant 9.99999974E-6 : f32
    %95 = vector.broadcast %cst_33 : f32 to vector<1x256xf32>
    %96 = arith.addf %93, %95 : vector<1x256xf32>
    %97 = math.rsqrt %96 : vector<1x256xf32>
    %98 = arith.mulf %94, %97 : vector<1x256xf32>
    %c0_34 = arith.constant 0 : index
    %c0_35 = arith.constant 0 : index
    %99 = vector.load %arg12[%c0_34, %c0_35] : memref<1x256xf32, #tpu.memory_space<vmem>>, vector<1x256xf32>
    %100 = arith.mulf %78, %98 : vector<1x256xf32>
    %101 = arith.subf %99, %100 : vector<1x256xf32>
    %102 = vector.broadcast %98 : vector<1x256xf32> to vector<32x256xf32>
    %103 = arith.mulf %66, %102 : vector<32x256xf32>
    %104 = vector.broadcast %101 : vector<1x256xf32> to vector<32x256xf32>
    %105 = arith.addf %103, %104 : vector<32x256xf32>
    %c0_36 = arith.constant 0 : index
    %c0_37 = arith.constant 0 : index
    %106 = vector.load %arg1[%c0_36, %c0_37] : memref<16x128xf32, #tpu.memory_space<vmem>>, vector<16x128xf32>
    %cst_38 = arith.constant 0.000000e+00 : f32
    %107 = vector.broadcast %cst_38 : f32 to vector<16x128xf32>
    %108 = arith.maximumf %106, %107 : vector<16x128xf32>
    %109 = arith.truncf %108 : vector<16x128xf32> to vector<16x128xbf16>
    %c0_39 = arith.constant 0 : index
    %c0_40 = arith.constant 0 : index
    %110 = vector.load %arg5[%c0_39, %c0_40] : memref<128x256xbf16, #tpu.memory_space<vmem>>, vector<128x256xbf16>
    %cst_41 = arith.constant dense<0.000000e+00> : vector<16x256xf32>
    %111 = tpu.matmul %109, %110, %cst_41 {dimension_numbers = #tpu.dot_dimension_numbers<[1], [0], [0], [1], [0, 0, 1, 1], [], []>} : vector<16x128xbf16>, vector<128x256xbf16>, vector<16x256xf32> -> vector<16x256xf32>
    %cst_42 = arith.constant dense<0.000000e+00> : vector<256xf32>
    %112 = vector.multi_reduction <add>, %111, %cst_42 [0] : vector<16x256xf32> to vector<256xf32>
    %113 = vector.shape_cast %112 : vector<256xf32> to vector<1x256xf32>
    %c16_i32_43 = arith.constant 16 : i32
    %114 = tpu.dynamic_rotate %113 by %c16_i32_43 dim 1 : vector<1x256xf32>, i32 -> vector<1x256xf32>
    %115 = arith.addf %113, %114 : vector<1x256xf32>
    %c32_i32_44 = arith.constant 32 : i32
    %116 = tpu.dynamic_rotate %115 by %c32_i32_44 dim 1 : vector<1x256xf32>, i32 -> vector<1x256xf32>
    %117 = arith.addf %115, %116 : vector<1x256xf32>
    %c64_i32_45 = arith.constant 64 : i32
    %118 = tpu.dynamic_rotate %117 by %c64_i32_45 dim 1 : vector<1x256xf32>, i32 -> vector<1x256xf32>
    %119 = arith.addf %117, %118 : vector<1x256xf32>
    %c128_i32_46 = arith.constant 128 : i32
    %120 = tpu.dynamic_rotate %119 by %c128_i32_46 dim 1 : vector<1x256xf32>, i32 -> vector<1x256xf32>
    %121 = arith.addf %119, %120 : vector<1x256xf32>
    %cst_47 = arith.constant 3.906250e-03 : f32
    %122 = vector.broadcast %cst_47 : f32 to vector<1x256xf32>
    %123 = arith.mulf %121, %122 : vector<1x256xf32>
    %124 = arith.mulf %111, %111 : vector<16x256xf32>
    %cst_48 = arith.constant dense<0.000000e+00> : vector<256xf32>
    %125 = vector.multi_reduction <add>, %124, %cst_48 [0] : vector<16x256xf32> to vector<256xf32>
    %126 = vector.shape_cast %125 : vector<256xf32> to vector<1x256xf32>
    %c16_i32_49 = arith.constant 16 : i32
    %127 = tpu.dynamic_rotate %126 by %c16_i32_49 dim 1 : vector<1x256xf32>, i32 -> vector<1x256xf32>
    %128 = arith.addf %126, %127 : vector<1x256xf32>
    %c32_i32_50 = arith.constant 32 : i32
    %129 = tpu.dynamic_rotate %128 by %c32_i32_50 dim 1 : vector<1x256xf32>, i32 -> vector<1x256xf32>
    %130 = arith.addf %128, %129 : vector<1x256xf32>
    %c64_i32_51 = arith.constant 64 : i32
    %131 = tpu.dynamic_rotate %130 by %c64_i32_51 dim 1 : vector<1x256xf32>, i32 -> vector<1x256xf32>
    %132 = arith.addf %130, %131 : vector<1x256xf32>
    %c128_i32_52 = arith.constant 128 : i32
    %133 = tpu.dynamic_rotate %132 by %c128_i32_52 dim 1 : vector<1x256xf32>, i32 -> vector<1x256xf32>
    %134 = arith.addf %132, %133 : vector<1x256xf32>
    %cst_53 = arith.constant 3.906250e-03 : f32
    %135 = vector.broadcast %cst_53 : f32 to vector<1x256xf32>
    %136 = arith.mulf %134, %135 : vector<1x256xf32>
    %137 = arith.mulf %123, %123 : vector<1x256xf32>
    %138 = arith.subf %136, %137 : vector<1x256xf32>
    %c0_54 = arith.constant 0 : index
    %c0_55 = arith.constant 0 : index
    %139 = vector.load %arg9[%c0_54, %c0_55] : memref<1x256xf32, #tpu.memory_space<vmem>>, vector<1x256xf32>
    %cst_56 = arith.constant 9.99999974E-6 : f32
    %140 = vector.broadcast %cst_56 : f32 to vector<1x256xf32>
    %141 = arith.addf %138, %140 : vector<1x256xf32>
    %142 = math.rsqrt %141 : vector<1x256xf32>
    %143 = arith.mulf %139, %142 : vector<1x256xf32>
    %c0_57 = arith.constant 0 : index
    %c0_58 = arith.constant 0 : index
    %144 = vector.load %arg13[%c0_57, %c0_58] : memref<1x256xf32, #tpu.memory_space<vmem>>, vector<1x256xf32>
    %145 = arith.mulf %123, %143 : vector<1x256xf32>
    %146 = arith.subf %144, %145 : vector<1x256xf32>
    %147 = vector.broadcast %143 : vector<1x256xf32> to vector<16x256xf32>
    %148 = arith.mulf %111, %147 : vector<16x256xf32>
    %149 = vector.broadcast %146 : vector<1x256xf32> to vector<16x256xf32>
    %150 = arith.addf %148, %149 : vector<16x256xf32>
    %c0_59 = arith.constant 0 : index
    %c0_60 = arith.constant 0 : index
    %151 = vector.load %arg16[%c0_59, %c0_60] : memref<32x16xf32, #tpu.memory_space<vmem>>, vector<32x16xf32>
    %cst_61 = arith.constant dense<0.000000e+00> : vector<32x256xf32>
    %152 = tpu.matmul %151, %150, %cst_61 {dimension_numbers = #tpu.dot_dimension_numbers<[1], [0], [0], [1], [0, 0, 1, 1], [], []>} : vector<32x16xf32>, vector<16x256xf32>, vector<32x256xf32> -> vector<32x256xf32>
    %c0_62 = arith.constant 0 : index
    %c0_63 = arith.constant 0 : index
    %153 = vector.load %arg2[%c0_62, %c0_63] : memref<8x128xf32, #tpu.memory_space<vmem>>, vector<8x128xf32>
    %cst_64 = arith.constant 0.000000e+00 : f32
    %154 = vector.broadcast %cst_64 : f32 to vector<8x128xf32>
    %155 = arith.maximumf %153, %154 : vector<8x128xf32>
    %156 = arith.truncf %155 : vector<8x128xf32> to vector<8x128xbf16>
    %c0_65 = arith.constant 0 : index
    %c0_66 = arith.constant 0 : index
    %157 = vector.load %arg6[%c0_65, %c0_66] : memref<128x256xbf16, #tpu.memory_space<vmem>>, vector<128x256xbf16>
    %cst_67 = arith.constant dense<0.000000e+00> : vector<8x256xf32>
    %158 = tpu.matmul %156, %157, %cst_67 {dimension_numbers = #tpu.dot_dimension_numbers<[1], [0], [0], [1], [0, 0, 1, 1], [], []>} : vector<8x128xbf16>, vector<128x256xbf16>, vector<8x256xf32> -> vector<8x256xf32>
    %cst_68 = arith.constant dense<0.000000e+00> : vector<256xf32>
    %159 = vector.multi_reduction <add>, %158, %cst_68 [0] : vector<8x256xf32> to vector<256xf32>
    %160 = vector.shape_cast %159 : vector<256xf32> to vector<1x256xf32>
    %c16_i32_69 = arith.constant 16 : i32
    %161 = tpu.dynamic_rotate %160 by %c16_i32_69 dim 1 : vector<1x256xf32>, i32 -> vector<1x256xf32>
    %162 = arith.addf %160, %161 : vector<1x256xf32>
    %c32_i32_70 = arith.constant 32 : i32
    %163 = tpu.dynamic_rotate %162 by %c32_i32_70 dim 1 : vector<1x256xf32>, i32 -> vector<1x256xf32>
    %164 = arith.addf %162, %163 : vector<1x256xf32>
    %c64_i32_71 = arith.constant 64 : i32
    %165 = tpu.dynamic_rotate %164 by %c64_i32_71 dim 1 : vector<1x256xf32>, i32 -> vector<1x256xf32>
    %166 = arith.addf %164, %165 : vector<1x256xf32>
    %c128_i32_72 = arith.constant 128 : i32
    %167 = tpu.dynamic_rotate %166 by %c128_i32_72 dim 1 : vector<1x256xf32>, i32 -> vector<1x256xf32>
    %168 = arith.addf %166, %167 : vector<1x256xf32>
    %cst_73 = arith.constant 7.812500e-03 : f32
    %169 = vector.broadcast %cst_73 : f32 to vector<1x256xf32>
    %170 = arith.mulf %168, %169 : vector<1x256xf32>
    %171 = arith.mulf %158, %158 : vector<8x256xf32>
    %cst_74 = arith.constant dense<0.000000e+00> : vector<256xf32>
    %172 = vector.multi_reduction <add>, %171, %cst_74 [0] : vector<8x256xf32> to vector<256xf32>
    %173 = vector.shape_cast %172 : vector<256xf32> to vector<1x256xf32>
    %c16_i32_75 = arith.constant 16 : i32
    %174 = tpu.dynamic_rotate %173 by %c16_i32_75 dim 1 : vector<1x256xf32>, i32 -> vector<1x256xf32>
    %175 = arith.addf %173, %174 : vector<1x256xf32>
    %c32_i32_76 = arith.constant 32 : i32
    %176 = tpu.dynamic_rotate %175 by %c32_i32_76 dim 1 : vector<1x256xf32>, i32 -> vector<1x256xf32>
    %177 = arith.addf %175, %176 : vector<1x256xf32>
    %c64_i32_77 = arith.constant 64 : i32
    %178 = tpu.dynamic_rotate %177 by %c64_i32_77 dim 1 : vector<1x256xf32>, i32 -> vector<1x256xf32>
    %179 = arith.addf %177, %178 : vector<1x256xf32>
    %c128_i32_78 = arith.constant 128 : i32
    %180 = tpu.dynamic_rotate %179 by %c128_i32_78 dim 1 : vector<1x256xf32>, i32 -> vector<1x256xf32>
    %181 = arith.addf %179, %180 : vector<1x256xf32>
    %cst_79 = arith.constant 7.812500e-03 : f32
    %182 = vector.broadcast %cst_79 : f32 to vector<1x256xf32>
    %183 = arith.mulf %181, %182 : vector<1x256xf32>
    %184 = arith.mulf %170, %170 : vector<1x256xf32>
    %185 = arith.subf %183, %184 : vector<1x256xf32>
    %c0_80 = arith.constant 0 : index
    %c0_81 = arith.constant 0 : index
    %186 = vector.load %arg10[%c0_80, %c0_81] : memref<1x256xf32, #tpu.memory_space<vmem>>, vector<1x256xf32>
    %cst_82 = arith.constant 9.99999974E-6 : f32
    %187 = vector.broadcast %cst_82 : f32 to vector<1x256xf32>
    %188 = arith.addf %185, %187 : vector<1x256xf32>
    %189 = math.rsqrt %188 : vector<1x256xf32>
    %190 = arith.mulf %186, %189 : vector<1x256xf32>
    %c0_83 = arith.constant 0 : index
    %c0_84 = arith.constant 0 : index
    %191 = vector.load %arg14[%c0_83, %c0_84] : memref<1x256xf32, #tpu.memory_space<vmem>>, vector<1x256xf32>
    %192 = arith.mulf %170, %190 : vector<1x256xf32>
    %193 = arith.subf %191, %192 : vector<1x256xf32>
    %194 = vector.broadcast %190 : vector<1x256xf32> to vector<8x256xf32>
    %195 = arith.mulf %158, %194 : vector<8x256xf32>
    %196 = vector.broadcast %193 : vector<1x256xf32> to vector<8x256xf32>
    %197 = arith.addf %195, %196 : vector<8x256xf32>
    %c0_85 = arith.constant 0 : index
    %c0_86 = arith.constant 0 : index
    %198 = vector.load %arg17[%c0_85, %c0_86] : memref<32x8xf32, #tpu.memory_space<vmem>>, vector<32x8xf32>
    %cst_87 = arith.constant dense<0.000000e+00> : vector<32x256xf32>
    %199 = tpu.matmul %198, %197, %cst_87 {dimension_numbers = #tpu.dot_dimension_numbers<[1], [0], [0], [1], [0, 0, 1, 1], [], []>} : vector<32x8xf32>, vector<8x256xf32>, vector<32x256xf32> -> vector<32x256xf32>
    %c0_88 = arith.constant 0 : index
    %c0_89 = arith.constant 0 : index
    %200 = vector.load %arg3[%c0_88, %c0_89] : memref<4x128xf32, #tpu.memory_space<vmem>>, vector<4x128xf32>
    %cst_90 = arith.constant 0.000000e+00 : f32
    %201 = vector.broadcast %cst_90 : f32 to vector<4x128xf32>
    %202 = arith.maximumf %200, %201 : vector<4x128xf32>
    %203 = arith.truncf %202 : vector<4x128xf32> to vector<4x128xbf16>
    %c0_91 = arith.constant 0 : index
    %c0_92 = arith.constant 0 : index
    %204 = vector.load %arg7[%c0_91, %c0_92] : memref<128x256xbf16, #tpu.memory_space<vmem>>, vector<128x256xbf16>
    %cst_93 = arith.constant dense<0.000000e+00> : vector<4x256xf32>
    %205 = tpu.matmul %203, %204, %cst_93 {dimension_numbers = #tpu.dot_dimension_numbers<[1], [0], [0], [1], [0, 0, 1, 1], [], []>} : vector<4x128xbf16>, vector<128x256xbf16>, vector<4x256xf32> -> vector<4x256xf32>
    %cst_94 = arith.constant dense<0.000000e+00> : vector<256xf32>
    %206 = vector.multi_reduction <add>, %205, %cst_94 [0] : vector<4x256xf32> to vector<256xf32>
    %207 = vector.shape_cast %206 : vector<256xf32> to vector<1x256xf32>
    %c16_i32_95 = arith.constant 16 : i32
    %208 = tpu.dynamic_rotate %207 by %c16_i32_95 dim 1 : vector<1x256xf32>, i32 -> vector<1x256xf32>
    %209 = arith.addf %207, %208 : vector<1x256xf32>
    %c32_i32_96 = arith.constant 32 : i32
    %210 = tpu.dynamic_rotate %209 by %c32_i32_96 dim 1 : vector<1x256xf32>, i32 -> vector<1x256xf32>
    %211 = arith.addf %209, %210 : vector<1x256xf32>
    %c64_i32_97 = arith.constant 64 : i32
    %212 = tpu.dynamic_rotate %211 by %c64_i32_97 dim 1 : vector<1x256xf32>, i32 -> vector<1x256xf32>
    %213 = arith.addf %211, %212 : vector<1x256xf32>
    %c128_i32_98 = arith.constant 128 : i32
    %214 = tpu.dynamic_rotate %213 by %c128_i32_98 dim 1 : vector<1x256xf32>, i32 -> vector<1x256xf32>
    %215 = arith.addf %213, %214 : vector<1x256xf32>
    %cst_99 = arith.constant 1.562500e-02 : f32
    %216 = vector.broadcast %cst_99 : f32 to vector<1x256xf32>
    %217 = arith.mulf %215, %216 : vector<1x256xf32>
    %218 = arith.mulf %205, %205 : vector<4x256xf32>
    %cst_100 = arith.constant dense<0.000000e+00> : vector<256xf32>
    %219 = vector.multi_reduction <add>, %218, %cst_100 [0] : vector<4x256xf32> to vector<256xf32>
    %220 = vector.shape_cast %219 : vector<256xf32> to vector<1x256xf32>
    %c16_i32_101 = arith.constant 16 : i32
    %221 = tpu.dynamic_rotate %220 by %c16_i32_101 dim 1 : vector<1x256xf32>, i32 -> vector<1x256xf32>
    %222 = arith.addf %220, %221 : vector<1x256xf32>
    %c32_i32_102 = arith.constant 32 : i32
    %223 = tpu.dynamic_rotate %222 by %c32_i32_102 dim 1 : vector<1x256xf32>, i32 -> vector<1x256xf32>
    %224 = arith.addf %222, %223 : vector<1x256xf32>
    %c64_i32_103 = arith.constant 64 : i32
    %225 = tpu.dynamic_rotate %224 by %c64_i32_103 dim 1 : vector<1x256xf32>, i32 -> vector<1x256xf32>
    %226 = arith.addf %224, %225 : vector<1x256xf32>
    %c128_i32_104 = arith.constant 128 : i32
    %227 = tpu.dynamic_rotate %226 by %c128_i32_104 dim 1 : vector<1x256xf32>, i32 -> vector<1x256xf32>
    %228 = arith.addf %226, %227 : vector<1x256xf32>
    %cst_105 = arith.constant 1.562500e-02 : f32
    %229 = vector.broadcast %cst_105 : f32 to vector<1x256xf32>
    %230 = arith.mulf %228, %229 : vector<1x256xf32>
    %231 = arith.mulf %217, %217 : vector<1x256xf32>
    %232 = arith.subf %230, %231 : vector<1x256xf32>
    %c0_106 = arith.constant 0 : index
    %c0_107 = arith.constant 0 : index
    %233 = vector.load %arg11[%c0_106, %c0_107] : memref<1x256xf32, #tpu.memory_space<vmem>>, vector<1x256xf32>
    %cst_108 = arith.constant 9.99999974E-6 : f32
    %234 = vector.broadcast %cst_108 : f32 to vector<1x256xf32>
    %235 = arith.addf %232, %234 : vector<1x256xf32>
    %236 = math.rsqrt %235 : vector<1x256xf32>
    %237 = arith.mulf %233, %236 : vector<1x256xf32>
    %c0_109 = arith.constant 0 : index
    %c0_110 = arith.constant 0 : index
    %238 = vector.load %arg15[%c0_109, %c0_110] : memref<1x256xf32, #tpu.memory_space<vmem>>, vector<1x256xf32>
    %239 = arith.mulf %217, %237 : vector<1x256xf32>
    %240 = arith.subf %238, %239 : vector<1x256xf32>
    %241 = vector.broadcast %237 : vector<1x256xf32> to vector<4x256xf32>
    %242 = arith.mulf %205, %241 : vector<4x256xf32>
    %243 = vector.broadcast %240 : vector<1x256xf32> to vector<4x256xf32>
    %244 = arith.addf %242, %243 : vector<4x256xf32>
    %c0_111 = arith.constant 0 : index
    %c0_112 = arith.constant 0 : index
    %245 = vector.load %arg18[%c0_111, %c0_112] : memref<32x4xf32, #tpu.memory_space<vmem>>, vector<32x4xf32>
    %cst_113 = arith.constant dense<0.000000e+00> : vector<32x256xf32>
    %246 = tpu.matmul %245, %244, %cst_113 {dimension_numbers = #tpu.dot_dimension_numbers<[1], [0], [0], [1], [0, 0, 1, 1], [], []>} : vector<32x4xf32>, vector<4x256xf32>, vector<32x256xf32> -> vector<32x256xf32>
    %c16_i32_114 = arith.constant 16 : i32
    %247 = tpu.dynamic_rotate %152 by %c16_i32_114 dim 1 : vector<32x256xf32>, i32 -> vector<32x256xf32>
    %cst_115 = arith.constant 0.000000e+00 : f32
    %248 = vector.broadcast %cst_115 : f32 to vector<32x256xf32>
    %249 = arith.select %10, %247, %248 : vector<32x256xi1>, vector<32x256xf32>
    %c240_i32_116 = arith.constant 240 : i32
    %250 = tpu.dynamic_rotate %152 by %c240_i32_116 dim 1 : vector<32x256xf32>, i32 -> vector<32x256xf32>
    %cst_117 = arith.constant 0.000000e+00 : f32
    %251 = vector.broadcast %cst_117 : f32 to vector<32x256xf32>
    %252 = arith.select %15, %250, %251 : vector<32x256xi1>, vector<32x256xf32>
    %253 = arith.addf %249, %152 : vector<32x256xf32>
    %254 = arith.addf %253, %252 : vector<32x256xf32>
    %c1_i32_118 = arith.constant 1 : i32
    %255 = tpu.dynamic_rotate %254 by %c1_i32_118 dim 0 : vector<32x256xf32>, i32 -> vector<32x256xf32>
    %cst_119 = arith.constant 0.000000e+00 : f32
    %256 = vector.broadcast %cst_119 : f32 to vector<32x256xf32>
    %257 = arith.select %32, %255, %256 : vector<32x256xi1>, vector<32x256xf32>
    %c31_i32_120 = arith.constant 31 : i32
    %258 = tpu.dynamic_rotate %254 by %c31_i32_120 dim 0 : vector<32x256xf32>, i32 -> vector<32x256xf32>
    %cst_121 = arith.constant 0.000000e+00 : f32
    %259 = vector.broadcast %cst_121 : f32 to vector<32x256xf32>
    %260 = arith.select %39, %258, %259 : vector<32x256xi1>, vector<32x256xf32>
    %261 = arith.addf %257, %254 : vector<32x256xf32>
    %262 = arith.addf %261, %260 : vector<32x256xf32>
    %263 = arith.mulf %262, %60 : vector<32x256xf32>
    %264 = arith.addf %105, %263 : vector<32x256xf32>
    %265 = arith.addf %264, %199 : vector<32x256xf32>
    %c16_i32_122 = arith.constant 16 : i32
    %266 = tpu.dynamic_rotate %246 by %c16_i32_122 dim 1 : vector<32x256xf32>, i32 -> vector<32x256xf32>
    %cst_123 = arith.constant 0.000000e+00 : f32
    %267 = vector.broadcast %cst_123 : f32 to vector<32x256xf32>
    %268 = arith.select %10, %266, %267 : vector<32x256xi1>, vector<32x256xf32>
    %c240_i32_124 = arith.constant 240 : i32
    %269 = tpu.dynamic_rotate %246 by %c240_i32_124 dim 1 : vector<32x256xf32>, i32 -> vector<32x256xf32>
    %cst_125 = arith.constant 0.000000e+00 : f32
    %270 = vector.broadcast %cst_125 : f32 to vector<32x256xf32>
    %271 = arith.select %15, %269, %270 : vector<32x256xi1>, vector<32x256xf32>
    %272 = arith.addf %268, %246 : vector<32x256xf32>
    %273 = arith.addf %272, %271 : vector<32x256xf32>
    %c1_i32_126 = arith.constant 1 : i32
    %274 = tpu.dynamic_rotate %273 by %c1_i32_126 dim 0 : vector<32x256xf32>, i32 -> vector<32x256xf32>
    %cst_127 = arith.constant 0.000000e+00 : f32
    %275 = vector.broadcast %cst_127 : f32 to vector<32x256xf32>
    %276 = arith.select %32, %274, %275 : vector<32x256xi1>, vector<32x256xf32>
    %c31_i32_128 = arith.constant 31 : i32
    %277 = tpu.dynamic_rotate %273 by %c31_i32_128 dim 0 : vector<32x256xf32>, i32 -> vector<32x256xf32>
    %cst_129 = arith.constant 0.000000e+00 : f32
    %278 = vector.broadcast %cst_129 : f32 to vector<32x256xf32>
    %279 = arith.select %39, %277, %278 : vector<32x256xi1>, vector<32x256xf32>
    %280 = arith.addf %276, %273 : vector<32x256xf32>
    %281 = arith.addf %280, %279 : vector<32x256xf32>
    %282 = arith.mulf %281, %60 : vector<32x256xf32>
    %283 = arith.addf %265, %282 : vector<32x256xf32>
    %c16_i32_130 = arith.constant 16 : i32
    %284 = tpu.dynamic_rotate %283 by %c16_i32_130 dim 1 : vector<32x256xf32>, i32 -> vector<32x256xf32>
    %cst_131 = arith.constant 0xFF800000 : f32
    %285 = vector.broadcast %cst_131 : f32 to vector<32x256xf32>
    %286 = arith.select %10, %284, %285 : vector<32x256xi1>, vector<32x256xf32>
    %c240_i32_132 = arith.constant 240 : i32
    %287 = tpu.dynamic_rotate %283 by %c240_i32_132 dim 1 : vector<32x256xf32>, i32 -> vector<32x256xf32>
    %cst_133 = arith.constant 0xFF800000 : f32
    %288 = vector.broadcast %cst_133 : f32 to vector<32x256xf32>
    %289 = arith.select %15, %287, %288 : vector<32x256xi1>, vector<32x256xf32>
    %290 = arith.maximumf %286, %283 : vector<32x256xf32>
    %291 = arith.maximumf %290, %289 : vector<32x256xf32>
    %c1_i32_134 = arith.constant 1 : i32
    %292 = tpu.dynamic_rotate %291 by %c1_i32_134 dim 0 : vector<32x256xf32>, i32 -> vector<32x256xf32>
    %cst_135 = arith.constant 0xFF800000 : f32
    %293 = vector.broadcast %cst_135 : f32 to vector<32x256xf32>
    %294 = arith.select %32, %292, %293 : vector<32x256xi1>, vector<32x256xf32>
    %c31_i32_136 = arith.constant 31 : i32
    %295 = tpu.dynamic_rotate %291 by %c31_i32_136 dim 0 : vector<32x256xf32>, i32 -> vector<32x256xf32>
    %cst_137 = arith.constant 0xFF800000 : f32
    %296 = vector.broadcast %cst_137 : f32 to vector<32x256xf32>
    %297 = arith.select %39, %295, %296 : vector<32x256xi1>, vector<32x256xf32>
    %298 = arith.maximumf %294, %291 : vector<32x256xf32>
    %299 = arith.maximumf %298, %297 : vector<32x256xf32>
    %300 = arith.addf %299, %199 : vector<32x256xf32>
    %c16_i32_138 = arith.constant 16 : i32
    %301 = tpu.dynamic_rotate %105 by %c16_i32_138 dim 1 : vector<32x256xf32>, i32 -> vector<32x256xf32>
    %cst_139 = arith.constant 0xFF800000 : f32
    %302 = vector.broadcast %cst_139 : f32 to vector<32x256xf32>
    %303 = arith.select %10, %301, %302 : vector<32x256xi1>, vector<32x256xf32>
    %c240_i32_140 = arith.constant 240 : i32
    %304 = tpu.dynamic_rotate %105 by %c240_i32_140 dim 1 : vector<32x256xf32>, i32 -> vector<32x256xf32>
    %cst_141 = arith.constant 0xFF800000 : f32
    %305 = vector.broadcast %cst_141 : f32 to vector<32x256xf32>
    %306 = arith.select %15, %304, %305 : vector<32x256xi1>, vector<32x256xf32>
    %307 = arith.maximumf %303, %105 : vector<32x256xf32>
    %308 = arith.maximumf %307, %306 : vector<32x256xf32>
    %c1_i32_142 = arith.constant 1 : i32
    %309 = tpu.dynamic_rotate %308 by %c1_i32_142 dim 0 : vector<32x256xf32>, i32 -> vector<32x256xf32>
    %cst_143 = arith.constant 0xFF800000 : f32
    %310 = vector.broadcast %cst_143 : f32 to vector<32x256xf32>
    %311 = arith.select %32, %309, %310 : vector<32x256xi1>, vector<32x256xf32>
    %c31_i32_144 = arith.constant 31 : i32
    %312 = tpu.dynamic_rotate %308 by %c31_i32_144 dim 0 : vector<32x256xf32>, i32 -> vector<32x256xf32>
    %cst_145 = arith.constant 0xFF800000 : f32
    %313 = vector.broadcast %cst_145 : f32 to vector<32x256xf32>
    %314 = arith.select %39, %312, %313 : vector<32x256xi1>, vector<32x256xf32>
    %315 = arith.maximumf %311, %308 : vector<32x256xf32>
    %316 = arith.maximumf %315, %314 : vector<32x256xf32>
    %317 = arith.addf %300, %316 : vector<32x256xf32>
    %318 = arith.addf %317, %152 : vector<32x256xf32>
    %c0_146 = arith.constant 0 : index
    %c0_147 = arith.constant 0 : index
    %319 = vector.load %arg19[%c0_146, %c0_147] : memref<32x256xf32, #tpu.memory_space<vmem>>, vector<32x256xf32>
    tpu.vector_store %arg19[%c0_146, %c0_147], %283 {strides = array<i32>} : memref<32x256xf32, #tpu.memory_space<vmem>>, vector<32x256xf32>,
    %c0_148 = arith.constant 0 : index
    %c0_149 = arith.constant 0 : index
    %320 = vector.load %arg20[%c0_148, %c0_149] : memref<32x256xf32, #tpu.memory_space<vmem>>, vector<32x256xf32>
    tpu.vector_store %arg20[%c0_148, %c0_149], %318 {strides = array<i32>} : memref<32x256xf32, #tpu.memory_space<vmem>>, vector<32x256xf32>,
    return
  }
}

</mosaic_0001>

<llo_original>
// kernel: tpu_custom_call.1
$region0: #{tpu_custom_call.1}
  #allocation0 [shape = 'u32[]', space=smem, size = 0x4, offset = 0x4, fixed_abs, tag = 'smem constant byte address 0x4 - core index']
  #allocation1 [shape = 'u32[144,128]{1,0:T(1,128)}', space=vmem, size = 0x12000, scoped, tag = 'internal scratch']
  %s0 = inlined_call_operand.hbm [shape: f32[32,128], index: 0, kind: input, shape index: {}]
  %s1 = inlined_call_operand.hbm [shape: f32[16,128], index: 1, kind: input, shape index: {}]
  %s2 = inlined_call_operand.vmem [shape: f32[8,128], index: 2, kind: input, shape index: {}]
  %s3 = inlined_call_operand.hbm [shape: f32[4,128], index: 3, kind: input, shape index: {}]
  %s4 = inlined_call_operand.vmem [shape: bf16[128,256], index: 4, kind: input, shape index: {}]
  %s5 = inlined_call_operand.hbm [shape: bf16[128,256], index: 5, kind: input, shape index: {}]
  %s6 = inlined_call_operand.hbm [shape: bf16[128,256], index: 6, kind: input, shape index: {}]
  %s7 = inlined_call_operand.hbm [shape: bf16[128,256], index: 7, kind: input, shape index: {}]
  %s8 = inlined_call_operand.hbm [shape: f32[1,256], index: 8, kind: input, shape index: {}]
  %s9 = inlined_call_operand.hbm [shape: f32[1,256], index: 9, kind: input, shape index: {}]
  %s10 = inlined_call_operand.hbm [shape: f32[1,256], index: 10, kind: input, shape index: {}]
  %s11 = inlined_call_operand.hbm [shape: f32[1,256], index: 11, kind: input, shape index: {}]
  %s12 = inlined_call_operand.vmem [shape: f32[1,256], index: 12, kind: input, shape index: {}]
  %s13 = inlined_call_operand.vmem [shape: f32[1,256], index: 13, kind: input, shape index: {}]
  %s14 = inlined_call_operand.vmem [shape: f32[1,256], index: 14, kind: input, shape index: {}]
  %s15 = inlined_call_operand.vmem [shape: f32[1,256], index: 15, kind: input, shape index: {}]
  %s16 = inlined_call_operand.vmem [shape: f32[32,16], index: 16, kind: input, shape index: {}]
  %s17 = inlined_call_operand.vmem [shape: f32[32,8], index: 17, kind: input, shape index: {}]
  %s18 = inlined_call_operand.vmem [shape: f32[32,4], index: 18, kind: input, shape index: {}]
  %s19 = inlined_call_operand.hbm [shape: f32[32,256], index: 19, kind: output, shape index: {0}]
  %s20 = inlined_call_operand.hbm [shape: f32[32,256], index: 20, kind: output, shape index: {1}]
  %21 = xla_tuple %s19, %s20
  %s22 = sld [smem:[#allocation0]]
  $region134: #{tpu_custom_call.1} parent=0
    _
  %s24 = ssub.s32 1, %s22
  %s25 = scalar_select 0, %s24, %s22
  $region1: #{tpu_custom_call.1} parent=0
    #allocation2 [shape = 'u8[16384]{0}', space=vmem, size = 0x4000, scoped, tag = 'input window, operand 0, single buffered']
    #allocation3 [shape = 's32[1]{0}', space=sflag, size = 0x4, scoped, tag = 'scoped memory for tpu_custom_call.1']
    #allocation4 [shape = 's32[1]{0}', space=sflag, size = 0x4, scoped, tag = 'scoped memory for tpu_custom_call.1']
    #allocation5 [shape = 'u8[8192]{0}', space=vmem, size = 0x2000, scoped, tag = 'input window, operand 1, single buffered']
    #allocation6 [shape = 's32[1]{0}', space=sflag, size = 0x4, scoped, tag = 'scoped memory for tpu_custom_call.1']
    #allocation7 [shape = 'u8[2048]{0}', space=vmem, size = 0x800, scoped, tag = 'input window, operand 3, single buffered']
    #allocation8 [shape = 'u8[65536]{0}', space=vmem, size = 0x10000, scoped, tag = 'input window, operand 5, single buffered']
    #allocation9 [shape = 's32[1]{0}', space=sflag, size = 0x4, scoped, tag = 'scoped memory for tpu_custom_call.1']
    #allocation10 [shape = 'u8[65536]{0}', space=vmem, size = 0x10000, scoped, tag = 'input window, operand 6, single buffered']
    #allocation11 [shape = 'u8[65536]{0}', space=vmem, size = 0x10000, scoped, tag = 'input window, operand 7, single buffered']
    #allocation12 [shape = 's32[1]{0}', space=sflag, size = 0x4, scoped, tag = 'scoped memory for tpu_custom_call.1']
    #allocation13 [shape = 'u8[1024]{0}', space=vmem, size = 0x400, scoped, tag = 'input window, operand 8, single buffered']
    #allocation14 [shape = 'u8[1024]{0}', space=vmem, size = 0x400, scoped, tag = 'input window, operand 9, single buffered']
    #allocation15 [shape = 's32[1]{0}', space=sflag, size = 0x4, scoped, tag = 'scoped memory for tpu_custom_call.1']
    #allocation16 [shape = 'u8[1024]{0}', space=vmem, size = 0x400, scoped, tag = 'input window, operand 10, single buffered']
    #allocation17 [shape = 'u8[1024]{0}', space=vmem, size = 0x400, scoped, tag = 'input window, operand 11, single buffered']
    #allocation18 [shape = 's32[1]{0}', space=sflag, size = 0x4, scoped, tag = 'scoped memory for tpu_custom_call.1']
    #allocation19 [shape = 'u8[32768]{0}', space=vmem, size = 0x8000, scoped, tag = 'output window, operand 0, single buffered']
    #allocation20 [shape = 'u8[32768]{0}', space=vmem, size = 0x8000, scoped, tag = 'output window, operand 1, single buffered']
    #allocation21 [shape = 's32[1]{0}', space=sflag, size = 0x4, scoped, tag = 'scoped memory for tpu_custom_call.1']
    %26 = vsyncpa [#allocation3], 0
    %27 = vsyncpa [#allocation6], 0
    %28 = vsyncpa [#allocation9], 0
    %29 = vsyncpa [#allocation12], 0
    %30 = vsyncpa [#allocation15], 0
    %31 = vsyncpa [#allocation18], 0
    %32 = vsyncpa [#allocation4], 0
    %33 = vsyncpa [#allocation21], 0
    // Predicated region
    $region2: #{tpu_custom_call.1} parent=1 // pred_check
      _
    $region3: #{tpu_custom_call.1} parent=1 // pred_check_branch
      %35 = sbr.rel (0) target = $region5
    $region4: #{tpu_custom_call.1} parent=1 // pred_region
      %s37 = ssub.s32 512, 512
      %38 = vsyncadd [#allocation3], %s37
      %s39 = sshll.u32 [#allocation2], 4
      %s40 = int_to_ptr.vmem [resolvable:$true] %s39
      %45 = dma.hbm_to_vmem [thread:$0]  %s0, 512, %s40, [#allocation3], 128, 128, 8
    $region5: #{tpu_custom_call.1} parent=1 // pred_fallthru
      _
    // Predicated region
    $region6: #{tpu_custom_call.1} parent=1 // pred_check
      _
    $region7: #{tpu_custom_call.1} parent=1 // pred_check_branch
      %47 = sbr.rel (0) target = $region9
    $region8: #{tpu_custom_call.1} parent=1 // pred_region
      %s49 = ssub.s32 256, 256
      %50 = vsyncadd [#allocation6], %s49
      %s51 = sshll.u32 [#allocation5], 4
      %s52 = int_to_ptr.vmem [resolvable:$true] %s51
      %57 = dma.hbm_to_vmem [thread:$0]  %s1, 256, %s52, [#allocation6], 128, 128, 8
    $region9: #{tpu_custom_call.1} parent=1 // pred_fallthru
      _
    // Predicated region
    $region10: #{tpu_custom_call.1} parent=1 // pred_check
      _
    $region11: #{tpu_custom_call.1} parent=1 // pred_check_branch
      %59 = sbr.rel (0) target = $region13
    $region12: #{tpu_custom_call.1} parent=1 // pred_region
      _
    $region13: #{tpu_custom_call.1} parent=1 // pred_fallthru
      _
    // Predicated region
    $region14: #{tpu_custom_call.1} parent=1 // pred_check
      _
    $region15: #{tpu_custom_call.1} parent=1 // pred_check_branch
      %61 = sbr.rel (0) target = $region17
    $region16: #{tpu_custom_call.1} parent=1 // pred_region
      %s63 = ssub.s32 64, 64
      %64 = vsyncadd [#allocation6], %s63
      %s66 = sshll.u32 [#allocation7], 4
      %s67 = int_to_ptr.vmem [resolvable:$true] %s66
      %69 = dma.hbm_to_vmem [thread:$0]  %s3, 64, %s67, [#allocation6]
    $region17: #{tpu_custom_call.1} parent=1 // pred_fallthru
      _
    // Predicated region
    $region18: #{tpu_custom_call.1} parent=1 // pred_check
      _
    $region19: #{tpu_custom_call.1} parent=1 // pred_check_branch
      %71 = sbr.rel (0) target = $region21
    $region20: #{tpu_custom_call.1} parent=1 // pred_region
      _
    $region21: #{tpu_custom_call.1} parent=1 // pred_fallthru
      _
    // Predicated region
    $region22: #{tpu_custom_call.1} parent=1 // pred_check
      _
    $region23: #{tpu_custom_call.1} parent=1 // pred_check_branch
      %73 = sbr.rel (0) target = $region25
    $region24: #{tpu_custom_call.1} parent=1 // pred_region
      %s75 = ssub.s32 2048, 2048
      %76 = vsyncadd [#allocation9], %s75
      %s77 = sshll.u32 [#allocation8], 4
      %s78 = int_to_ptr.vmem [resolvable:$true] %s77
      %83 = dma.hbm_to_vmem [thread:$0]  %s5, 2048, %s78, [#allocation9], 128, 128, 8
    $region25: #{tpu_custom_call.1} parent=1 // pred_fallthru
      _
    // Predicated region
    $region26: #{tpu_custom_call.1} parent=1 // pred_check
      _
    $region27: #{tpu_custom_call.1} parent=1 // pred_check_branch
      %85 = sbr.rel (0) target = $region29
    $region28: #{tpu_custom_call.1} parent=1 // pred_region
      %s87 = ssub.s32 2048, 2048
      %88 = vsyncadd [#allocation9], %s87
      %s89 = sshll.u32 [#allocation10], 4
      %s90 = int_to_ptr.vmem [resolvable:$true] %s89
      %95 = dma.hbm_to_vmem [thread:$0]  %s6, 2048, %s90, [#allocation9], 128, 128, 8
    $region29: #{tpu_custom_call.1} parent=1 // pred_fallthru
      _
    // Predicated region
    $region30: #{tpu_custom_call.1} parent=1 // pred_check
      _
    $region31: #{tpu_custom_call.1} parent=1 // pred_check_branch
      %97 = sbr.rel (0) target = $region33
    $region32: #{tpu_custom_call.1} parent=1 // pred_region
      %s99 = ssub.s32 2048, 2048
      %100 = vsyncadd [#allocation12], %s99
      %s101 = sshll.u32 [#allocation11], 4
      %s102 = int_to_ptr.vmem [resolvable:$true] %s101
      %107 = dma.hbm_to_vmem [thread:$0]  %s7, 2048, %s102, [#allocation12], 128, 128, 8
    $region33: #{tpu_custom_call.1} parent=1 // pred_fallthru
      _
    // Predicated region
    $region34: #{tpu_custom_call.1} parent=1 // pred_check
      _
    $region35: #{tpu_custom_call.1} parent=1 // pred_check_branch
      %109 = sbr.rel (0) target = $region37
    $region36: #{tpu_custom_call.1} parent=1 // pred_region
      %s111 = ssub.s32 32, 32
      %112 = vsyncadd [#allocation12], %s111
      %s114 = sshll.u32 [#allocation13], 4
      %s115 = int_to_ptr.vmem [resolvable:$true] %s114
      %117 = dma.hbm_to_vmem [thread:$0]  %s8, 32, %s115, [#allocation12]
    $region37: #{tpu_custom_call.1} parent=1 // pred_fallthru
      _
    // Predicated region
    $region38: #{tpu_custom_call.1} parent=1 // pred_check
      _
    $region39: #{tpu_custom_call.1} parent=1 // pred_check_branch
      %119 = sbr.rel (0) target = $region41
    $region40: #{tpu_custom_call.1} parent=1 // pred_region
      %s121 = ssub.s32 32, 32
      %122 = vsyncadd [#allocation15], %s121
      %s124 = sshll.u32 [#allocation14], 4
      %s125 = int_to_ptr.vmem [resolvable:$true] %s124
      %127 = dma.hbm_to_vmem [thread:$0]  %s9, 32, %s125, [#allocation15]
    $region41: #{tpu_custom_call.1} parent=1 // pred_fallthru
      _
    // Predicated region
    $region42: #{tpu_custom_call.1} parent=1 // pred_check
      _
    $region43: #{tpu_custom_call.1} parent=1 // pred_check_branch
      %129 = sbr.rel (0) target = $region45
    $region44: #{tpu_custom_call.1} parent=1 // pred_region
      %s131 = ssub.s32 32, 32
      %132 = vsyncadd [#allocation15], %s131
      %s134 = sshll.u32 [#allocation16], 4
      %s135 = int_to_ptr.vmem [resolvable:$true] %s134
      %137 = dma.hbm_to_vmem [thread:$0]  %s10, 32, %s135, [#allocation15]
    $region45: #{tpu_custom_call.1} parent=1 // pred_fallthru
      _
    // Predicated region
    $region46: #{tpu_custom_call.1} parent=1 // pred_check
      _
    $region47: #{tpu_custom_call.1} parent=1 // pred_check_branch
      %139 = sbr.rel (0) target = $region49
    $region48: #{tpu_custom_call.1} parent=1 // pred_region
      %s141 = ssub.s32 32, 32
      %142 = vsyncadd [#allocation18], %s141
      %s144 = sshll.u32 [#allocation17], 4
      %s145 = int_to_ptr.vmem [resolvable:$true] %s144
      %147 = dma.hbm_to_vmem [thread:$0]  %s11, 32, %s145, [#allocation18]
    $region49: #{tpu_custom_call.1} parent=1 // pred_fallthru
      _
    // Predicated region
    $region50: #{tpu_custom_call.1} parent=1 // pred_check
      _
    $region51: #{tpu_custom_call.1} parent=1 // pred_check_branch
      %149 = sbr.rel (0) target = $region53
    $region52: #{tpu_custom_call.1} parent=1 // pred_region
      _
    $region53: #{tpu_custom_call.1} parent=1 // pred_fallthru
      _
    // Predicated region
    $region54: #{tpu_custom_call.1} parent=1 // pred_check
      _
    $region55: #{tpu_custom_call.1} parent=1 // pred_check_branch
      %151 = sbr.rel (0) target = $region57
    $region56: #{tpu_custom_call.1} parent=1 // pred_region
      _
    $region57: #{tpu_custom_call.1} parent=1 // pred_fallthru
      _
    // Predicated region
    $region58: #{tpu_custom_call.1} parent=1 // pred_check
      _
    $region59: #{tpu_custom_call.1} parent=1 // pred_check_branch
      %153 = sbr.rel (0) target = $region61
    $region60: #{tpu_custom_call.1} parent=1 // pred_region
      _
    $region61: #{tpu_custom_call.1} parent=1 // pred_fallthru
      _
    // Predicated region
    $region62: #{tpu_custom_call.1} parent=1 // pred_check
      _
    $region63: #{tpu_custom_call.1} parent=1 // pred_check_branch
      %155 = sbr.rel (0) target = $region65
    $region64: #{tpu_custom_call.1} parent=1 // pred_region
      _
    $region65: #{tpu_custom_call.1} parent=1 // pred_fallthru
      _
    // Predicated region
    $region66: #{tpu_custom_call.1} parent=1 // pred_check
      _
    $region67: #{tpu_custom_call.1} parent=1 // pred_check_branch
      %157 = sbr.rel (0) target = $region69
    $region68: #{tpu_custom_call.1} parent=1 // pred_region
      _
    $region69: #{tpu_custom_call.1} parent=1 // pred_fallthru
      _
    // Predicated region
    $region70: #{tpu_custom_call.1} parent=1 // pred_check
      _
    $region71: #{tpu_custom_call.1} parent=1 // pred_check_branch
      %159 = sbr.rel (0) target = $region73
    $region72: #{tpu_custom_call.1} parent=1 // pred_region
      _
    $region73: #{tpu_custom_call.1} parent=1 // pred_fallthru
      _
    // Predicated region
    $region74: #{tpu_custom_call.1} parent=1 // pred_check
      _
    $region75: #{tpu_custom_call.1} parent=1 // pred_check_branch
      %161 = sbr.rel (0) target = $region77
    $region76: #{tpu_custom_call.1} parent=1 // pred_region
      _
    $region77: #{tpu_custom_call.1} parent=1 // pred_fallthru
      _
    // Predicated region
    $region78: #{tpu_custom_call.1} parent=1 // pred_check
      _
    $region79: #{tpu_custom_call.1} parent=1 // pred_check_branch
      %163 = sbr.rel (0) target = $region81
    $region80: #{tpu_custom_call.1} parent=1 // pred_region
      %164 = dma.done [#allocation3], 512
    $region81: #{tpu_custom_call.1} parent=1 // pred_fallthru
      _
    // Predicated region
    $region82: #{tpu_custom_call.1} parent=1 // pred_check
      _
    $region83: #{tpu_custom_call.1} parent=1 // pred_check_branch
      %166 = sbr.rel (0) target = $region85
    $region84: #{tpu_custom_call.1} parent=1 // pred_region
      %167 = dma.done [#allocation6], 256
    $region85: #{tpu_custom_call.1} parent=1 // pred_fallthru
      _
    // Predicated region
    $region86: #{tpu_custom_call.1} parent=1 // pred_check
      _
    $region87: #{tpu_custom_call.1} parent=1 // pred_check_branch
      %169 = sbr.rel (0) target = $region89
    $region88: #{tpu_custom_call.1} parent=1 // pred_region
      %170 = dma.done [#allocation6], 64
    $region89: #{tpu_custom_call.1} parent=1 // pred_fallthru
      _
    // Predicated region
    $region90: #{tpu_custom_call.1} parent=1 // pred_check
      _
    $region91: #{tpu_custom_call.1} parent=1 // pred_check_branch
      %172 = sbr.rel (0) target = $region93
    $region92: #{tpu_custom_call.1} parent=1 // pred_region
      %173 = dma.done [#allocation9], 2048
    $region93: #{tpu_custom_call.1} parent=1 // pred_fallthru
      _
    // Predicated region
    $region94: #{tpu_custom_call.1} parent=1 // pred_check
      _
    $region95: #{tpu_custom_call.1} parent=1 // pred_check_branch
      %175 = sbr.rel (0) target = $region97
    $region96: #{tpu_custom_call.1} parent=1 // pred_region
      %176 = dma.done [#allocation9], 2048
    $region97: #{tpu_custom_call.1} parent=1 // pred_fallthru
      _
    // Predicated region
    $region98: #{tpu_custom_call.1} parent=1 // pred_check
      _
    $region99: #{tpu_custom_call.1} parent=1 // pred_check_branch
      %178 = sbr.rel (0) target = $region101
    $region100: #{tpu_custom_call.1} parent=1 // pred_region
      %179 = dma.done [#allocation12], 2048
    $region101: #{tpu_custom_call.1} parent=1 // pred_fallthru
      _
    // Predicated region
    $region102: #{tpu_custom_call.1} parent=1 // pred_check
      _
    $region103: #{tpu_custom_call.1} parent=1 // pred_check_branch
      %181 = sbr.rel (0) target = $region105
    $region104: #{tpu_custom_call.1} parent=1 // pred_region
      %182 = dma.done [#allocation12], 32
    $region105: #{tpu_custom_call.1} parent=1 // pred_fallthru
      _
    // Predicated region
    $region106: #{tpu_custom_call.1} parent=1 // pred_check
      _
    $region107: #{tpu_custom_call.1} parent=1 // pred_check_branch
      %184 = sbr.rel (0) target = $region109
    $region108: #{tpu_custom_call.1} parent=1 // pred_region
      %185 = dma.done [#allocation15], 32
    $region109: #{tpu_custom_call.1} parent=1 // pred_fallthru
      _
    // Predicated region
    $region110: #{tpu_custom_call.1} parent=1 // pred_check
      _
    $region111: #{tpu_custom_call.1} parent=1 // pred_check_branch
      %187 = sbr.rel (0) target = $region113
    $region112: #{tpu_custom_call.1} parent=1 // pred_region
      %188 = dma.done [#allocation15], 32
    $region113: #{tpu_custom_call.1} parent=1 // pred_fallthru
      _
    // Predicated region
    $region114: #{tpu_custom_call.1} parent=1 // pred_check
      _
    $region115: #{tpu_custom_call.1} parent=1 // pred_check_branch
      %190 = sbr.rel (0) target = $region117
    $region116: #{tpu_custom_call.1} parent=1 // pred_region
      %191 = dma.done [#allocation18], 32
    $region117: #{tpu_custom_call.1} parent=1 // pred_fallthru
      _
    %v193 = vlaneseq
    %v194 = vand.u32 %v193, 127
    %v195 = vadd.s32 %v194, 128
    %v196 = vlaneseq
    %v197 = vshrl.u32 %v196, 7
    %v198 = vadd.s32 %v197, 8
    %v199 = vadd.s32 %v197, 16
    %v200 = vadd.s32 %v197, 24
    %201 = vrot.lane.b32.xlu0 %v194, 16
    %v202 = vpop.permute.xlu0 %201
    %203 = vrot.lane.b32.xlu0 %v195, 16
    %v204 = vpop.permute.xlu0 %203
    %vm205 = vcmp.lt.s32.totalorder %v194, 16
    %v206 = vsel %vm205, %v202, %v204
    %v207 = vsel %vm205, %v204, %v202
    %208 = vrot.lane.b32.xlu0 %v194, 112
    %v209 = vpop.permute.xlu0 %208
    %210 = vrot.lane.b32.xlu0 %v195, 112
    %v211 = vpop.permute.xlu0 %210
    %vm212 = vcmp.lt.s32.totalorder %v194, 112
    %v213 = vsel %vm212, %v209, %v211
    %v214 = vsel %vm212, %v211, %v209
    %v215 = vsub.s32 %v207, %v194
    %v216 = vsub.s32 %v206, %v195
    %v217 = vsub.s32 %v213, %v194
    %v218 = vsub.s32 %v214, %v195
    %vm219 = vcmp.eq.s32.totalorder %v215, 16
    %vm220 = vcmp.eq.s32.totalorder %v216, 16
    %vm221 = vcmp.eq.s32.totalorder %v215, 4294967280
    %vm222 = vcmp.eq.s32.totalorder %v216, 4294967280
    %vm223 = vmor %vm219, %vm221
    %vm224 = vmor %vm220, %vm222
    %vm225 = vcmp.eq.s32.totalorder %v217, 16
    %vm226 = vcmp.eq.s32.totalorder %v218, 16
    %vm227 = vcmp.eq.s32.totalorder %v217, 4294967280
    %vm228 = vcmp.eq.s32.totalorder %v218, 4294967280
    %vm229 = vmor %vm225, %vm227
    %vm230 = vmor %vm226, %vm228
    %v231 = vrot.slane %v197, 7
    %v232 = vrot.slane %v198, 7
    %v233 = vrot.slane %v199, 7
    %v234 = vrot.slane %v200, 7
    %vm235 = vcmp.lt.s32.totalorder %v197, 1
    %v236 = vsel %vm235, %v233, %v234
    %v237 = vsel %vm235, %v232, %v233
    %v238 = vsel %vm235, %v231, %v232
    %v239 = vsel %vm235, %v234, %v231
    %v240 = vrot.slane %v197, 1
    %v241 = vrot.slane %v198, 1
    %v242 = vrot.slane %v199, 1
    %v243 = vrot.slane %v200, 1
    %vm244 = vcmp.lt.s32.totalorder %v197, 7
    %v245 = vsel %vm244, %v242, %v243
    %v246 = vsel %vm244, %v241, %v242
    %v247 = vsel %vm244, %v240, %v241
    %v248 = vsel %vm244, %v243, %v240
    %v249 = vsub.s32 %v239, %v197
    %v250 = vsub.s32 %v238, %v198
    %v251 = vsub.s32 %v237, %v199
    %v252 = vsub.s32 %v236, %v200
    %v253 = vsub.s32 %v247, %v197
    %v254 = vsub.s32 %v246, %v198
    %v255 = vsub.s32 %v245, %v199
    %v256 = vsub.s32 %v248, %v200
    %v257 = vand.u32 %v197, 15
    %v258 = vand.u32 %v198, 15
    %v259 = vand.u32 %v199, 15
    %v260 = vand.u32 %v200, 15
    %vm261 = vcmp.ne.s32.totalorder %v257, 0
    %vm262 = vcmp.ne.s32.totalorder %v258, 0
    %vm263 = vcmp.ne.s32.totalorder %v259, 0
    %vm264 = vcmp.ne.s32.totalorder %v260, 0
    %vm265 = vcmp.ne.s32.totalorder %v257, 15
    %vm266 = vcmp.ne.s32.totalorder %v258, 15
    %vm267 = vcmp.ne.s32.totalorder %v259, 15
    %vm268 = vcmp.ne.s32.totalorder %v260, 15
    %vm269 = vcmp.eq.s32.totalorder %v249, 1
    %vm270 = vcmp.eq.s32.totalorder %v250, 1
    %vm271 = vcmp.eq.s32.totalorder %v251, 1
    %vm272 = vcmp.eq.s32.totalorder %v252, 1
    %vm273 = vmand %vm269, %vm265
    %vm274 = vmand %vm270, %vm266
    %vm275 = vmand %vm271, %vm267
    %vm276 = vmand %vm272, %vm268
    %vm277 = vcmp.eq.s32.totalorder %v249, 4294967295
    %vm278 = vcmp.eq.s32.totalorder %v250, 4294967295
    %vm279 = vcmp.eq.s32.totalorder %v251, 4294967295
    %vm280 = vcmp.eq.s32.totalorder %v252, 4294967295
    %vm281 = vmand %vm277, %vm261
    %vm282 = vmand %vm278, %vm262
    %vm283 = vmand %vm279, %vm263
    %vm284 = vmand %vm280, %vm264
    %vm285 = vmor %vm273, %vm281
    %vm286 = vmor %vm274, %vm282
    %vm287 = vmor %vm275, %vm283
    %vm288 = vmor %vm276, %vm284
    %vm289 = vcmp.eq.s32.totalorder %v253, 1
    %vm290 = vcmp.eq.s32.totalorder %v254, 1
    %vm291 = vcmp.eq.s32.totalorder %v255, 1
    %vm292 = vcmp.eq.s32.totalorder %v256, 1
    %vm293 = vmand %vm289, %vm265
    %vm294 = vmand %vm290, %vm266
    %vm295 = vmand %vm291, %vm267
    %vm296 = vmand %vm292, %vm268
    %vm297 = vcmp.eq.s32.totalorder %v253, 4294967295
    %vm298 = vcmp.eq.s32.totalorder %v254, 4294967295
    %vm299 = vcmp.eq.s32.totalorder %v255, 4294967295
    %vm300 = vcmp.eq.s32.totalorder %v256, 4294967295
    %vm301 = vmand %vm297, %vm261
    %vm302 = vmand %vm298, %vm262
    %vm303 = vmand %vm299, %vm263
    %vm304 = vmand %vm300, %vm264
    %vm305 = vmor %vm293, %vm301
    %vm306 = vmor %vm294, %vm302
    %vm307 = vmor %vm295, %vm303
    %vm308 = vmor %vm296, %vm304
    %v309 = vsel %vm223, 1.0, 0.0
    %v310 = vsel %vm224, 1.0, 0.0
    %v311 = vadd.f32 %v309, 1.0
    %v312 = vadd.f32 %v310, 1.0
    %v313 = vsel %vm229, 1.0, 0.0
    %v314 = vsel %vm230, 1.0, 0.0
    %v315 = vadd.f32 %v311, %v313
    %v316 = vadd.f32 %v312, %v314
    %v317 = vsel %vm285, 1.0, 0.0
    %v318 = vsel %vm286, 1.0, 0.0
    %v319 = vsel %vm287, 1.0, 0.0
    %v320 = vsel %vm288, 1.0, 0.0
    %v321 = vadd.f32 %v317, 1.0
    %v322 = vadd.f32 %v318, 1.0
    %v323 = vadd.f32 %v319, 1.0
    %v324 = vadd.f32 %v320, 1.0
    %v325 = vsel %vm305, 1.0, 0.0
    %v326 = vsel %vm306, 1.0, 0.0
    %v327 = vsel %vm307, 1.0, 0.0
    %v328 = vsel %vm308, 1.0, 0.0
    %v329 = vadd.f32 %v321, %v325
    %v330 = vadd.f32 %v322, %v326
    %v331 = vadd.f32 %v323, %v327
    %v332 = vadd.f32 %v324, %v328
    %v333 = vmul.f32 %v315, %v329
    %v334 = vmul.f32 %v316, %v329
    %v335 = vmul.f32 %v315, %v330
    %v336 = vmul.f32 %v316, %v330
    %v337 = vmul.f32 %v315, %v331
    %v338 = vmul.f32 %v316, %v331
    %v339 = vmul.f32 %v315, %v332
    %v340 = vmul.f32 %v316, %v332
    %v341 = vrcp.pop %v333
    %v342 = vmul.f32 1.0, %v341
    %v343 = vrcp.pop %v334
    %v344 = vmul.f32 1.0, %v343
    %v345 = vrcp.pop %v335
    %v346 = vmul.f32 1.0, %v345
    %v347 = vrcp.pop %v336
    %v348 = vmul.f32 1.0, %v347
    %v349 = vrcp.pop %v337
    %v350 = vmul.f32 1.0, %v349
    %v351 = vrcp.pop %v338
    %v352 = vmul.f32 1.0, %v351
    %v353 = vrcp.pop %v339
    %v354 = vmul.f32 1.0, %v353
    %v355 = vrcp.pop %v340
    %v356 = vmul.f32 1.0, %v355
    %v357 = vld [vmem:[#allocation2] sm:$0xff]
    %v358 = vld [vmem:[#allocation2 + $0x8] sm:$0xff]
    %v359 = vld [vmem:[#allocation2 + $0x10] sm:$0xff]
    %v360 = vld [vmem:[#allocation2 + $0x18] sm:$0xff]
    %v361 = vmax.f32 %v357, 0.0
    %v362 = vmax.f32 %v358, 0.0
    %v363 = vmax.f32 %v359, 0.0
    %v364 = vmax.f32 %v360, 0.0
    %v365 = vpack.c.bf16 %v362, %v361
    %v366 = vpack.c.bf16 %v364, %v363
    %v367 = vld [vmem:[%s4] sm:$0xff]
    %v368 = vld [vmem:[%s4 + $0x8] sm:$0xff]
    %v369 = vld [vmem:[%s4 + $0x10] sm:$0xff]
    %v370 = vld [vmem:[%s4 + $0x18] sm:$0xff]
    %v371 = vld [vmem:[%s4 + $0x20] sm:$0xff]
    %v372 = vld [vmem:[%s4 + $0x28] sm:$0xff]
    %v373 = vld [vmem:[%s4 + $0x30] sm:$0xff]
    %v374 = vld [vmem:[%s4 + $0x38] sm:$0xff]
    %v375 = vld [vmem:[%s4 + $0x40] sm:$0xff]
    %v376 = vld [vmem:[%s4 + $0x48] sm:$0xff]
    %v377 = vld [vmem:[%s4 + $0x50] sm:$0xff]
    %v378 = vld [vmem:[%s4 + $0x58] sm:$0xff]
    %v379 = vld [vmem:[%s4 + $0x60] sm:$0xff]
    %v380 = vld [vmem:[%s4 + $0x68] sm:$0xff]
    %v381 = vld [vmem:[%s4 + $0x70] sm:$0xff]
    %v382 = vld [vmem:[%s4 + $0x78] sm:$0xff]
    %v399 = vunpack.c.l.b16 %v367
    %v400 = vunpack.c.h.b16 %v367
    %v401 = vunpack.c.l.b16 %v368
    %v402 = vunpack.c.h.b16 %v368
    %v403 = vunpack.c.l.b16 %v369
    %v404 = vunpack.c.h.b16 %v369
    %v405 = vunpack.c.l.b16 %v370
    %v406 = vunpack.c.h.b16 %v370
    %v407 = vunpack.c.l.b16 %v371
    %v408 = vunpack.c.h.b16 %v371
    %v409 = vunpack.c.l.b16 %v372
    %v410 = vunpack.c.h.b16 %v372
    %v411 = vunpack.c.l.b16 %v373
    %v412 = vunpack.c.h.b16 %v373
    %v413 = vunpack.c.l.b16 %v374
    %v414 = vunpack.c.h.b16 %v374
    %v415 = vunpack.c.l.b16 %v375
    %v416 = vunpack.c.h.b16 %v375
    %v417 = vunpack.c.l.b16 %v376
    %v418 = vunpack.c.h.b16 %v376
    %v419 = vunpack.c.l.b16 %v377
    %v420 = vunpack.c.h.b16 %v377
    %v421 = vunpack.c.l.b16 %v378
    %v422 = vunpack.c.h.b16 %v378
    %v423 = vunpack.c.l.b16 %v379
    %v424 = vunpack.c.h.b16 %v379
    %v425 = vunpack.c.l.b16 %v380
    %v426 = vunpack.c.h.b16 %v380
    %v427 = vunpack.c.l.b16 %v381
    %v428 = vunpack.c.h.b16 %v381
    %v429 = vunpack.c.l.b16 %v382
    %v430 = vunpack.c.h.b16 %v382
    %v431 = vpack.c.b16 %v401, %v399
    %v432 = vpack.c.b16 %v402, %v400
    %v433 = vpack.c.b16 %v405, %v403
    %v434 = vpack.c.b16 %v406, %v404
    %v435 = vpack.c.b16 %v409, %v407
    %v436 = vpack.c.b16 %v410, %v408
    %v437 = vpack.c.b16 %v413, %v411
    %v438 = vpack.c.b16 %v414, %v412
    %v439 = vpack.c.b16 %v417, %v415
    %v440 = vpack.c.b16 %v418, %v416
    %v441 = vpack.c.b16 %v421, %v419
    %v442 = vpack.c.b16 %v422, %v420
    %v443 = vpack.c.b16 %v425, %v423
    %v444 = vpack.c.b16 %v426, %v424
    %v445 = vpack.c.b16 %v429, %v427
    %v446 = vpack.c.b16 %v430, %v428
    %463 = vmatprep.subr.bf16.mxu0 %v432
    %464 = vmatpush1.bf16.msra.mxu0 %v431
    %465 = vmatprep.subr.bf16.mxu0 %v434
    %466 = vmatpush1.bf16.msra.mxu0 %v433
    %467 = vmatprep.subr.bf16.mxu0 %v436
    %468 = vmatpush1.bf16.msra.mxu0 %v435
    %469 = vmatprep.subr.bf16.mxu0 %v438
    %470 = vmatpush1.bf16.msra.mxu0 %v437
    %471 = vmatprep.subr.bf16.mxu0 %v440
    %472 = vmatpush1.bf16.msra.mxu0 %v439
    %473 = vmatprep.subr.bf16.mxu0 %v442
    %474 = vmatpush1.bf16.msra.mxu0 %v441
    %475 = vmatprep.subr.bf16.mxu0 %v444
    %476 = vmatpush1.bf16.msra.mxu0 %v443
    %477 = vmatprep.subr.bf16.mxu0 %v446
    %478 = vmatpush1.bf16.msra.mxu0 %v445
    %479 = vmatprep.subr.bf16.mxu0 0
    %480 = vmatpush1.bf16.msra.mxu0 0
    %481 = vmatprep.subr.bf16.mxu0 0
    %482 = vmatpush1.bf16.msra.mxu0 0
    %483 = vmatprep.subr.bf16.mxu0 0
    %484 = vmatpush1.bf16.msra.mxu0 0
    %485 = vmatprep.subr.bf16.mxu0 0
    %486 = vmatpush1.bf16.msra.mxu0 0
    %487 = vmatprep.subr.bf16.mxu0 0
    %488 = vmatpush1.bf16.msra.mxu0 0
    %489 = vmatprep.subr.bf16.mxu0 0
    %490 = vmatpush1.bf16.msra.mxu0 0
    %491 = vmatprep.subr.bf16.mxu0 0
    %492 = vmatpush1.bf16.msra.mxu0 0
    %493 = vmatprep.subr.bf16.mxu0 0
    %494 = vmatpush1.bf16.msra.mxu0 0
    %495 = vmatprep.mubr.bf16.mxu0 0
    %496 = vmatmul.mubr.bf16.gmra.mrb[0].mxu0 %v365
    %v497 = vpop.f32.mrb[0].mxu0
    %v498 = vadd.f32 0.0, %v497
    %v499 = vpop.f32.mrb[0].mxu0
    %v500 = vadd.f32 0.0, %v499
    %v501 = vpop.f32.mrb[0].mxu0
    %v502 = vadd.f32 0.0, %v501
    %v503 = vpop.f32.mrb[0].mxu0
    %v504 = vadd.f32 0.0, %v503
    %505 = vmatprep.mubr.bf16.mxu0 0
    %506 = vmatmul.mubr.bf16.gmra.mrb[0].mxu0 %v366
    %v507 = vpop.f32.mrb[0].mxu0
    %v508 = vadd.f32 0.0, %v507
    %v509 = vpop.f32.mrb[0].mxu0
    %v510 = vadd.f32 0.0, %v509
    %v511 = vpop.f32.mrb[0].mxu0
    %v512 = vadd.f32 0.0, %v511
    %v513 = vpop.f32.mrb[0].mxu0
    %v514 = vadd.f32 0.0, %v513
    %515 = vdwg.mxu0
    %v516 = vadd.f32 %v498, %v502
    %v517 = vadd.f32 %v516, %v508
    %v518 = vadd.f32 %v517, %v512
    %v519 = vrot.slane %v518, 4
    %v520 = vadd.f32 %v518, %v519
    %v521 = vrot.slane %v520, 2
    %v522 = vadd.f32 %v520, %v521
    %v523 = vrot.slane %v522, 1
    %v524 = vadd.f32 %v522, %v523
    %v525 = vadd.f32 %v500, %v504
    %v526 = vadd.f32 %v525, %v510
    %v527 = vadd.f32 %v526, %v514
    %v528 = vrot.slane %v527, 4
    %v529 = vadd.f32 %v527, %v528
    %v530 = vrot.slane %v529, 2
    %v531 = vadd.f32 %v529, %v530
    %v532 = vrot.slane %v531, 1
    %v533 = vadd.f32 %v531, %v532
    %534 = vrot.lane.b32.xlu0 %v524, 16
    %v535 = vpop.permute.xlu0 %534
    %536 = vrot.lane.b32.xlu0 %v533, 16
    %v537 = vpop.permute.xlu0 %536
    %v538 = vsel %vm205, %v535, %v537
    %v539 = vsel %vm205, %v537, %v535
    %v540 = vadd.f32 %v524, %v539
    %v541 = vadd.f32 %v533, %v538
    %542 = vrot.lane.b32.xlu0 %v540, 32
    %v543 = vpop.permute.xlu0 %542
    %544 = vrot.lane.b32.xlu0 %v541, 32
    %v545 = vpop.permute.xlu0 %544
    %vm546 = vcmp.lt.s32.totalorder %v194, 32
    %v547 = vsel %vm546, %v543, %v545
    %v548 = vsel %vm546, %v545, %v543
    %v549 = vadd.f32 %v540, %v548
    %v550 = vadd.f32 %v541, %v547
    %551 = vrot.lane.b32.xlu0 %v549, 64
    %v552 = vpop.permute.xlu0 %551
    %553 = vrot.lane.b32.xlu0 %v550, 64
    %v554 = vpop.permute.xlu0 %553
    %vm555 = vcmp.lt.s32.totalorder %v194, 64
    %v556 = vsel %vm555, %v552, %v554
    %v557 = vsel %vm555, %v554, %v552
    %v558 = vadd.f32 %v549, %v557
    %v559 = vadd.f32 %v550, %v556
    %v560 = vadd.f32 %v558, %v559
    %v561 = vmul.f32 %v560, 0.001953125
    %v562 = vmul.f32 %v498, %v498
    %v563 = vmul.f32 %v500, %v500
    %v564 = vmul.f32 %v502, %v502
    %v565 = vmul.f32 %v504, %v504
    %v566 = vmul.f32 %v508, %v508
    %v567 = vmul.f32 %v510, %v510
    %v568 = vmul.f32 %v512, %v512
    %v569 = vmul.f32 %v514, %v514
    %v570 = vadd.f32 %v562, %v564
    %v571 = vadd.f32 %v570, %v566
    %v572 = vadd.f32 %v571, %v568
    %v573 = vrot.slane %v572, 4
    %v574 = vadd.f32 %v572, %v573
    %v575 = vrot.slane %v574, 2
    %v576 = vadd.f32 %v574, %v575
    %v577 = vrot.slane %v576, 1
    %v578 = vadd.f32 %v576, %v577
    %v579 = vadd.f32 %v563, %v565
    %v580 = vadd.f32 %v579, %v567
    %v581 = vadd.f32 %v580, %v569
    %v582 = vrot.slane %v581, 4
    %v583 = vadd.f32 %v581, %v582
    %v584 = vrot.slane %v583, 2
    %v585 = vadd.f32 %v583, %v584
    %v586 = vrot.slane %v585, 1
    %v587 = vadd.f32 %v585, %v586
    %588 = vrot.lane.b32.xlu0 %v578, 16
    %v589 = vpop.permute.xlu0 %588
    %590 = vrot.lane.b32.xlu0 %v587, 16
    %v591 = vpop.permute.xlu0 %590
    %v592 = vsel %vm205, %v589, %v591
    %v593 = vsel %vm205, %v591, %v589
    %v594 = vadd.f32 %v578, %v593
    %v595 = vadd.f32 %v587, %v592
    %596 = vrot.lane.b32.xlu0 %v594, 32
    %v597 = vpop.permute.xlu0 %596
    %598 = vrot.lane.b32.xlu0 %v595, 32
    %v599 = vpop.permute.xlu0 %598
    %v600 = vsel %vm546, %v597, %v599
    %v601 = vsel %vm546, %v599, %v597
    %v602 = vadd.f32 %v594, %v601
    %v603 = vadd.f32 %v595, %v600
    %604 = vrot.lane.b32.xlu0 %v602, 64
    %v605 = vpop.permute.xlu0 %604
    %606 = vrot.lane.b32.xlu0 %v603, 64
    %v607 = vpop.permute.xlu0 %606
    %v608 = vsel %vm555, %v605, %v607
    %v609 = vsel %vm555, %v607, %v605
    %v610 = vadd.f32 %v602, %v609
    %v611 = vadd.f32 %v603, %v608
    %v612 = vadd.f32 %v610, %v611
    %v613 = vmul.f32 %v612, 0.001953125
    %v614 = vmul.f32 %v561, %v561
    %v615 = vsub.f32 %v613, %v614
    %v616 = vld [vmem:[#allocation13] sm:$0x3]
    %v617 = vadd.f32 %v615, 1e-05
    %v618 = vrsqrt.pop %v617
    %v620 = vcombine.low %v618, %v618
    %v622 = vunpack.c.l.s4 1966171168
    %v623 = vunpack.c.0.s8 %v622
    %v624 = vlaneseq
    %v625 = vshrl.u32 %v624, 7
    %v626 = vsub.s32 %v623, %v625
    %v627 = vrot.slane %v620, %v626
    %v629 = vunpack.c.l.s4 1966171168
    %v630 = vunpack.c.0.s8 %v629
    %v631 = vlaneseq
    %v632 = vshrl.u32 %v631, 7
    %v633 = vsub.s32 %v630, %v632
    %v634 = vrot.slane %v627, %v633
    %v636 = vmul.f32 %v616, %v634
    %v637 = vld [vmem:[%s12] sm:$0x3]
    %v639 = vlaneseq
    %v640 = vshrl.u32 %v639, 7
    %v641 = vsub.s32 0, %v640
    %v642 = vrot.slane %v636, %v641
    %v643 = vlaneseq
    %v644 = vshrl.u32 %v643, 7
    %v645 = vsub.s32 1, %v644
    %v646 = vrot.slane %v636, %v645
    %v649 = vmul.f32 %v561, %v642
    %v650 = vmul.f32 %v561, %v646
    %v653 = vcombine.low %v649, %v650
    %v655 = vunpack.c.l.s4 1966171168
    %v656 = vunpack.c.0.s8 %v655
    %v657 = vlaneseq
    %v658 = vshrl.u32 %v657, 7
    %v659 = vsub.s32 %v656, %v658
    %v660 = vrot.slane %v653, %v659
    %v662 = vunpack.c.l.s4 1966171168
    %v663 = vunpack.c.0.s8 %v662
    %v664 = vlaneseq
    %v665 = vshrl.u32 %v664, 7
    %v666 = vsub.s32 %v663, %v665
    %v667 = vrot.slane %v660, %v666
    %v669 = vsub.f32 %v637, %v667
    %v670 = vmul.f32 %v498, %v642
    %v671 = vmul.f32 %v500, %v646
    %v672 = vmul.f32 %v502, %v642
    %v673 = vmul.f32 %v504, %v646
    %v674 = vmul.f32 %v508, %v642
    %v675 = vmul.f32 %v510, %v646
    %v676 = vmul.f32 %v512, %v642
    %v677 = vmul.f32 %v514, %v646
    %v679 = vlaneseq
    %v680 = vshrl.u32 %v679, 7
    %v681 = vsub.s32 0, %v680
    %v682 = vrot.slane %v669, %v681
    %v683 = vlaneseq
    %v684 = vshrl.u32 %v683, 7
    %v685 = vsub.s32 1, %v684
    %v686 = vrot.slane %v669, %v685
    %v689 = vadd.f32 %v670, %v682
    %v690 = vadd.f32 %v671, %v686
    %v691 = vadd.f32 %v672, %v682
    %v692 = vadd.f32 %v673, %v686
    %v693 = vadd.f32 %v674, %v682
    %v694 = vadd.f32 %v675, %v686
    %v695 = vadd.f32 %v676, %v682
    %v696 = vadd.f32 %v677, %v686
    %v697 = vld [vmem:[#allocation5] sm:$0xff]
    %v698 = vld [vmem:[#allocation5 + $0x8] sm:$0xff]
    %v699 = vmax.f32 %v697, 0.0
    %v700 = vmax.f32 %v698, 0.0
    %v701 = vpack.c.bf16 %v700, %v699
    %v702 = vld [vmem:[#allocation8] sm:$0xff]
    %v703 = vld [vmem:[#allocation8 + $0x8] sm:$0xff]
    %v704 = vld [vmem:[#allocation8 + $0x10] sm:$0xff]
    %v705 = vld [vmem:[#allocation8 + $0x18] sm:$0xff]
    %v706 = vld [vmem:[#allocation8 + $0x20] sm:$0xff]
    %v707 = vld [vmem:[#allocation8 + $0x28] sm:$0xff]
    %v708 = vld [vmem:[#allocation8 + $0x30] sm:$0xff]
    %v709 = vld [vmem:[#allocation8 + $0x38] sm:$0xff]
    %v710 = vld [vmem:[#allocation8 + $0x40] sm:$0xff]
    %v711 = vld [vmem:[#allocation8 + $0x48] sm:$0xff]
    %v712 = vld [vmem:[#allocation8 + $0x50] sm:$0xff]
    %v713 = vld [vmem:[#allocation8 + $0x58] sm:$0xff]
    %v714 = vld [vmem:[#allocation8 + $0x60] sm:$0xff]
    %v715 = vld [vmem:[#allocation8 + $0x68] sm:$0xff]
    %v716 = vld [vmem:[#allocation8 + $0x70] sm:$0xff]
    %v717 = vld [vmem:[#allocation8 + $0x78] sm:$0xff]
    %v734 = vunpack.c.l.b16 %v702
    %v735 = vunpack.c.h.b16 %v702
    %v736 = vunpack.c.l.b16 %v703
    %v737 = vunpack.c.h.b16 %v703
    %v738 = vunpack.c.l.b16 %v704
    %v739 = vunpack.c.h.b16 %v704
    %v740 = vunpack.c.l.b16 %v705
    %v741 = vunpack.c.h.b16 %v705
    %v742 = vunpack.c.l.b16 %v706
    %v743 = vunpack.c.h.b16 %v706
    %v744 = vunpack.c.l.b16 %v707
    %v745 = vunpack.c.h.b16 %v707
    %v746 = vunpack.c.l.b16 %v708
    %v747 = vunpack.c.h.b16 %v708
    %v748 = vunpack.c.l.b16 %v709
    %v749 = vunpack.c.h.b16 %v709
    %v750 = vunpack.c.l.b16 %v710
    %v751 = vunpack.c.h.b16 %v710
    %v752 = vunpack.c.l.b16 %v711
    %v753 = vunpack.c.h.b16 %v711
    %v754 = vunpack.c.l.b16 %v712
    %v755 = vunpack.c.h.b16 %v712
    %v756 = vunpack.c.l.b16 %v713
    %v757 = vunpack.c.h.b16 %v713
    %v758 = vunpack.c.l.b16 %v714
    %v759 = vunpack.c.h.b16 %v714
    %v760 = vunpack.c.l.b16 %v715
    %v761 = vunpack.c.h.b16 %v715
    %v762 = vunpack.c.l.b16 %v716
    %v763 = vunpack.c.h.b16 %v716
    %v764 = vunpack.c.l.b16 %v717
    %v765 = vunpack.c.h.b16 %v717
    %v766 = vpack.c.b16 %v736, %v734
    %v767 = vpack.c.b16 %v737, %v735
    %v768 = vpack.c.b16 %v740, %v738
    %v769 = vpack.c.b16 %v741, %v739
    %v770 = vpack.c.b16 %v744, %v742
    %v771 = vpack.c.b16 %v745, %v743
    %v772 = vpack.c.b16 %v748, %v746
    %v773 = vpack.c.b16 %v749, %v747
    %v774 = vpack.c.b16 %v752, %v750
    %v775 = vpack.c.b16 %v753, %v751
    %v776 = vpack.c.b16 %v756, %v754
    %v777 = vpack.c.b16 %v757, %v755
    %v778 = vpack.c.b16 %v760, %v758
    %v779 = vpack.c.b16 %v761, %v759
    %v780 = vpack.c.b16 %v764, %v762
    %v781 = vpack.c.b16 %v765, %v763
    %798 = vmatprep.subr.bf16.mxu0 %v767
    %799 = vmatpush1.bf16.msra.mxu0 %v766
    %800 = vmatprep.subr.bf16.mxu0 %v769
    %801 = vmatpush1.bf16.msra.mxu0 %v768
    %802 = vmatprep.subr.bf16.mxu0 %v771
    %803 = vmatpush1.bf16.msra.mxu0 %v770
    %804 = vmatprep.subr.bf16.mxu0 %v773
    %805 = vmatpush1.bf16.msra.mxu0 %v772
    %806 = vmatprep.subr.bf16.mxu0 %v775
    %807 = vmatpush1.bf16.msra.mxu0 %v774
    %808 = vmatprep.subr.bf16.mxu0 %v777
    %809 = vmatpush1.bf16.msra.mxu0 %v776
    %810 = vmatprep.subr.bf16.mxu0 %v779
    %811 = vmatpush1.bf16.msra.mxu0 %v778
    %812 = vmatprep.subr.bf16.mxu0 %v781
    %813 = vmatpush1.bf16.msra.mxu0 %v780
    %814 = vmatprep.subr.bf16.mxu0 0
    %815 = vmatpush1.bf16.msra.mxu0 0
    %816 = vmatprep.subr.bf16.mxu0 0
    %817 = vmatpush1.bf16.msra.mxu0 0
    %818 = vmatprep.subr.bf16.mxu0 0
    %819 = vmatpush1.bf16.msra.mxu0 0
    %820 = vmatprep.subr.bf16.mxu0 0
    %821 = vmatpush1.bf16.msra.mxu0 0
    %822 = vmatprep.subr.bf16.mxu0 0
    %823 = vmatpush1.bf16.msra.mxu0 0
    %824 = vmatprep.subr.bf16.mxu0 0
    %825 = vmatpush1.bf16.msra.mxu0 0
    %826 = vmatprep.subr.bf16.mxu0 0
    %827 = vmatpush1.bf16.msra.mxu0 0
    %828 = vmatprep.subr.bf16.mxu0 0
    %829 = vmatpush1.bf16.msra.mxu0 0
    %830 = vmatprep.mubr.bf16.mxu0 0
    %831 = vmatmul.mubr.bf16.gmra.mrb[0].mxu0 %v701
    %v832 = vpop.f32.mrb[0].mxu0
    %v833 = vadd.f32 0.0, %v832
    %v834 = vpop.f32.mrb[0].mxu0
    %v835 = vadd.f32 0.0, %v834
    %v836 = vpop.f32.mrb[0].mxu0
    %v837 = vadd.f32 0.0, %v836
    %v838 = vpop.f32.mrb[0].mxu0
    %v839 = vadd.f32 0.0, %v838
    %840 = vdwg.mxu0
    %v841 = vadd.f32 %v833, %v837
    %v842 = vrot.slane %v841, 4
    %v843 = vadd.f32 %v841, %v842
    %v844 = vrot.slane %v843, 2
    %v845 = vadd.f32 %v843, %v844
    %v846 = vrot.slane %v845, 1
    %v847 = vadd.f32 %v845, %v846
    %v848 = vadd.f32 %v835, %v839
    %v849 = vrot.slane %v848, 4
    %v850 = vadd.f32 %v848, %v849
    %v851 = vrot.slane %v850, 2
    %v852 = vadd.f32 %v850, %v851
    %v853 = vrot.slane %v852, 1
    %v854 = vadd.f32 %v852, %v853
    %855 = vrot.lane.b32.xlu0 %v847, 16
    %v856 = vpop.permute.xlu0 %855
    %857 = vrot.lane.b32.xlu0 %v854, 16
    %v858 = vpop.permute.xlu0 %857
    %v859 = vsel %vm205, %v856, %v858
    %v860 = vsel %vm205, %v858, %v856
    %v861 = vadd.f32 %v847, %v860
    %v862 = vadd.f32 %v854, %v859
    %863 = vrot.lane.b32.xlu0 %v861, 32
    %v864 = vpop.permute.xlu0 %863
    %865 = vrot.lane.b32.xlu0 %v862, 32
    %v866 = vpop.permute.xlu0 %865
    %v867 = vsel %vm546, %v864, %v866
    %v868 = vsel %vm546, %v866, %v864
    %v869 = vadd.f32 %v861, %v868
    %v870 = vadd.f32 %v862, %v867
    %871 = vrot.lane.b32.xlu0 %v869, 64
    %v872 = vpop.permute.xlu0 %871
    %873 = vrot.lane.b32.xlu0 %v870, 64
    %v874 = vpop.permute.xlu0 %873
    %v875 = vsel %vm555, %v872, %v874
    %v876 = vsel %vm555, %v874, %v872
    %v877 = vadd.f32 %v869, %v876
    %v878 = vadd.f32 %v870, %v875
    %v879 = vadd.f32 %v877, %v878
    %v880 = vmul.f32 %v879, 0.00390625
    %v881 = vmul.f32 %v833, %v833
    %v882 = vmul.f32 %v835, %v835
    %v883 = vmul.f32 %v837, %v837
    %v884 = vmul.f32 %v839, %v839
    %v885 = vadd.f32 %v881, %v883
    %v886 = vrot.slane %v885, 4
    %v887 = vadd.f32 %v885, %v886
    %v888 = vrot.slane %v887, 2
    %v889 = vadd.f32 %v887, %v888
    %v890 = vrot.slane %v889, 1
    %v891 = vadd.f32 %v889, %v890
    %v892 = vadd.f32 %v882, %v884
    %v893 = vrot.slane %v892, 4
    %v894 = vadd.f32 %v892, %v893
    %v895 = vrot.slane %v894, 2
    %v896 = vadd.f32 %v894, %v895
    %v897 = vrot.slane %v896, 1
    %v898 = vadd.f32 %v896, %v897
    %899 = vrot.lane.b32.xlu0 %v891, 16
    %v900 = vpop.permute.xlu0 %899
    %901 = vrot.lane.b32.xlu0 %v898, 16
    %v902 = vpop.permute.xlu0 %901
    %v903 = vsel %vm205, %v900, %v902
    %v904 = vsel %vm205, %v902, %v900
    %v905 = vadd.f32 %v891, %v904
    %v906 = vadd.f32 %v898, %v903
    %907 = vrot.lane.b32.xlu0 %v905, 32
    %v908 = vpop.permute.xlu0 %907
    %909 = vrot.lane.b32.xlu0 %v906, 32
    %v910 = vpop.permute.xlu0 %909
    %v911 = vsel %vm546, %v908, %v910
    %v912 = vsel %vm546, %v910, %v908
    %v913 = vadd.f32 %v905, %v912
    %v914 = vadd.f32 %v906, %v911
    %915 = vrot.lane.b32.xlu0 %v913, 64
    %v916 = vpop.permute.xlu0 %915
    %917 = vrot.lane.b32.xlu0 %v914, 64
    %v918 = vpop.permute.xlu0 %917
    %v919 = vsel %vm555, %v916, %v918
    %v920 = vsel %vm555, %v918, %v916
    %v921 = vadd.f32 %v913, %v920
    %v922 = vadd.f32 %v914, %v919
    %v923 = vadd.f32 %v921, %v922
    %v924 = vmul.f32 %v923, 0.00390625
    %v925 = vmul.f32 %v880, %v880
    %v926 = vsub.f32 %v924, %v925
    %v927 = vld [vmem:[#allocation14] sm:$0x3]
    %v928 = vadd.f32 %v926, 1e-05
    %v929 = vrsqrt.pop %v928
    %v931 = vcombine.low %v929, %v929
    %v933 = vunpack.c.l.s4 1966171168
    %v934 = vunpack.c.0.s8 %v933
    %v935 = vlaneseq
    %v936 = vshrl.u32 %v935, 7
    %v937 = vsub.s32 %v934, %v936
    %v938 = vrot.slane %v931, %v937
    %v940 = vunpack.c.l.s4 1966171168
    %v941 = vunpack.c.0.s8 %v940
    %v942 = vlaneseq
    %v943 = vshrl.u32 %v942, 7
    %v944 = vsub.s32 %v941, %v943
    %v945 = vrot.slane %v938, %v944
    %v947 = vmul.f32 %v927, %v945
    %v948 = vld [vmem:[%s13] sm:$0x3]
    %v950 = vlaneseq
    %v951 = vshrl.u32 %v950, 7
    %v952 = vsub.s32 0, %v951
    %v953 = vrot.slane %v947, %v952
    %v954 = vlaneseq
    %v955 = vshrl.u32 %v954, 7
    %v956 = vsub.s32 1, %v955
    %v957 = vrot.slane %v947, %v956
    %v960 = vmul.f32 %v880, %v953
    %v961 = vmul.f32 %v880, %v957
    %v964 = vcombine.low %v960, %v961
    %v966 = vunpack.c.l.s4 1966171168
    %v967 = vunpack.c.0.s8 %v966
    %v968 = vlaneseq
    %v969 = vshrl.u32 %v968, 7
    %v970 = vsub.s32 %v967, %v969
    %v971 = vrot.slane %v964, %v970
    %v973 = vunpack.c.l.s4 1966171168
    %v974 = vunpack.c.0.s8 %v973
    %v975 = vlaneseq
    %v976 = vshrl.u32 %v975, 7
    %v977 = vsub.s32 %v974, %v976
    %v978 = vrot.slane %v971, %v977
    %v980 = vsub.f32 %v948, %v978
    %v981 = vmul.f32 %v833, %v953
    %v982 = vmul.f32 %v835, %v957
    %v983 = vmul.f32 %v837, %v953
    %v984 = vmul.f32 %v839, %v957
    %v986 = vlaneseq
    %v987 = vshrl.u32 %v986, 7
    %v988 = vsub.s32 0, %v987
    %v989 = vrot.slane %v980, %v988
    %v990 = vlaneseq
    %v991 = vshrl.u32 %v990, 7
    %v992 = vsub.s32 1, %v991
    %v993 = vrot.slane %v980, %v992
    %v996 = vadd.f32 %v981, %v989
    %v997 = vadd.f32 %v982, %v993
    %v998 = vadd.f32 %v983, %v989
    %v999 = vadd.f32 %v984, %v993
    %v1000 = vld [vmem:[%s16] sm:$0xff]
    %v1001 = vld [vmem:[%s16 + $0x8] sm:$0xff]
    %v1002 = vld [vmem:[%s16 + $0x10] sm:$0xff]
    %v1003 = vld [vmem:[%s16 + $0x18] sm:$0xff]
    %vm1004 = vcmask 130048
    %v1006 = vsel %vm1004, %v1000, 0
    %v1009 = vsel %vm1004, %v1001, 0
    %v1012 = vsel %vm1004, %v1002, 0
    %v1015 = vsel %vm1004, %v1003, 0
    %1017 = vmatprep.subr.mxu0 %v997
    %1018 = vmatpush1.msra.mxu0 %v996
    %1019 = vmatprep.subr.mxu0 %v999
    %1020 = vmatpush1.msra.mxu0 %v998
    %1021 = vmatprep.subr.mxu0 0.0
    %1022 = vmatpush1.msra.mxu0 0.0
    %1023 = vmatprep.subr.mxu0 0.0
    %1024 = vmatpush1.msra.mxu0 0.0
    %1025 = vmatprep.subr.mxu0 0.0
    %1026 = vmatpush1.msra.mxu0 0.0
    %1027 = vmatprep.subr.mxu0 0.0
    %1028 = vmatpush1.msra.mxu0 0.0
    %1029 = vmatprep.subr.mxu0 0.0
    %1030 = vmatpush1.msra.mxu0 0.0
    %1031 = vmatprep.subr.mxu0 0.0
    %1032 = vmatpush1.msra.mxu0 0.0
    %1033 = vmatprep.subr.mxu0 0.0
    %1034 = vmatpush1.msra.mxu0 0.0
    %1035 = vmatprep.subr.mxu0 0.0
    %1036 = vmatpush1.msra.mxu0 0.0
    %1037 = vmatprep.subr.mxu0 0.0
    %1038 = vmatpush1.msra.mxu0 0.0
    %1039 = vmatprep.subr.mxu0 0.0
    %1040 = vmatpush1.msra.mxu0 0.0
    %1041 = vmatprep.subr.mxu0 0.0
    %1042 = vmatpush1.msra.mxu0 0.0
    %1043 = vmatprep.subr.mxu0 0.0
    %1044 = vmatpush1.msra.mxu0 0.0
    %1045 = vmatprep.subr.mxu0 0.0
    %1046 = vmatpush1.msra.mxu0 0.0
    %1047 = vmatprep.subr.mxu0 0.0
    %1048 = vmatpush1.msra.mxu0 0.0
    %1049 = vmatprep.subr.mxu0 0.0
    %1050 = vmatpush1.msra.mxu0 0.0
    %1051 = vmatprep.subr.mxu0 0.0
    %1052 = vmatpush1.msra.mxu0 0.0
    %1053 = vmatprep.subr.mxu0 0.0
    %1054 = vmatpush1.msra.mxu0 0.0
    %1055 = vmatprep.subr.mxu0 0.0
    %1056 = vmatpush1.msra.mxu0 0.0
    %1057 = vmatprep.subr.mxu0 0.0
    %1058 = vmatpush1.msra.mxu0 0.0
    %1059 = vmatprep.subr.mxu0 0.0
    %1060 = vmatpush1.msra.mxu0 0.0
    %1061 = vmatprep.subr.mxu0 0.0
    %1062 = vmatpush1.msra.mxu0 0.0
    %1063 = vmatprep.subr.mxu0 0.0
    %1064 = vmatpush1.msra.mxu0 0.0
    %1065 = vmatprep.subr.mxu0 0.0
    %1066 = vmatpush1.msra.mxu0 0.0
    %1067 = vmatprep.subr.mxu0 0.0
    %1068 = vmatpush1.msra.mxu0 0.0
    %1069 = vmatprep.subr.mxu0 0.0
    %1070 = vmatpush1.msra.mxu0 0.0
    %1071 = vmatprep.subr.mxu0 0.0
    %1072 = vmatpush1.msra.mxu0 0.0
    %1073 = vmatprep.subr.mxu0 0.0
    %1074 = vmatpush1.msra.mxu0 0.0
    %1075 = vmatprep.subr.mxu0 0.0
    %1076 = vmatpush1.msra.mxu0 0.0
    %1077 = vmatprep.subr.mxu0 0.0
    %1078 = vmatpush1.msra.mxu0 0.0
    %1079 = vmatprep.subr.mxu0 0.0
    %1080 = vmatpush1.msra.mxu0 0.0
    %1081 = vmatprep.mubr.f32.mxu0 0.0
    %1082 = vmatmul.mubr.f32.gmra.mrb[0].mxu0 %v1006
    %v1083 = vpop.f32.mrb[0].mxu0
    %v1084 = vadd.f32 0.0, %v1083
    %v1085 = vpop.f32.mrb[0].mxu0
    %v1086 = vadd.f32 0.0, %v1085
    %1087 = vmatprep.mubr.f32.mxu0 0.0
    %1088 = vmatmul.mubr.f32.gmra.mrb[0].mxu0 %v1009
    %v1089 = vpop.f32.mrb[0].mxu0
    %v1090 = vadd.f32 0.0, %v1089
    %v1091 = vpop.f32.mrb[0].mxu0
    %v1092 = vadd.f32 0.0, %v1091
    %1093 = vmatprep.mubr.f32.mxu0 0.0
    %1094 = vmatmul.mubr.f32.gmra.mrb[0].mxu0 %v1012
    %v1095 = vpop.f32.mrb[0].mxu0
    %v1096 = vadd.f32 0.0, %v1095
    %v1097 = vpop.f32.mrb[0].mxu0
    %v1098 = vadd.f32 0.0, %v1097
    %1099 = vmatprep.mubr.f32.mxu0 0.0
    %1100 = vmatmul.mubr.f32.gmra.mrb[0].mxu0 %v1015
    %v1101 = vpop.f32.mrb[0].mxu0
    %v1102 = vadd.f32 0.0, %v1101
    %v1103 = vpop.f32.mrb[0].mxu0
    %v1104 = vadd.f32 0.0, %v1103
    %1105 = vdwg.mxu0
    %v1106 = vld [vmem:[%s2] sm:$0xff]
    %v1107 = vmax.f32 %v1106, 0.0
    %v1108 = vpack.c.bf16 %v1107, %v1107
    %v1109 = vld [vmem:[#allocation10] sm:$0xff]
    %v1110 = vld [vmem:[#allocation10 + $0x8] sm:$0xff]
    %v1111 = vld [vmem:[#allocation10 + $0x10] sm:$0xff]
    %v1112 = vld [vmem:[#allocation10 + $0x18] sm:$0xff]
    %v1113 = vld [vmem:[#allocation10 + $0x20] sm:$0xff]
    %v1114 = vld [vmem:[#allocation10 + $0x28] sm:$0xff]
    %v1115 = vld [vmem:[#allocation10 + $0x30] sm:$0xff]
    %v1116 = vld [vmem:[#allocation10 + $0x38] sm:$0xff]
    %v1117 = vld [vmem:[#allocation10 + $0x40] sm:$0xff]
    %v1118 = vld [vmem:[#allocation10 + $0x48] sm:$0xff]
    %v1119 = vld [vmem:[#allocation10 + $0x50] sm:$0xff]
    %v1120 = vld [vmem:[#allocation10 + $0x58] sm:$0xff]
    %v1121 = vld [vmem:[#allocation10 + $0x60] sm:$0xff]
    %v1122 = vld [vmem:[#allocation10 + $0x68] sm:$0xff]
    %v1123 = vld [vmem:[#allocation10 + $0x70] sm:$0xff]
    %v1124 = vld [vmem:[#allocation10 + $0x78] sm:$0xff]
    %v1141 = vunpack.c.l.b16 %v1109
    %v1142 = vunpack.c.h.b16 %v1109
    %v1143 = vunpack.c.l.b16 %v1110
    %v1144 = vunpack.c.h.b16 %v1110
    %v1145 = vunpack.c.l.b16 %v1111
    %v1146 = vunpack.c.h.b16 %v1111
    %v1147 = vunpack.c.l.b16 %v1112
    %v1148 = vunpack.c.h.b16 %v1112
    %v1149 = vunpack.c.l.b16 %v1113
    %v1150 = vunpack.c.h.b16 %v1113
    %v1151 = vunpack.c.l.b16 %v1114
    %v1152 = vunpack.c.h.b16 %v1114
    %v1153 = vunpack.c.l.b16 %v1115
    %v1154 = vunpack.c.h.b16 %v1115
    %v1155 = vunpack.c.l.b16 %v1116
    %v1156 = vunpack.c.h.b16 %v1116
    %v1157 = vunpack.c.l.b16 %v1117
    %v1158 = vunpack.c.h.b16 %v1117
    %v1159 = vunpack.c.l.b16 %v1118
    %v1160 = vunpack.c.h.b16 %v1118
    %v1161 = vunpack.c.l.b16 %v1119
    %v1162 = vunpack.c.h.b16 %v1119
    %v1163 = vunpack.c.l.b16 %v1120
    %v1164 = vunpack.c.h.b16 %v1120
    %v1165 = vunpack.c.l.b16 %v1121
    %v1166 = vunpack.c.h.b16 %v1121
    %v1167 = vunpack.c.l.b16 %v1122
    %v1168 = vunpack.c.h.b16 %v1122
    %v1169 = vunpack.c.l.b16 %v1123
    %v1170 = vunpack.c.h.b16 %v1123
    %v1171 = vunpack.c.l.b16 %v1124
    %v1172 = vunpack.c.h.b16 %v1124
    %v1173 = vpack.c.b16 %v1143, %v1141
    %v1174 = vpack.c.b16 %v1144, %v1142
    %v1175 = vpack.c.b16 %v1147, %v1145
    %v1176 = vpack.c.b16 %v1148, %v1146
    %v1177 = vpack.c.b16 %v1151, %v1149
    %v1178 = vpack.c.b16 %v1152, %v1150
    %v1179 = vpack.c.b16 %v1155, %v1153
    %v1180 = vpack.c.b16 %v1156, %v1154
    %v1181 = vpack.c.b16 %v1159, %v1157
    %v1182 = vpack.c.b16 %v1160, %v1158
    %v1183 = vpack.c.b16 %v1163, %v1161
    %v1184 = vpack.c.b16 %v1164, %v1162
    %v1185 = vpack.c.b16 %v1167, %v1165
    %v1186 = vpack.c.b16 %v1168, %v1166
    %v1187 = vpack.c.b16 %v1171, %v1169
    %v1188 = vpack.c.b16 %v1172, %v1170
    %1205 = vmatprep.subr.bf16.mxu0 %v1174
    %1206 = vmatpush1.bf16.msra.mxu0 %v1173
    %1207 = vmatprep.subr.bf16.mxu0 %v1176
    %1208 = vmatpush1.bf16.msra.mxu0 %v1175
    %1209 = vmatprep.subr.bf16.mxu0 %v1178
    %1210 = vmatpush1.bf16.msra.mxu0 %v1177
    %1211 = vmatprep.subr.bf16.mxu0 %v1180
    %1212 = vmatpush1.bf16.msra.mxu0 %v1179
    %1213 = vmatprep.subr.bf16.mxu0 %v1182
    %1214 = vmatpush1.bf16.msra.mxu0 %v1181
    %1215 = vmatprep.subr.bf16.mxu0 %v1184
    %1216 = vmatpush1.bf16.msra.mxu0 %v1183
    %1217 = vmatprep.subr.bf16.mxu0 %v1186
    %1218 = vmatpush1.bf16.msra.mxu0 %v1185
    %1219 = vmatprep.subr.bf16.mxu0 %v1188
    %1220 = vmatpush1.bf16.msra.mxu0 %v1187
    %1221 = vmatprep.subr.bf16.mxu0 0
    %1222 = vmatpush1.bf16.msra.mxu0 0
    %1223 = vmatprep.subr.bf16.mxu0 0
    %1224 = vmatpush1.bf16.msra.mxu0 0
    %1225 = vmatprep.subr.bf16.mxu0 0
    %1226 = vmatpush1.bf16.msra.mxu0 0
    %1227 = vmatprep.subr.bf16.mxu0 0
    %1228 = vmatpush1.bf16.msra.mxu0 0
    %1229 = vmatprep.subr.bf16.mxu0 0
    %1230 = vmatpush1.bf16.msra.mxu0 0
    %1231 = vmatprep.subr.bf16.mxu0 0
    %1232 = vmatpush1.bf16.msra.mxu0 0
    %1233 = vmatprep.subr.bf16.mxu0 0
    %1234 = vmatpush1.bf16.msra.mxu0 0
    %1235 = vmatprep.subr.bf16.mxu0 0
    %1236 = vmatpush1.bf16.msra.mxu0 0
    %1237 = vmatprep.mubr.bf16.mxu0 0
    %1238 = vmatmul.mubr.bf16.gmra.mrb[0].mxu0 %v1108
    %v1239 = vpop.f32.mrb[0].mxu0
    %v1240 = vadd.f32 0.0, %v1239
    %v1241 = vpop.f32.mrb[0].mxu0
    %v1242 = vadd.f32 0.0, %v1241
    %v1243 = vpop.f32.mrb[0].mxu0
    %v1244 = vpop.f32.mrb[0].mxu0
    %1245 = vdwg.mxu0
    %v1246 = vrot.slane %v1240, 4
    %v1247 = vadd.f32 %v1240, %v1246
    %v1248 = vrot.slane %v1247, 2
    %v1249 = vadd.f32 %v1247, %v1248
    %v1250 = vrot.slane %v1249, 1
    %v1251 = vadd.f32 %v1249, %v1250
    %v1252 = vrot.slane %v1242, 4
    %v1253 = vadd.f32 %v1242, %v1252
    %v1254 = vrot.slane %v1253, 2
    %v1255 = vadd.f32 %v1253, %v1254
    %v1256 = vrot.slane %v1255, 1
    %v1257 = vadd.f32 %v1255, %v1256
    %1258 = vrot.lane.b32.xlu0 %v1251, 16
    %v1259 = vpop.permute.xlu0 %1258
    %1260 = vrot.lane.b32.xlu0 %v1257, 16
    %v1261 = vpop.permute.xlu0 %1260
    %v1262 = vsel %vm205, %v1259, %v1261
    %v1263 = vsel %vm205, %v1261, %v1259
    %v1264 = vadd.f32 %v1251, %v1263
    %v1265 = vadd.f32 %v1257, %v1262
    %1266 = vrot.lane.b32.xlu0 %v1264, 32
    %v1267 = vpop.permute.xlu0 %1266
    %1268 = vrot.lane.b32.xlu0 %v1265, 32
    %v1269 = vpop.permute.xlu0 %1268
    %v1270 = vsel %vm546, %v1267, %v1269
    %v1271 = vsel %vm546, %v1269, %v1267
    %v1272 = vadd.f32 %v1264, %v1271
    %v1273 = vadd.f32 %v1265, %v1270
    %1274 = vrot.lane.b32.xlu0 %v1272, 64
    %v1275 = vpop.permute.xlu0 %1274
    %1276 = vrot.lane.b32.xlu0 %v1273, 64
    %v1277 = vpop.permute.xlu0 %1276
    %v1278 = vsel %vm555, %v1275, %v1277
    %v1279 = vsel %vm555, %v1277, %v1275
    %v1280 = vadd.f32 %v1272, %v1279
    %v1281 = vadd.f32 %v1273, %v1278
    %v1282 = vadd.f32 %v1280, %v1281
    %v1283 = vmul.f32 %v1282, 0.0078125
    %v1284 = vmul.f32 %v1240, %v1240
    %v1285 = vmul.f32 %v1242, %v1242
    %v1286 = vrot.slane %v1284, 4
    %v1287 = vadd.f32 %v1284, %v1286
    %v1288 = vrot.slane %v1287, 2
    %v1289 = vadd.f32 %v1287, %v1288
    %v1290 = vrot.slane %v1289, 1
    %v1291 = vadd.f32 %v1289, %v1290
    %v1292 = vrot.slane %v1285, 4
    %v1293 = vadd.f32 %v1285, %v1292
    %v1294 = vrot.slane %v1293, 2
    %v1295 = vadd.f32 %v1293, %v1294
    %v1296 = vrot.slane %v1295, 1
    %v1297 = vadd.f32 %v1295, %v1296
    %1298 = vrot.lane.b32.xlu0 %v1291, 16
    %v1299 = vpop.permute.xlu0 %1298
    %1300 = vrot.lane.b32.xlu0 %v1297, 16
    %v1301 = vpop.permute.xlu0 %1300
    %v1302 = vsel %vm205, %v1299, %v1301
    %v1303 = vsel %vm205, %v1301, %v1299
    %v1304 = vadd.f32 %v1291, %v1303
    %v1305 = vadd.f32 %v1297, %v1302
    %1306 = vrot.lane.b32.xlu0 %v1304, 32
    %v1307 = vpop.permute.xlu0 %1306
    %1308 = vrot.lane.b32.xlu0 %v1305, 32
    %v1309 = vpop.permute.xlu0 %1308
    %v1310 = vsel %vm546, %v1307, %v1309
    %v1311 = vsel %vm546, %v1309, %v1307
    %v1312 = vadd.f32 %v1304, %v1311
    %v1313 = vadd.f32 %v1305, %v1310
    %1314 = vrot.lane.b32.xlu0 %v1312, 64
    %v1315 = vpop.permute.xlu0 %1314
    %1316 = vrot.lane.b32.xlu0 %v1313, 64
    %v1317 = vpop.permute.xlu0 %1316
    %v1318 = vsel %vm555, %v1315, %v1317
    %v1319 = vsel %vm555, %v1317, %v1315
    %v1320 = vadd.f32 %v1312, %v1319
    %v1321 = vadd.f32 %v1313, %v1318
    %v1322 = vadd.f32 %v1320, %v1321
    %v1323 = vmul.f32 %v1322, 0.0078125
    %v1324 = vmul.f32 %v1283, %v1283
    %v1325 = vsub.f32 %v1323, %v1324
    %v1326 = vld [vmem:[#allocation16] sm:$0x3]
    %v1327 = vadd.f32 %v1325, 1e-05
    %v1328 = vrsqrt.pop %v1327
    %v1330 = vcombine.low %v1328, %v1328
    %v1332 = vunpack.c.l.s4 1966171168
    %v1333 = vunpack.c.0.s8 %v1332
    %v1334 = vlaneseq
    %v1335 = vshrl.u32 %v1334, 7
    %v1336 = vsub.s32 %v1333, %v1335
    %v1337 = vrot.slane %v1330, %v1336
    %v1339 = vunpack.c.l.s4 1966171168
    %v1340 = vunpack.c.0.s8 %v1339
    %v1341 = vlaneseq
    %v1342 = vshrl.u32 %v1341, 7
    %v1343 = vsub.s32 %v1340, %v1342
    %v1344 = vrot.slane %v1337, %v1343
    %v1346 = vmul.f32 %v1326, %v1344
    %v1347 = vld [vmem:[%s14] sm:$0x3]
    %v1349 = vlaneseq
    %v1350 = vshrl.u32 %v1349, 7
    %v1351 = vsub.s32 0, %v1350
    %v1352 = vrot.slane %v1346, %v1351
    %v1353 = vlaneseq
    %v1354 = vshrl.u32 %v1353, 7
    %v1355 = vsub.s32 1, %v1354
    %v1356 = vrot.slane %v1346, %v1355
    %v1359 = vmul.f32 %v1283, %v1352
    %v1360 = vmul.f32 %v1283, %v1356
    %v1363 = vcombine.low %v1359, %v1360
    %v1365 = vunpack.c.l.s4 1966171168
    %v1366 = vunpack.c.0.s8 %v1365
    %v1367 = vlaneseq
    %v1368 = vshrl.u32 %v1367, 7
    %v1369 = vsub.s32 %v1366, %v1368
    %v1370 = vrot.slane %v1363, %v1369
    %v1372 = vunpack.c.l.s4 1966171168
    %v1373 = vunpack.c.0.s8 %v1372
    %v1374 = vlaneseq
    %v1375 = vshrl.u32 %v1374, 7
    %v1376 = vsub.s32 %v1373, %v1375
    %v1377 = vrot.slane %v1370, %v1376
    %v1379 = vsub.f32 %v1347, %v1377
    %v1380 = vmul.f32 %v1240, %v1352
    %v1381 = vmul.f32 %v1242, %v1356
    %v1383 = vlaneseq
    %v1384 = vshrl.u32 %v1383, 7
    %v1385 = vsub.s32 0, %v1384
    %v1386 = vrot.slane %v1379, %v1385
    %v1387 = vlaneseq
    %v1388 = vshrl.u32 %v1387, 7
    %v1389 = vsub.s32 1, %v1388
    %v1390 = vrot.slane %v1379, %v1389
    %v1393 = vadd.f32 %v1380, %v1386
    %v1394 = vadd.f32 %v1381, %v1390
    %v1395 = vld [vmem:[%s17] sm:$0xff]
    %v1396 = vld [vmem:[%s17 + $0x8] sm:$0xff]
    %v1397 = vld [vmem:[%s17 + $0x10] sm:$0xff]
    %v1398 = vld [vmem:[%s17 + $0x18] sm:$0xff]
    %vm1399 = vcmask 64512
    %v1401 = vsel %vm1399, %v1395, 0
    %v1404 = vsel %vm1399, %v1396, 0
    %v1407 = vsel %vm1399, %v1397, 0
    %v1410 = vsel %vm1399, %v1398, 0
    %1412 = vmatprep.subr.mxu0 %v1394
    %1413 = vmatpush1.msra.mxu0 %v1393
    %1414 = vmatprep.subr.mxu0 0.0
    %1415 = vmatpush1.msra.mxu0 0.0
    %1416 = vmatprep.subr.mxu0 0.0
    %1417 = vmatpush1.msra.mxu0 0.0
    %1418 = vmatprep.subr.mxu0 0.0
    %1419 = vmatpush1.msra.mxu0 0.0
    %1420 = vmatprep.subr.mxu0 0.0
    %1421 = vmatpush1.msra.mxu0 0.0
    %1422 = vmatprep.subr.mxu0 0.0
    %1423 = vmatpush1.msra.mxu0 0.0
    %1424 = vmatprep.subr.mxu0 0.0
    %1425 = vmatpush1.msra.mxu0 0.0
    %1426 = vmatprep.subr.mxu0 0.0
    %1427 = vmatpush1.msra.mxu0 0.0
    %1428 = vmatprep.subr.mxu0 0.0
    %1429 = vmatpush1.msra.mxu0 0.0
    %1430 = vmatprep.subr.mxu0 0.0
    %1431 = vmatpush1.msra.mxu0 0.0
    %1432 = vmatprep.subr.mxu0 0.0
    %1433 = vmatpush1.msra.mxu0 0.0
    %1434 = vmatprep.subr.mxu0 0.0
    %1435 = vmatpush1.msra.mxu0 0.0
    %1436 = vmatprep.subr.mxu0 0.0
    %1437 = vmatpush1.msra.mxu0 0.0
    %1438 = vmatprep.subr.mxu0 0.0
    %1439 = vmatpush1.msra.mxu0 0.0
    %1440 = vmatprep.subr.mxu0 0.0
    %1441 = vmatpush1.msra.mxu0 0.0
    %1442 = vmatprep.subr.mxu0 0.0
    %1443 = vmatpush1.msra.mxu0 0.0
    %1444 = vmatprep.subr.mxu0 0.0
    %1445 = vmatpush1.msra.mxu0 0.0
    %1446 = vmatprep.subr.mxu0 0.0
    %1447 = vmatpush1.msra.mxu0 0.0
    %1448 = vmatprep.subr.mxu0 0.0
    %1449 = vmatpush1.msra.mxu0 0.0
    %1450 = vmatprep.subr.mxu0 0.0
    %1451 = vmatpush1.msra.mxu0 0.0
    %1452 = vmatprep.subr.mxu0 0.0
    %1453 = vmatpush1.msra.mxu0 0.0
    %1454 = vmatprep.subr.mxu0 0.0
    %1455 = vmatpush1.msra.mxu0 0.0
    %1456 = vmatprep.subr.mxu0 0.0
    %1457 = vmatpush1.msra.mxu0 0.0
    %1458 = vmatprep.subr.mxu0 0.0
    %1459 = vmatpush1.msra.mxu0 0.0
    %1460 = vmatprep.subr.mxu0 0.0
    %1461 = vmatpush1.msra.mxu0 0.0
    %1462 = vmatprep.subr.mxu0 0.0
    %1463 = vmatpush1.msra.mxu0 0.0
    %1464 = vmatprep.subr.mxu0 0.0
    %1465 = vmatpush1.msra.mxu0 0.0
    %1466 = vmatprep.subr.mxu0 0.0
    %1467 = vmatpush1.msra.mxu0 0.0
    %1468 = vmatprep.subr.mxu0 0.0
    %1469 = vmatpush1.msra.mxu0 0.0
    %1470 = vmatprep.subr.mxu0 0.0
    %1471 = vmatpush1.msra.mxu0 0.0
    %1472 = vmatprep.subr.mxu0 0.0
    %1473 = vmatpush1.msra.mxu0 0.0
    %1474 = vmatprep.subr.mxu0 0.0
    %1475 = vmatpush1.msra.mxu0 0.0
    %1476 = vmatprep.mubr.f32.mxu0 0.0
    %1477 = vmatmul.mubr.f32.gmra.mrb[0].mxu0 %v1401
    %v1478 = vpop.f32.mrb[0].mxu0
    %v1479 = vadd.f32 0.0, %v1478
    %v1480 = vpop.f32.mrb[0].mxu0
    %v1481 = vadd.f32 0.0, %v1480
    %1482 = vmatprep.mubr.f32.mxu0 0.0
    %1483 = vmatmul.mubr.f32.gmra.mrb[0].mxu0 %v1404
    %v1484 = vpop.f32.mrb[0].mxu0
    %v1485 = vadd.f32 0.0, %v1484
    %v1486 = vpop.f32.mrb[0].mxu0
    %v1487 = vadd.f32 0.0, %v1486
    %1488 = vmatprep.mubr.f32.mxu0 0.0
    %1489 = vmatmul.mubr.f32.gmra.mrb[0].mxu0 %v1407
    %v1490 = vpop.f32.mrb[0].mxu0
    %v1491 = vadd.f32 0.0, %v1490
    %v1492 = vpop.f32.mrb[0].mxu0
    %v1493 = vadd.f32 0.0, %v1492
    %1494 = vmatprep.mubr.f32.mxu0 0.0
    %1495 = vmatmul.mubr.f32.gmra.mrb[0].mxu0 %v1410
    %v1496 = vpop.f32.mrb[0].mxu0
    %v1497 = vadd.f32 0.0, %v1496
    %v1498 = vpop.f32.mrb[0].mxu0
    %v1499 = vadd.f32 0.0, %v1498
    %1500 = vdwg.mxu0
    %v1501 = vld [vmem:[#allocation7] sm:$0xf]
    %v1502 = vmax.f32 %v1501, 0.0
    %v1503 = vpack.c.bf16 %v1502, %v1502
    %v1504 = vld [vmem:[#allocation11] sm:$0xff]
    %v1505 = vld [vmem:[#allocation11 + $0x8] sm:$0xff]
    %v1506 = vld [vmem:[#allocation11 + $0x10] sm:$0xff]
    %v1507 = vld [vmem:[#allocation11 + $0x18] sm:$0xff]
    %v1508 = vld [vmem:[#allocation11 + $0x20] sm:$0xff]
    %v1509 = vld [vmem:[#allocation11 + $0x28] sm:$0xff]
    %v1510 = vld [vmem:[#allocation11 + $0x30] sm:$0xff]
    %v1511 = vld [vmem:[#allocation11 + $0x38] sm:$0xff]
    %v1512 = vld [vmem:[#allocation11 + $0x40] sm:$0xff]
    %v1513 = vld [vmem:[#allocation11 + $0x48] sm:$0xff]
    %v1514 = vld [vmem:[#allocation11 + $0x50] sm:$0xff]
    %v1515 = vld [vmem:[#allocation11 + $0x58] sm:$0xff]
    %v1516 = vld [vmem:[#allocation11 + $0x60] sm:$0xff]
    %v1517 = vld [vmem:[#allocation11 + $0x68] sm:$0xff]
    %v1518 = vld [vmem:[#allocation11 + $0x70] sm:$0xff]
    %v1519 = vld [vmem:[#allocation11 + $0x78] sm:$0xff]
    %v1536 = vunpack.c.l.b16 %v1504
    %v1537 = vunpack.c.h.b16 %v1504
    %v1538 = vunpack.c.l.b16 %v1505
    %v1539 = vunpack.c.h.b16 %v1505
    %v1540 = vunpack.c.l.b16 %v1506
    %v1541 = vunpack.c.h.b16 %v1506
    %v1542 = vunpack.c.l.b16 %v1507
    %v1543 = vunpack.c.h.b16 %v1507
    %v1544 = vunpack.c.l.b16 %v1508
    %v1545 = vunpack.c.h.b16 %v1508
    %v1546 = vunpack.c.l.b16 %v1509
    %v1547 = vunpack.c.h.b16 %v1509
    %v1548 = vunpack.c.l.b16 %v1510
    %v1549 = vunpack.c.h.b16 %v1510
    %v1550 = vunpack.c.l.b16 %v1511
    %v1551 = vunpack.c.h.b16 %v1511
    %v1552 = vunpack.c.l.b16 %v1512
    %v1553 = vunpack.c.h.b16 %v1512
    %v1554 = vunpack.c.l.b16 %v1513
    %v1555 = vunpack.c.h.b16 %v1513
    %v1556 = vunpack.c.l.b16 %v1514
    %v1557 = vunpack.c.h.b16 %v1514
    %v1558 = vunpack.c.l.b16 %v1515
    %v1559 = vunpack.c.h.b16 %v1515
    %v1560 = vunpack.c.l.b16 %v1516
    %v1561 = vunpack.c.h.b16 %v1516
    %v1562 = vunpack.c.l.b16 %v1517
    %v1563 = vunpack.c.h.b16 %v1517
    %v1564 = vunpack.c.l.b16 %v1518
    %v1565 = vunpack.c.h.b16 %v1518
    %v1566 = vunpack.c.l.b16 %v1519
    %v1567 = vunpack.c.h.b16 %v1519
    %v1568 = vpack.c.b16 %v1538, %v1536
    %v1569 = vpack.c.b16 %v1539, %v1537
    %v1570 = vpack.c.b16 %v1542, %v1540
    %v1571 = vpack.c.b16 %v1543, %v1541
    %v1572 = vpack.c.b16 %v1546, %v1544
    %v1573 = vpack.c.b16 %v1547, %v1545
    %v1574 = vpack.c.b16 %v1550, %v1548
    %v1575 = vpack.c.b16 %v1551, %v1549
    %v1576 = vpack.c.b16 %v1554, %v1552
    %v1577 = vpack.c.b16 %v1555, %v1553
    %v1578 = vpack.c.b16 %v1558, %v1556
    %v1579 = vpack.c.b16 %v1559, %v1557
    %v1580 = vpack.c.b16 %v1562, %v1560
    %v1581 = vpack.c.b16 %v1563, %v1561
    %v1582 = vpack.c.b16 %v1566, %v1564
    %v1583 = vpack.c.b16 %v1567, %v1565
    %1600 = vmatprep.subr.bf16.mxu0 %v1569
    %1601 = vmatpush1.bf16.msra.mxu0 %v1568
    %1602 = vmatprep.subr.bf16.mxu0 %v1571
    %1603 = vmatpush1.bf16.msra.mxu0 %v1570
    %1604 = vmatprep.subr.bf16.mxu0 %v1573
    %1605 = vmatpush1.bf16.msra.mxu0 %v1572
    %1606 = vmatprep.subr.bf16.mxu0 %v1575
    %1607 = vmatpush1.bf16.msra.mxu0 %v1574
    %1608 = vmatprep.subr.bf16.mxu0 %v1577
    %1609 = vmatpush1.bf16.msra.mxu0 %v1576
    %1610 = vmatprep.subr.bf16.mxu0 %v1579
    %1611 = vmatpush1.bf16.msra.mxu0 %v1578
    %1612 = vmatprep.subr.bf16.mxu0 %v1581
    %1613 = vmatpush1.bf16.msra.mxu0 %v1580
    %1614 = vmatprep.subr.bf16.mxu0 %v1583
    %1615 = vmatpush1.bf16.msra.mxu0 %v1582
    %1616 = vmatprep.subr.bf16.mxu0 0
    %1617 = vmatpush1.bf16.msra.mxu0 0
    %1618 = vmatprep.subr.bf16.mxu0 0
    %1619 = vmatpush1.bf16.msra.mxu0 0
    %1620 = vmatprep.subr.bf16.mxu0 0
    %1621 = vmatpush1.bf16.msra.mxu0 0
    %1622 = vmatprep.subr.bf16.mxu0 0
    %1623 = vmatpush1.bf16.msra.mxu0 0
    %1624 = vmatprep.subr.bf16.mxu0 0
    %1625 = vmatpush1.bf16.msra.mxu0 0
    %1626 = vmatprep.subr.bf16.mxu0 0
    %1627 = vmatpush1.bf16.msra.mxu0 0
    %1628 = vmatprep.subr.bf16.mxu0 0
    %1629 = vmatpush1.bf16.msra.mxu0 0
    %1630 = vmatprep.subr.bf16.mxu0 0
    %1631 = vmatpush1.bf16.msra.mxu0 0
    %1632 = vmatprep.mubr.bf16.mxu0 0
    %1633 = vmatmul.mubr.bf16.gmra.mrb[0].mxu0 %v1503
    %v1634 = vpop.f32.mrb[0].mxu0
    %v1635 = vadd.f32 0.0, %v1634
    %v1636 = vpop.f32.mrb[0].mxu0
    %v1637 = vadd.f32 0.0, %v1636
    %v1638 = vpop.f32.mrb[0].mxu0
    %v1639 = vpop.f32.mrb[0].mxu0
    %1640 = vdwg.mxu0
    %vm1641 = vcmask 1043456
    %v1642 = vsel %vm1641, %v1635, 0.0
    %v1643 = vrot.slane %v1642, 4
    %v1644 = vadd.f32 %v1642, %v1643
    %v1645 = vrot.slane %v1644, 2
    %v1646 = vadd.f32 %v1644, %v1645
    %v1647 = vrot.slane %v1646, 1
    %v1648 = vadd.f32 %v1646, %v1647
    %v1649 = vsel %vm1641, %v1637, 0.0
    %v1650 = vrot.slane %v1649, 4
    %v1651 = vadd.f32 %v1649, %v1650
    %v1652 = vrot.slane %v1651, 2
    %v1653 = vadd.f32 %v1651, %v1652
    %v1654 = vrot.slane %v1653, 1
    %v1655 = vadd.f32 %v1653, %v1654
    %1656 = vrot.lane.b32.xlu0 %v1648, 16
    %v1657 = vpop.permute.xlu0 %1656
    %1658 = vrot.lane.b32.xlu0 %v1655, 16
    %v1659 = vpop.permute.xlu0 %1658
    %v1660 = vsel %vm205, %v1657, %v1659
    %v1661 = vsel %vm205, %v1659, %v1657
    %v1662 = vadd.f32 %v1648, %v1661
    %v1663 = vadd.f32 %v1655, %v1660
    %1664 = vrot.lane.b32.xlu0 %v1662, 32
    %v1665 = vpop.permute.xlu0 %1664
    %1666 = vrot.lane.b32.xlu0 %v1663, 32
    %v1667 = vpop.permute.xlu0 %1666
    %v1668 = vsel %vm546, %v1665, %v1667
    %v1669 = vsel %vm546, %v1667, %v1665
    %v1670 = vadd.f32 %v1662, %v1669
    %v1671 = vadd.f32 %v1663, %v1668
    %1672 = vrot.lane.b32.xlu0 %v1670, 64
    %v1673 = vpop.permute.xlu0 %1672
    %1674 = vrot.lane.b32.xlu0 %v1671, 64
    %v1675 = vpop.permute.xlu0 %1674
    %v1676 = vsel %vm555, %v1673, %v1675
    %v1677 = vsel %vm555, %v1675, %v1673
    %v1678 = vadd.f32 %v1670, %v1677
    %v1679 = vadd.f32 %v1671, %v1676
    %v1680 = vadd.f32 %v1678, %v1679
    %v1681 = vmul.f32 %v1680, 0.015625
    %v1682 = vmul.f32 %v1635, %v1635
    %v1683 = vmul.f32 %v1637, %v1637
    %v1684 = vsel %vm1641, %v1682, 0.0
    %v1685 = vrot.slane %v1684, 4
    %v1686 = vadd.f32 %v1684, %v1685
    %v1687 = vrot.slane %v1686, 2
    %v1688 = vadd.f32 %v1686, %v1687
    %v1689 = vrot.slane %v1688, 1
    %v1690 = vadd.f32 %v1688, %v1689
    %v1691 = vsel %vm1641, %v1683, 0.0
    %v1692 = vrot.slane %v1691, 4
    %v1693 = vadd.f32 %v1691, %v1692
    %v1694 = vrot.slane %v1693, 2
    %v1695 = vadd.f32 %v1693, %v1694
    %v1696 = vrot.slane %v1695, 1
    %v1697 = vadd.f32 %v1695, %v1696
    %1698 = vrot.lane.b32.xlu0 %v1690, 16
    %v1699 = vpop.permute.xlu0 %1698
    %1700 = vrot.lane.b32.xlu0 %v1697, 16
    %v1701 = vpop.permute.xlu0 %1700
    %v1702 = vsel %vm205, %v1699, %v1701
    %v1703 = vsel %vm205, %v1701, %v1699
    %v1704 = vadd.f32 %v1690, %v1703
    %v1705 = vadd.f32 %v1697, %v1702
    %1706 = vrot.lane.b32.xlu0 %v1704, 32
    %v1707 = vpop.permute.xlu0 %1706
    %1708 = vrot.lane.b32.xlu0 %v1705, 32
    %v1709 = vpop.permute.xlu0 %1708
    %v1710 = vsel %vm546, %v1707, %v1709
    %v1711 = vsel %vm546, %v1709, %v1707
    %v1712 = vadd.f32 %v1704, %v1711
    %v1713 = vadd.f32 %v1705, %v1710
    %1714 = vrot.lane.b32.xlu0 %v1712, 64
    %v1715 = vpop.permute.xlu0 %1714
    %1716 = vrot.lane.b32.xlu0 %v1713, 64
    %v1717 = vpop.permute.xlu0 %1716
    %v1718 = vsel %vm555, %v1715, %v1717
    %v1719 = vsel %vm555, %v1717, %v1715
    %v1720 = vadd.f32 %v1712, %v1719
    %v1721 = vadd.f32 %v1713, %v1718
    %v1722 = vadd.f32 %v1720, %v1721
    %v1723 = vmul.f32 %v1722, 0.015625
    %v1724 = vmul.f32 %v1681, %v1681
    %v1725 = vsub.f32 %v1723, %v1724
    %v1726 = vld [vmem:[#allocation17] sm:$0x3]
    %v1727 = vadd.f32 %v1725, 1e-05
    %v1728 = vrsqrt.pop %v1727
    %v1730 = vcombine.low %v1728, %v1728
    %v1732 = vunpack.c.l.s4 1966171168
    %v1733 = vunpack.c.0.s8 %v1732
    %v1734 = vlaneseq
    %v1735 = vshrl.u32 %v1734, 7
    %v1736 = vsub.s32 %v1733, %v1735
    %v1737 = vrot.slane %v1730, %v1736
    %v1739 = vunpack.c.l.s4 1966171168
    %v1740 = vunpack.c.0.s8 %v1739
    %v1741 = vlaneseq
    %v1742 = vshrl.u32 %v1741, 7
    %v1743 = vsub.s32 %v1740, %v1742
    %v1744 = vrot.slane %v1737, %v1743
    %v1746 = vmul.f32 %v1726, %v1744
    %v1747 = vld [vmem:[%s15] sm:$0x3]
    %v1749 = vlaneseq
    %v1750 = vshrl.u32 %v1749, 7
    %v1751 = vsub.s32 0, %v1750
    %v1752 = vrot.slane %v1746, %v1751
    %v1753 = vlaneseq
    %v1754 = vshrl.u32 %v1753, 7
    %v1755 = vsub.s32 1, %v1754
    %v1756 = vrot.slane %v1746, %v1755
    %v1759 = vmul.f32 %v1681, %v1752
    %v1760 = vmul.f32 %v1681, %v1756
    %v1763 = vcombine.low %v1759, %v1760
    %v1765 = vunpack.c.l.s4 1966171168
    %v1766 = vunpack.c.0.s8 %v1765
    %v1767 = vlaneseq
    %v1768 = vshrl.u32 %v1767, 7
    %v1769 = vsub.s32 %v1766, %v1768
    %v1770 = vrot.slane %v1763, %v1769
    %v1772 = vunpack.c.l.s4 1966171168
    %v1773 = vunpack.c.0.s8 %v1772
    %v1774 = vlaneseq
    %v1775 = vshrl.u32 %v1774, 7
    %v1776 = vsub.s32 %v1773, %v1775
    %v1777 = vrot.slane %v1770, %v1776
    %v1779 = vsub.f32 %v1747, %v1777
    %v1780 = vmul.f32 %v1635, %v1752
    %v1781 = vmul.f32 %v1637, %v1756
    %v1783 = vlaneseq
    %v1784 = vshrl.u32 %v1783, 7
    %v1785 = vsub.s32 0, %v1784
    %v1786 = vrot.slane %v1779, %v1785
    %v1787 = vlaneseq
    %v1788 = vshrl.u32 %v1787, 7
    %v1789 = vsub.s32 1, %v1788
    %v1790 = vrot.slane %v1779, %v1789
    %v1793 = vadd.f32 %v1780, %v1786
    %v1794 = vadd.f32 %v1781, %v1790
    %v1795 = vld [vmem:[%s18] sm:$0xff]
    %v1796 = vld [vmem:[%s18 + $0x8] sm:$0xff]
    %v1797 = vld [vmem:[%s18 + $0x10] sm:$0xff]
    %v1798 = vld [vmem:[%s18 + $0x18] sm:$0xff]
    %vm1799 = vcmask 31744
    %v1801 = vsel %vm1799, %v1795, 0
    %v1804 = vsel %vm1799, %v1796, 0
    %v1807 = vsel %vm1799, %v1797, 0
    %v1810 = vsel %vm1799, %v1798, 0
    %v1813 = vsel %vm1641, %v1793, 0
    %v1816 = vsel %vm1641, %v1794, 0
    %1818 = vmatprep.subr.mxu0 %v1816
    %1819 = vmatpush1.msra.mxu0 %v1813
    %1820 = vmatprep.subr.mxu0 0.0
    %1821 = vmatpush1.msra.mxu0 0.0
    %1822 = vmatprep.subr.mxu0 0.0
    %1823 = vmatpush1.msra.mxu0 0.0
    %1824 = vmatprep.subr.mxu0 0.0
    %1825 = vmatpush1.msra.mxu0 0.0
    %1826 = vmatprep.subr.mxu0 0.0
    %1827 = vmatpush1.msra.mxu0 0.0
    %1828 = vmatprep.subr.mxu0 0.0
    %1829 = vmatpush1.msra.mxu0 0.0
    %1830 = vmatprep.subr.mxu0 0.0
    %1831 = vmatpush1.msra.mxu0 0.0
    %1832 = vmatprep.subr.mxu0 0.0
    %1833 = vmatpush1.msra.mxu0 0.0
    %1834 = vmatprep.subr.mxu0 0.0
    %1835 = vmatpush1.msra.mxu0 0.0
    %1836 = vmatprep.subr.mxu0 0.0
    %1837 = vmatpush1.msra.mxu0 0.0
    %1838 = vmatprep.subr.mxu0 0.0
    %1839 = vmatpush1.msra.mxu0 0.0
    %1840 = vmatprep.subr.mxu0 0.0
    %1841 = vmatpush1.msra.mxu0 0.0
    %1842 = vmatprep.subr.mxu0 0.0
    %1843 = vmatpush1.msra.mxu0 0.0
    %1844 = vmatprep.subr.mxu0 0.0
    %1845 = vmatpush1.msra.mxu0 0.0
    %1846 = vmatprep.subr.mxu0 0.0
    %1847 = vmatpush1.msra.mxu0 0.0
    %1848 = vmatprep.subr.mxu0 0.0
    %1849 = vmatpush1.msra.mxu0 0.0
    %1850 = vmatprep.subr.mxu0 0.0
    %1851 = vmatpush1.msra.mxu0 0.0
    %1852 = vmatprep.subr.mxu0 0.0
    %1853 = vmatpush1.msra.mxu0 0.0
    %1854 = vmatprep.subr.mxu0 0.0
    %1855 = vmatpush1.msra.mxu0 0.0
    %1856 = vmatprep.subr.mxu0 0.0
    %1857 = vmatpush1.msra.mxu0 0.0
    %1858 = vmatprep.subr.mxu0 0.0
    %1859 = vmatpush1.msra.mxu0 0.0
    %1860 = vmatprep.subr.mxu0 0.0
    %1861 = vmatpush1.msra.mxu0 0.0
    %1862 = vmatprep.subr.mxu0 0.0
    %1863 = vmatpush1.msra.mxu0 0.0
    %1864 = vmatprep.subr.mxu0 0.0
    %1865 = vmatpush1.msra.mxu0 0.0
    %1866 = vmatprep.subr.mxu0 0.0
    %1867 = vmatpush1.msra.mxu0 0.0
    %1868 = vmatprep.subr.mxu0 0.0
    %1869 = vmatpush1.msra.mxu0 0.0
    %1870 = vmatprep.subr.mxu0 0.0
    %1871 = vmatpush1.msra.mxu0 0.0
    %1872 = vmatprep.subr.mxu0 0.0
    %1873 = vmatpush1.msra.mxu0 0.0
    %1874 = vmatprep.subr.mxu0 0.0
    %1875 = vmatpush1.msra.mxu0 0.0
    %1876 = vmatprep.subr.mxu0 0.0
    %1877 = vmatpush1.msra.mxu0 0.0
    %1878 = vmatprep.subr.mxu0 0.0
    %1879 = vmatpush1.msra.mxu0 0.0
    %1880 = vmatprep.subr.mxu0 0.0
    %1881 = vmatpush1.msra.mxu0 0.0
    %1882 = vmatprep.mubr.f32.mxu0 0.0
    %1883 = vmatmul.mubr.f32.gmra.mrb[0].mxu0 %v1801
    %v1884 = vpop.f32.mrb[0].mxu0
    %v1885 = vadd.f32 0.0, %v1884
    %v1886 = vpop.f32.mrb[0].mxu0
    %v1887 = vadd.f32 0.0, %v1886
    %1888 = vmatprep.mubr.f32.mxu0 0.0
    %1889 = vmatmul.mubr.f32.gmra.mrb[0].mxu0 %v1804
    %v1890 = vpop.f32.mrb[0].mxu0
    %v1891 = vadd.f32 0.0, %v1890
    %v1892 = vpop.f32.mrb[0].mxu0
    %v1893 = vadd.f32 0.0, %v1892
    %1894 = vmatprep.mubr.f32.mxu0 0.0
    %1895 = vmatmul.mubr.f32.gmra.mrb[0].mxu0 %v1807
    %v1896 = vpop.f32.mrb[0].mxu0
    %v1897 = vadd.f32 0.0, %v1896
    %v1898 = vpop.f32.mrb[0].mxu0
    %v1899 = vadd.f32 0.0, %v1898
    %1900 = vmatprep.mubr.f32.mxu0 0.0
    %1901 = vmatmul.mubr.f32.gmra.mrb[0].mxu0 %v1810
    %v1902 = vpop.f32.mrb[0].mxu0
    %v1903 = vadd.f32 0.0, %v1902
    %v1904 = vpop.f32.mrb[0].mxu0
    %v1905 = vadd.f32 0.0, %v1904
    %1906 = vdwg.mxu0
    %1907 = vrot.lane.b32.xlu0 %v1084, 16
    %v1908 = vpop.permute.xlu0 %1907
    %1909 = vrot.lane.b32.xlu0 %v1090, 16
    %v1910 = vpop.permute.xlu0 %1909
    %1911 = vrot.lane.b32.xlu0 %v1096, 16
    %v1912 = vpop.permute.xlu0 %1911
    %1913 = vrot.lane.b32.xlu0 %v1102, 16
    %v1914 = vpop.permute.xlu0 %1913
    %1915 = vrot.lane.b32.xlu0 %v1086, 16
    %v1916 = vpop.permute.xlu0 %1915
    %1917 = vrot.lane.b32.xlu0 %v1092, 16
    %v1918 = vpop.permute.xlu0 %1917
    %1919 = vrot.lane.b32.xlu0 %v1098, 16
    %v1920 = vpop.permute.xlu0 %1919
    %1921 = vrot.lane.b32.xlu0 %v1104, 16
    %v1922 = vpop.permute.xlu0 %1921
    %v1923 = vsel %vm205, %v1908, %v1916
    %v1924 = vsel %vm205, %v1910, %v1918
    %v1925 = vsel %vm205, %v1912, %v1920
    %v1926 = vsel %vm205, %v1914, %v1922
    %v1927 = vsel %vm205, %v1916, %v1908
    %v1928 = vsel %vm205, %v1918, %v1910
    %v1929 = vsel %vm205, %v1920, %v1912
    %v1930 = vsel %vm205, %v1922, %v1914
    %v1931 = vsel %vm223, %v1927, 0.0
    %v1932 = vsel %vm224, %v1923, 0.0
    %v1933 = vsel %vm223, %v1928, 0.0
    %v1934 = vsel %vm224, %v1924, 0.0
    %v1935 = vsel %vm223, %v1929, 0.0
    %v1936 = vsel %vm224, %v1925, 0.0
    %v1937 = vsel %vm223, %v1930, 0.0
    %v1938 = vsel %vm224, %v1926, 0.0
    %1939 = vrot.lane.b32.xlu0 %v1084, 112
    %v1940 = vpop.permute.xlu0 %1939
    %1941 = vrot.lane.b32.xlu0 %v1090, 112
    %v1942 = vpop.permute.xlu0 %1941
    %1943 = vrot.lane.b32.xlu0 %v1096, 112
    %v1944 = vpop.permute.xlu0 %1943
    %1945 = vrot.lane.b32.xlu0 %v1102, 112
    %v1946 = vpop.permute.xlu0 %1945
    %1947 = vrot.lane.b32.xlu0 %v1086, 112
    %v1948 = vpop.permute.xlu0 %1947
    %1949 = vrot.lane.b32.xlu0 %v1092, 112
    %v1950 = vpop.permute.xlu0 %1949
    %1951 = vrot.lane.b32.xlu0 %v1098, 112
    %v1952 = vpop.permute.xlu0 %1951
    %1953 = vrot.lane.b32.xlu0 %v1104, 112
    %v1954 = vpop.permute.xlu0 %1953
    %v1955 = vsel %vm212, %v1940, %v1948
    %v1956 = vsel %vm212, %v1942, %v1950
    %v1957 = vsel %vm212, %v1944, %v1952
    %v1958 = vsel %vm212, %v1946, %v1954
    %v1959 = vsel %vm212, %v1948, %v1940
    %v1960 = vsel %vm212, %v1950, %v1942
    %v1961 = vsel %vm212, %v1952, %v1944
    %v1962 = vsel %vm212, %v1954, %v1946
    %v1963 = vsel %vm229, %v1955, 0.0
    %v1964 = vsel %vm230, %v1959, 0.0
    %v1965 = vsel %vm229, %v1956, 0.0
    %v1966 = vsel %vm230, %v1960, 0.0
    %v1967 = vsel %vm229, %v1957, 0.0
    %v1968 = vsel %vm230, %v1961, 0.0
    %v1969 = vsel %vm229, %v1958, 0.0
    %v1970 = vsel %vm230, %v1962, 0.0
    %v1971 = vadd.f32 %v1931, %v1084
    %v1972 = vadd.f32 %v1932, %v1086
    %v1973 = vadd.f32 %v1933, %v1090
    %v1974 = vadd.f32 %v1934, %v1092
    %v1975 = vadd.f32 %v1935, %v1096
    %v1976 = vadd.f32 %v1936, %v1098
    %v1977 = vadd.f32 %v1937, %v1102
    %v1978 = vadd.f32 %v1938, %v1104
    %v1979 = vadd.f32 %v1971, %v1963
    %v1980 = vadd.f32 %v1972, %v1964
    %v1981 = vadd.f32 %v1973, %v1965
    %v1982 = vadd.f32 %v1974, %v1966
    %v1983 = vadd.f32 %v1975, %v1967
    %v1984 = vadd.f32 %v1976, %v1968
    %v1985 = vadd.f32 %v1977, %v1969
    %v1986 = vadd.f32 %v1978, %v1970
    %v1987 = vrot.slane %v1979, 7
    %v1988 = vrot.slane %v1980, 7
    %v1989 = vrot.slane %v1981, 7
    %v1990 = vrot.slane %v1982, 7
    %v1991 = vrot.slane %v1983, 7
    %v1992 = vrot.slane %v1984, 7
    %v1993 = vrot.slane %v1985, 7
    %v1994 = vrot.slane %v1986, 7
    %v1995 = vsel %vm235, %v1991, %v1993
    %v1996 = vsel %vm235, %v1992, %v1994
    %v1997 = vsel %vm235, %v1989, %v1991
    %v1998 = vsel %vm235, %v1990, %v1992
    %v1999 = vsel %vm235, %v1987, %v1989
    %v2000 = vsel %vm235, %v1988, %v1990
    %v2001 = vsel %vm235, %v1993, %v1987
    %v2002 = vsel %vm235, %v1994, %v1988
    %v2003 = vsel %vm285, %v2001, 0.0
    %v2004 = vsel %vm285, %v2002, 0.0
    %v2005 = vsel %vm286, %v1999, 0.0
    %v2006 = vsel %vm286, %v2000, 0.0
    %v2007 = vsel %vm287, %v1997, 0.0
    %v2008 = vsel %vm287, %v1998, 0.0
    %v2009 = vsel %vm288, %v1995, 0.0
    %v2010 = vsel %vm288, %v1996, 0.0
    %v2011 = vrot.slane %v1979, 1
    %v2012 = vrot.slane %v1980, 1
    %v2013 = vrot.slane %v1981, 1
    %v2014 = vrot.slane %v1982, 1
    %v2015 = vrot.slane %v1983, 1
    %v2016 = vrot.slane %v1984, 1
    %v2017 = vrot.slane %v1985, 1
    %v2018 = vrot.slane %v1986, 1
    %v2019 = vsel %vm244, %v2015, %v2017
    %v2020 = vsel %vm244, %v2016, %v2018
    %v2021 = vsel %vm244, %v2013, %v2015
    %v2022 = vsel %vm244, %v2014, %v2016
    %v2023 = vsel %vm244, %v2011, %v2013
    %v2024 = vsel %vm244, %v2012, %v2014
    %v2025 = vsel %vm244, %v2017, %v2011
    %v2026 = vsel %vm244, %v2018, %v2012
    %v2027 = vsel %vm305, %v2023, 0.0
    %v2028 = vsel %vm305, %v2024, 0.0
    %v2029 = vsel %vm306, %v2021, 0.0
    %v2030 = vsel %vm306, %v2022, 0.0
    %v2031 = vsel %vm307, %v2019, 0.0
    %v2032 = vsel %vm307, %v2020, 0.0
    %v2033 = vsel %vm308, %v2025, 0.0
    %v2034 = vsel %vm308, %v2026, 0.0
    %v2035 = vadd.f32 %v2003, %v1979
    %v2036 = vadd.f32 %v2004, %v1980
    %v2037 = vadd.f32 %v2005, %v1981
    %v2038 = vadd.f32 %v2006, %v1982
    %v2039 = vadd.f32 %v2007, %v1983
    %v2040 = vadd.f32 %v2008, %v1984
    %v2041 = vadd.f32 %v2009, %v1985
    %v2042 = vadd.f32 %v2010, %v1986
    %v2043 = vadd.f32 %v2035, %v2027
    %v2044 = vadd.f32 %v2036, %v2028
    %v2045 = vadd.f32 %v2037, %v2029
    %v2046 = vadd.f32 %v2038, %v2030
    %v2047 = vadd.f32 %v2039, %v2031
    %v2048 = vadd.f32 %v2040, %v2032
    %v2049 = vadd.f32 %v2041, %v2033
    %v2050 = vadd.f32 %v2042, %v2034
    %v2051 = vmul.f32 %v2043, %v342
    %v2052 = vmul.f32 %v2044, %v344
    %v2053 = vmul.f32 %v2045, %v346
    %v2054 = vmul.f32 %v2046, %v348
    %v2055 = vmul.f32 %v2047, %v350
    %v2056 = vmul.f32 %v2048, %v352
    %v2057 = vmul.f32 %v2049, %v354
    %v2058 = vmul.f32 %v2050, %v356
    %v2059 = vadd.f32 %v689, %v2051
    %v2060 = vadd.f32 %v690, %v2052
    %v2061 = vadd.f32 %v691, %v2053
    %v2062 = vadd.f32 %v692, %v2054
    %v2063 = vadd.f32 %v693, %v2055
    %v2064 = vadd.f32 %v694, %v2056
    %v2065 = vadd.f32 %v695, %v2057
    %v2066 = vadd.f32 %v696, %v2058
    %v2067 = vadd.f32 %v2059, %v1479
    %v2068 = vadd.f32 %v2060, %v1481
    %v2069 = vadd.f32 %v2061, %v1485
    %v2070 = vadd.f32 %v2062, %v1487
    %v2071 = vadd.f32 %v2063, %v1491
    %v2072 = vadd.f32 %v2064, %v1493
    %v2073 = vadd.f32 %v2065, %v1497
    %v2074 = vadd.f32 %v2066, %v1499
    %2075 = vrot.lane.b32.xlu0 %v1885, 16
    %v2076 = vpop.permute.xlu0 %2075
    %2077 = vrot.lane.b32.xlu0 %v1891, 16
    %v2078 = vpop.permute.xlu0 %2077
    %2079 = vrot.lane.b32.xlu0 %v1897, 16
    %v2080 = vpop.permute.xlu0 %2079
    %2081 = vrot.lane.b32.xlu0 %v1903, 16
    %v2082 = vpop.permute.xlu0 %2081
    %2083 = vrot.lane.b32.xlu0 %v1887, 16
    %v2084 = vpop.permute.xlu0 %2083
    %2085 = vrot.lane.b32.xlu0 %v1893, 16
    %v2086 = vpop.permute.xlu0 %2085
    %2087 = vrot.lane.b32.xlu0 %v1899, 16
    %v2088 = vpop.permute.xlu0 %2087
    %2089 = vrot.lane.b32.xlu0 %v1905, 16
    %v2090 = vpop.permute.xlu0 %2089
    %v2091 = vsel %vm205, %v2076, %v2084
    %v2092 = vsel %vm205, %v2078, %v2086
    %v2093 = vsel %vm205, %v2080, %v2088
    %v2094 = vsel %vm205, %v2082, %v2090
    %v2095 = vsel %vm205, %v2084, %v2076
    %v2096 = vsel %vm205, %v2086, %v2078
    %v2097 = vsel %vm205, %v2088, %v2080
    %v2098 = vsel %vm205, %v2090, %v2082
    %v2099 = vsel %vm223, %v2095, 0.0
    %v2100 = vsel %vm224, %v2091, 0.0
    %v2101 = vsel %vm223, %v2096, 0.0
    %v2102 = vsel %vm224, %v2092, 0.0
    %v2103 = vsel %vm223, %v2097, 0.0
    %v2104 = vsel %vm224, %v2093, 0.0
    %v2105 = vsel %vm223, %v2098, 0.0
    %v2106 = vsel %vm224, %v2094, 0.0
    %2107 = vrot.lane.b32.xlu0 %v1885, 112
    %v2108 = vpop.permute.xlu0 %2107
    %2109 = vrot.lane.b32.xlu0 %v1891, 112
    %v2110 = vpop.permute.xlu0 %2109
    %2111 = vrot.lane.b32.xlu0 %v1897, 112
    %v2112 = vpop.permute.xlu0 %2111
    %2113 = vrot.lane.b32.xlu0 %v1903, 112
    %v2114 = vpop.permute.xlu0 %2113
    %2115 = vrot.lane.b32.xlu0 %v1887, 112
    %v2116 = vpop.permute.xlu0 %2115
    %2117 = vrot.lane.b32.xlu0 %v1893, 112
    %v2118 = vpop.permute.xlu0 %2117
    %2119 = vrot.lane.b32.xlu0 %v1899, 112
    %v2120 = vpop.permute.xlu0 %2119
    %2121 = vrot.lane.b32.xlu0 %v1905, 112
    %v2122 = vpop.permute.xlu0 %2121
    %v2123 = vsel %vm212, %v2108, %v2116
    %v2124 = vsel %vm212, %v2110, %v2118
    %v2125 = vsel %vm212, %v2112, %v2120
    %v2126 = vsel %vm212, %v2114, %v2122
    %v2127 = vsel %vm212, %v2116, %v2108
    %v2128 = vsel %vm212, %v2118, %v2110
    %v2129 = vsel %vm212, %v2120, %v2112
    %v2130 = vsel %vm212, %v2122, %v2114
    %v2131 = vsel %vm229, %v2123, 0.0
    %v2132 = vsel %vm230, %v2127, 0.0
    %v2133 = vsel %vm229, %v2124, 0.0
    %v2134 = vsel %vm230, %v2128, 0.0
    %v2135 = vsel %vm229, %v2125, 0.0
    %v2136 = vsel %vm230, %v2129, 0.0
    %v2137 = vsel %vm229, %v2126, 0.0
    %v2138 = vsel %vm230, %v2130, 0.0
    %v2139 = vadd.f32 %v2099, %v1885
    %v2140 = vadd.f32 %v2100, %v1887
    %v2141 = vadd.f32 %v2101, %v1891
    %v2142 = vadd.f32 %v2102, %v1893
    %v2143 = vadd.f32 %v2103, %v1897
    %v2144 = vadd.f32 %v2104, %v1899
    %v2145 = vadd.f32 %v2105, %v1903
    %v2146 = vadd.f32 %v2106, %v1905
    %v2147 = vadd.f32 %v2139, %v2131
    %v2148 = vadd.f32 %v2140, %v2132
    %v2149 = vadd.f32 %v2141, %v2133
    %v2150 = vadd.f32 %v2142, %v2134
    %v2151 = vadd.f32 %v2143, %v2135
    %v2152 = vadd.f32 %v2144, %v2136
    %v2153 = vadd.f32 %v2145, %v2137
    %v2154 = vadd.f32 %v2146, %v2138
    %v2155 = vrot.slane %v2147, 7
    %v2156 = vrot.slane %v2148, 7
    %v2157 = vrot.slane %v2149, 7
    %v2158 = vrot.slane %v2150, 7
    %v2159 = vrot.slane %v2151, 7
    %v2160 = vrot.slane %v2152, 7
    %v2161 = vrot.slane %v2153, 7
    %v2162 = vrot.slane %v2154, 7
    %v2163 = vsel %vm235, %v2159, %v2161
    %v2164 = vsel %vm235, %v2160, %v2162
    %v2165 = vsel %vm235, %v2157, %v2159
    %v2166 = vsel %vm235, %v2158, %v2160
    %v2167 = vsel %vm235, %v2155, %v2157
    %v2168 = vsel %vm235, %v2156, %v2158
    %v2169 = vsel %vm235, %v2161, %v2155
    %v2170 = vsel %vm235, %v2162, %v2156
    %v2171 = vsel %vm285, %v2169, 0.0
    %v2172 = vsel %vm285, %v2170, 0.0
    %v2173 = vsel %vm286, %v2167, 0.0
    %v2174 = vsel %vm286, %v2168, 0.0
    %v2175 = vsel %vm287, %v2165, 0.0
    %v2176 = vsel %vm287, %v2166, 0.0
    %v2177 = vsel %vm288, %v2163, 0.0
    %v2178 = vsel %vm288, %v2164, 0.0
    %v2179 = vrot.slane %v2147, 1
    %v2180 = vrot.slane %v2148, 1
    %v2181 = vrot.slane %v2149, 1
    %v2182 = vrot.slane %v2150, 1
    %v2183 = vrot.slane %v2151, 1
    %v2184 = vrot.slane %v2152, 1
    %v2185 = vrot.slane %v2153, 1
    %v2186 = vrot.slane %v2154, 1
    %v2187 = vsel %vm244, %v2183, %v2185
    %v2188 = vsel %vm244, %v2184, %v2186
    %v2189 = vsel %vm244, %v2181, %v2183
    %v2190 = vsel %vm244, %v2182, %v2184
    %v2191 = vsel %vm244, %v2179, %v2181
    %v2192 = vsel %vm244, %v2180, %v2182
    %v2193 = vsel %vm244, %v2185, %v2179
    %v2194 = vsel %vm244, %v2186, %v2180
    %v2195 = vsel %vm305, %v2191, 0.0
    %v2196 = vsel %vm305, %v2192, 0.0
    %v2197 = vsel %vm306, %v2189, 0.0
    %v2198 = vsel %vm306, %v2190, 0.0
    %v2199 = vsel %vm307, %v2187, 0.0
    %v2200 = vsel %vm307, %v2188, 0.0
    %v2201 = vsel %vm308, %v2193, 0.0
    %v2202 = vsel %vm308, %v2194, 0.0
    %v2203 = vadd.f32 %v2171, %v2147
    %v2204 = vadd.f32 %v2172, %v2148
    %v2205 = vadd.f32 %v2173, %v2149
    %v2206 = vadd.f32 %v2174, %v2150
    %v2207 = vadd.f32 %v2175, %v2151
    %v2208 = vadd.f32 %v2176, %v2152
    %v2209 = vadd.f32 %v2177, %v2153
    %v2210 = vadd.f32 %v2178, %v2154
    %v2211 = vadd.f32 %v2203, %v2195
    %v2212 = vadd.f32 %v2204, %v2196
    %v2213 = vadd.f32 %v2205, %v2197
    %v2214 = vadd.f32 %v2206, %v2198
    %v2215 = vadd.f32 %v2207, %v2199
    %v2216 = vadd.f32 %v2208, %v2200
    %v2217 = vadd.f32 %v2209, %v2201
    %v2218 = vadd.f32 %v2210, %v2202
    %v2219 = vmul.f32 %v2211, %v342
    %v2220 = vmul.f32 %v2212, %v344
    %v2221 = vmul.f32 %v2213, %v346
    %v2222 = vmul.f32 %v2214, %v348
    %v2223 = vmul.f32 %v2215, %v350
    %v2224 = vmul.f32 %v2216, %v352
    %v2225 = vmul.f32 %v2217, %v354
    %v2226 = vmul.f32 %v2218, %v356
    %v2227 = vadd.f32 %v2067, %v2219
    %v2228 = vadd.f32 %v2068, %v2220
    %v2229 = vadd.f32 %v2069, %v2221
    %v2230 = vadd.f32 %v2070, %v2222
    %v2231 = vadd.f32 %v2071, %v2223
    %v2232 = vadd.f32 %v2072, %v2224
    %v2233 = vadd.f32 %v2073, %v2225
    %v2234 = vadd.f32 %v2074, %v2226
    %2235 = vrot.lane.b32.xlu0 %v2227, 16
    %v2236 = vpop.permute.xlu0 %2235
    %2237 = vrot.lane.b32.xlu0 %v2229, 16
    %v2238 = vpop.permute.xlu0 %2237
    %2239 = vrot.lane.b32.xlu0 %v2231, 16
    %v2240 = vpop.permute.xlu0 %2239
    %2241 = vrot.lane.b32.xlu0 %v2233, 16
    %v2242 = vpop.permute.xlu0 %2241
    %2243 = vrot.lane.b32.xlu0 %v2228, 16
    %v2244 = vpop.permute.xlu0 %2243
    %2245 = vrot.lane.b32.xlu0 %v2230, 16
    %v2246 = vpop.permute.xlu0 %2245
    %2247 = vrot.lane.b32.xlu0 %v2232, 16
    %v2248 = vpop.permute.xlu0 %2247
    %2249 = vrot.lane.b32.xlu0 %v2234, 16
    %v2250 = vpop.permute.xlu0 %2249
    %v2251 = vsel %vm205, %v2236, %v2244
    %v2252 = vsel %vm205, %v2238, %v2246
    %v2253 = vsel %vm205, %v2240, %v2248
    %v2254 = vsel %vm205, %v2242, %v2250
    %v2255 = vsel %vm205, %v2244, %v2236
    %v2256 = vsel %vm205, %v2246, %v2238
    %v2257 = vsel %vm205, %v2248, %v2240
    %v2258 = vsel %vm205, %v2250, %v2242
    %v2259 = vsel %vm223, %v2255, -inf
    %v2260 = vsel %vm224, %v2251, -inf
    %v2261 = vsel %vm223, %v2256, -inf
    %v2262 = vsel %vm224, %v2252, -inf
    %v2263 = vsel %vm223, %v2257, -inf
    %v2264 = vsel %vm224, %v2253, -inf
    %v2265 = vsel %vm223, %v2258, -inf
    %v2266 = vsel %vm224, %v2254, -inf
    %2267 = vrot.lane.b32.xlu0 %v2227, 112
    %v2268 = vpop.permute.xlu0 %2267
    %2269 = vrot.lane.b32.xlu0 %v2229, 112
    %v2270 = vpop.permute.xlu0 %2269
    %2271 = vrot.lane.b32.xlu0 %v2231, 112
    %v2272 = vpop.permute.xlu0 %2271
    %2273 = vrot.lane.b32.xlu0 %v2233, 112
    %v2274 = vpop.permute.xlu0 %2273
    %2275 = vrot.lane.b32.xlu0 %v2228, 112
    %v2276 = vpop.permute.xlu0 %2275
    %2277 = vrot.lane.b32.xlu0 %v2230, 112
    %v2278 = vpop.permute.xlu0 %2277
    %2279 = vrot.lane.b32.xlu0 %v2232, 112
    %v2280 = vpop.permute.xlu0 %2279
    %2281 = vrot.lane.b32.xlu0 %v2234, 112
    %v2282 = vpop.permute.xlu0 %2281
    %v2283 = vsel %vm212, %v2268, %v2276
    %v2284 = vsel %vm212, %v2270, %v2278
    %v2285 = vsel %vm212, %v2272, %v2280
    %v2286 = vsel %vm212, %v2274, %v2282
    %v2287 = vsel %vm212, %v2276, %v2268
    %v2288 = vsel %vm212, %v2278, %v2270
    %v2289 = vsel %vm212, %v2280, %v2272
    %v2290 = vsel %vm212, %v2282, %v2274
    %v2291 = vsel %vm229, %v2283, -inf
    %v2292 = vsel %vm230, %v2287, -inf
    %v2293 = vsel %vm229, %v2284, -inf
    %v2294 = vsel %vm230, %v2288, -inf
    %v2295 = vsel %vm229, %v2285, -inf
    %v2296 = vsel %vm230, %v2289, -inf
    %v2297 = vsel %vm229, %v2286, -inf
    %v2298 = vsel %vm230, %v2290, -inf
    %v2299 = vmax.f32 %v2259, %v2227
    %v2300 = vmax.f32 %v2260, %v2228
    %v2301 = vmax.f32 %v2261, %v2229
    %v2302 = vmax.f32 %v2262, %v2230
    %v2303 = vmax.f32 %v2263, %v2231
    %v2304 = vmax.f32 %v2264, %v2232
    %v2305 = vmax.f32 %v2265, %v2233
    %v2306 = vmax.f32 %v2266, %v2234
    %v2307 = vmax.f32 %v2299, %v2291
    %v2308 = vmax.f32 %v2300, %v2292
    %v2309 = vmax.f32 %v2301, %v2293
    %v2310 = vmax.f32 %v2302, %v2294
    %v2311 = vmax.f32 %v2303, %v2295
    %v2312 = vmax.f32 %v2304, %v2296
    %v2313 = vmax.f32 %v2305, %v2297
    %v2314 = vmax.f32 %v2306, %v2298
    %v2315 = vrot.slane %v2307, 7
    %v2316 = vrot.slane %v2308, 7
    %v2317 = vrot.slane %v2309, 7
    %v2318 = vrot.slane %v2310, 7
    %v2319 = vrot.slane %v2311, 7
    %v2320 = vrot.slane %v2312, 7
    %v2321 = vrot.slane %v2313, 7
    %v2322 = vrot.slane %v2314, 7
    %v2323 = vsel %vm235, %v2319, %v2321
    %v2324 = vsel %vm235, %v2320, %v2322
    %v2325 = vsel %vm235, %v2317, %v2319
    %v2326 = vsel %vm235, %v2318, %v2320
    %v2327 = vsel %vm235, %v2315, %v2317
    %v2328 = vsel %vm235, %v2316, %v2318
    %v2329 = vsel %vm235, %v2321, %v2315
    %v2330 = vsel %vm235, %v2322, %v2316
    %v2331 = vsel %vm285, %v2329, -inf
    %v2332 = vsel %vm285, %v2330, -inf
    %v2333 = vsel %vm286, %v2327, -inf
    %v2334 = vsel %vm286, %v2328, -inf
    %v2335 = vsel %vm287, %v2325, -inf
    %v2336 = vsel %vm287, %v2326, -inf
    %v2337 = vsel %vm288, %v2323, -inf
    %v2338 = vsel %vm288, %v2324, -inf
    %v2339 = vrot.slane %v2307, 1
    %v2340 = vrot.slane %v2308, 1
    %v2341 = vrot.slane %v2309, 1
    %v2342 = vrot.slane %v2310, 1
    %v2343 = vrot.slane %v2311, 1
    %v2344 = vrot.slane %v2312, 1
    %v2345 = vrot.slane %v2313, 1
    %v2346 = vrot.slane %v2314, 1
    %v2347 = vsel %vm244, %v2343, %v2345
    %v2348 = vsel %vm244, %v2344, %v2346
    %v2349 = vsel %vm244, %v2341, %v2343
    %v2350 = vsel %vm244, %v2342, %v2344
    %v2351 = vsel %vm244, %v2339, %v2341
    %v2352 = vsel %vm244, %v2340, %v2342
    %v2353 = vsel %vm244, %v2345, %v2339
    %v2354 = vsel %vm244, %v2346, %v2340
    %v2355 = vsel %vm305, %v2351, -inf
    %v2356 = vsel %vm305, %v2352, -inf
    %v2357 = vsel %vm306, %v2349, -inf
    %v2358 = vsel %vm306, %v2350, -inf
    %v2359 = vsel %vm307, %v2347, -inf
    %v2360 = vsel %vm307, %v2348, -inf
    %v2361 = vsel %vm308, %v2353, -inf
    %v2362 = vsel %vm308, %v2354, -inf
    %v2363 = vmax.f32 %v2331, %v2307
    %v2364 = vmax.f32 %v2332, %v2308
    %v2365 = vmax.f32 %v2333, %v2309
    %v2366 = vmax.f32 %v2334, %v2310
    %v2367 = vmax.f32 %v2335, %v2311
    %v2368 = vmax.f32 %v2336, %v2312
    %v2369 = vmax.f32 %v2337, %v2313
    %v2370 = vmax.f32 %v2338, %v2314
    %v2371 = vmax.f32 %v2363, %v2355
    %v2372 = vmax.f32 %v2364, %v2356
    %v2373 = vmax.f32 %v2365, %v2357
    %v2374 = vmax.f32 %v2366, %v2358
    %v2375 = vmax.f32 %v2367, %v2359
    %v2376 = vmax.f32 %v2368, %v2360
    %v2377 = vmax.f32 %v2369, %v2361
    %v2378 = vmax.f32 %v2370, %v2362
    %v2379 = vadd.f32 %v2371, %v1479
    %v2380 = vadd.f32 %v2372, %v1481
    %v2381 = vadd.f32 %v2373, %v1485
    %v2382 = vadd.f32 %v2374, %v1487
    %v2383 = vadd.f32 %v2375, %v1491
    %v2384 = vadd.f32 %v2376, %v1493
    %v2385 = vadd.f32 %v2377, %v1497
    %v2386 = vadd.f32 %v2378, %v1499
    %2387 = vrot.lane.b32.xlu0 %v689, 16
    %v2388 = vpop.permute.xlu0 %2387
    %2389 = vrot.lane.b32.xlu0 %v691, 16
    %v2390 = vpop.permute.xlu0 %2389
    %2391 = vrot.lane.b32.xlu0 %v693, 16
    %v2392 = vpop.permute.xlu0 %2391
    %2393 = vrot.lane.b32.xlu0 %v695, 16
    %v2394 = vpop.permute.xlu0 %2393
    %2395 = vrot.lane.b32.xlu0 %v690, 16
    %v2396 = vpop.permute.xlu0 %2395
    %2397 = vrot.lane.b32.xlu0 %v692, 16
    %v2398 = vpop.permute.xlu0 %2397
    %2399 = vrot.lane.b32.xlu0 %v694, 16
    %v2400 = vpop.permute.xlu0 %2399
    %2401 = vrot.lane.b32.xlu0 %v696, 16
    %v2402 = vpop.permute.xlu0 %2401
    %v2403 = vsel %vm205, %v2388, %v2396
    %v2404 = vsel %vm205, %v2390, %v2398
    %v2405 = vsel %vm205, %v2392, %v2400
    %v2406 = vsel %vm205, %v2394, %v2402
    %v2407 = vsel %vm205, %v2396, %v2388
    %v2408 = vsel %vm205, %v2398, %v2390
    %v2409 = vsel %vm205, %v2400, %v2392
    %v2410 = vsel %vm205, %v2402, %v2394
    %v2411 = vsel %vm223, %v2407, -inf
    %v2412 = vsel %vm224, %v2403, -inf
    %v2413 = vsel %vm223, %v2408, -inf
    %v2414 = vsel %vm224, %v2404, -inf
    %v2415 = vsel %vm223, %v2409, -inf
    %v2416 = vsel %vm224, %v2405, -inf
    %v2417 = vsel %vm223, %v2410, -inf
    %v2418 = vsel %vm224, %v2406, -inf
    %2419 = vrot.lane.b32.xlu0 %v689, 112
    %v2420 = vpop.permute.xlu0 %2419
    %2421 = vrot.lane.b32.xlu0 %v691, 112
    %v2422 = vpop.permute.xlu0 %2421
    %2423 = vrot.lane.b32.xlu0 %v693, 112
    %v2424 = vpop.permute.xlu0 %2423
    %2425 = vrot.lane.b32.xlu0 %v695, 112
    %v2426 = vpop.permute.xlu0 %2425
    %2427 = vrot.lane.b32.xlu0 %v690, 112
    %v2428 = vpop.permute.xlu0 %2427
    %2429 = vrot.lane.b32.xlu0 %v692, 112
    %v2430 = vpop.permute.xlu0 %2429
    %2431 = vrot.lane.b32.xlu0 %v694, 112
    %v2432 = vpop.permute.xlu0 %2431
    %2433 = vrot.lane.b32.xlu0 %v696, 112
    %v2434 = vpop.permute.xlu0 %2433
    %v2435 = vsel %vm212, %v2420, %v2428
    %v2436 = vsel %vm212, %v2422, %v2430
    %v2437 = vsel %vm212, %v2424, %v2432
    %v2438 = vsel %vm212, %v2426, %v2434
    %v2439 = vsel %vm212, %v2428, %v2420
    %v2440 = vsel %vm212, %v2430, %v2422
    %v2441 = vsel %vm212, %v2432, %v2424
    %v2442 = vsel %vm212, %v2434, %v2426
    %v2443 = vsel %vm229, %v2435, -inf
    %v2444 = vsel %vm230, %v2439, -inf
    %v2445 = vsel %vm229, %v2436, -inf
    %v2446 = vsel %vm230, %v2440, -inf
    %v2447 = vsel %vm229, %v2437, -inf
    %v2448 = vsel %vm230, %v2441, -inf
    %v2449 = vsel %vm229, %v2438, -inf
    %v2450 = vsel %vm230, %v2442, -inf
    %v2451 = vmax.f32 %v2411, %v689
    %v2452 = vmax.f32 %v2412, %v690
    %v2453 = vmax.f32 %v2413, %v691
    %v2454 = vmax.f32 %v2414, %v692
    %v2455 = vmax.f32 %v2415, %v693
    %v2456 = vmax.f32 %v2416, %v694
    %v2457 = vmax.f32 %v2417, %v695
    %v2458 = vmax.f32 %v2418, %v696
    %v2459 = vmax.f32 %v2451, %v2443
    %v2460 = vmax.f32 %v2452, %v2444
    %v2461 = vmax.f32 %v2453, %v2445
    %v2462 = vmax.f32 %v2454, %v2446
    %v2463 = vmax.f32 %v2455, %v2447
    %v2464 = vmax.f32 %v2456, %v2448
    %v2465 = vmax.f32 %v2457, %v2449
    %v2466 = vmax.f32 %v2458, %v2450
    %v2467 = vrot.slane %v2459, 7
    %v2468 = vrot.slane %v2460, 7
    %v2469 = vrot.slane %v2461, 7
    %v2470 = vrot.slane %v2462, 7
    %v2471 = vrot.slane %v2463, 7
    %v2472 = vrot.slane %v2464, 7
    %v2473 = vrot.slane %v2465, 7
    %v2474 = vrot.slane %v2466, 7
    %v2475 = vsel %vm235, %v2471, %v2473
    %v2476 = vsel %vm235, %v2472, %v2474
    %v2477 = vsel %vm235, %v2469, %v2471
    %v2478 = vsel %vm235, %v2470, %v2472
    %v2479 = vsel %vm235, %v2467, %v2469
    %v2480 = vsel %vm235, %v2468, %v2470
    %v2481 = vsel %vm235, %v2473, %v2467
    %v2482 = vsel %vm235, %v2474, %v2468
    %v2483 = vsel %vm285, %v2481, -inf
    %v2484 = vsel %vm285, %v2482, -inf
    %v2485 = vsel %vm286, %v2479, -inf
    %v2486 = vsel %vm286, %v2480, -inf
    %v2487 = vsel %vm287, %v2477, -inf
    %v2488 = vsel %vm287, %v2478, -inf
    %v2489 = vsel %vm288, %v2475, -inf
    %v2490 = vsel %vm288, %v2476, -inf
    %v2491 = vrot.slane %v2459, 1
    %v2492 = vrot.slane %v2460, 1
    %v2493 = vrot.slane %v2461, 1
    %v2494 = vrot.slane %v2462, 1
    %v2495 = vrot.slane %v2463, 1
    %v2496 = vrot.slane %v2464, 1
    %v2497 = vrot.slane %v2465, 1
    %v2498 = vrot.slane %v2466, 1
    %v2499 = vsel %vm244, %v2495, %v2497
    %v2500 = vsel %vm244, %v2496, %v2498
    %v2501 = vsel %vm244, %v2493, %v2495
    %v2502 = vsel %vm244, %v2494, %v2496
    %v2503 = vsel %vm244, %v2491, %v2493
    %v2504 = vsel %vm244, %v2492, %v2494
    %v2505 = vsel %vm244, %v2497, %v2491
    %v2506 = vsel %vm244, %v2498, %v2492
    %v2507 = vsel %vm305, %v2503, -inf
    %v2508 = vsel %vm305, %v2504, -inf
    %v2509 = vsel %vm306, %v2501, -inf
    %v2510 = vsel %vm306, %v2502, -inf
    %v2511 = vsel %vm307, %v2499, -inf
    %v2512 = vsel %vm307, %v2500, -inf
    %v2513 = vsel %vm308, %v2505, -inf
    %v2514 = vsel %vm308, %v2506, -inf
    %v2515 = vmax.f32 %v2483, %v2459
    %v2516 = vmax.f32 %v2484, %v2460
    %v2517 = vmax.f32 %v2485, %v2461
    %v2518 = vmax.f32 %v2486, %v2462
    %v2519 = vmax.f32 %v2487, %v2463
    %v2520 = vmax.f32 %v2488, %v2464
    %v2521 = vmax.f32 %v2489, %v2465
    %v2522 = vmax.f32 %v2490, %v2466
    %v2523 = vmax.f32 %v2515, %v2507
    %v2524 = vmax.f32 %v2516, %v2508
    %v2525 = vmax.f32 %v2517, %v2509
    %v2526 = vmax.f32 %v2518, %v2510
    %v2527 = vmax.f32 %v2519, %v2511
    %v2528 = vmax.f32 %v2520, %v2512
    %v2529 = vmax.f32 %v2521, %v2513
    %v2530 = vmax.f32 %v2522, %v2514
    %v2531 = vadd.f32 %v2379, %v2523
    %v2532 = vadd.f32 %v2380, %v2524
    %v2533 = vadd.f32 %v2381, %v2525
    %v2534 = vadd.f32 %v2382, %v2526
    %v2535 = vadd.f32 %v2383, %v2527
    %v2536 = vadd.f32 %v2384, %v2528
    %v2537 = vadd.f32 %v2385, %v2529
    %v2538 = vadd.f32 %v2386, %v2530
    %v2539 = vadd.f32 %v2531, %v1084
    %v2540 = vadd.f32 %v2532, %v1086
    %v2541 = vadd.f32 %v2533, %v1090
    %v2542 = vadd.f32 %v2534, %v1092
    %v2543 = vadd.f32 %v2535, %v1096
    %v2544 = vadd.f32 %v2536, %v1098
    %v2545 = vadd.f32 %v2537, %v1102
    %v2546 = vadd.f32 %v2538, %v1104
    %2547 = vst [vmem:[#allocation19] sm:$0xff] %v2227
    %2548 = vst [vmem:[#allocation19 + $0x8] sm:$0xff] %v2228
    %2549 = vst [vmem:[#allocation19 + $0x10] sm:$0xff] %v2229
    %2550 = vst [vmem:[#allocation19 + $0x18] sm:$0xff] %v2230
    %2551 = vst [vmem:[#allocation19 + $0x20] sm:$0xff] %v2231
    %2552 = vst [vmem:[#allocation19 + $0x28] sm:$0xff] %v2232
    %2553 = vst [vmem:[#allocation19 + $0x30] sm:$0xff] %v2233
    %2554 = vst [vmem:[#allocation19 + $0x38] sm:$0xff] %v2234
    %2555 = vst [vmem:[#allocation20] sm:$0xff] %v2539
    %2556 = vst [vmem:[#allocation20 + $0x8] sm:$0xff] %v2540
    %2557 = vst [vmem:[#allocation20 + $0x10] sm:$0xff] %v2541
    %2558 = vst [vmem:[#allocation20 + $0x18] sm:$0xff] %v2542
    %2559 = vst [vmem:[#allocation20 + $0x20] sm:$0xff] %v2543
    %2560 = vst [vmem:[#allocation20 + $0x28] sm:$0xff] %v2544
    %2561 = vst [vmem:[#allocation20 + $0x30] sm:$0xff] %v2545
    %2562 = vst [vmem:[#allocation20 + $0x38] sm:$0xff] %v2546
    // Predicated region
    $region118: #{tpu_custom_call.1} parent=1 // pred_check
      _
    $region119: #{tpu_custom_call.1} parent=1 // pred_check_branch
      %2564 = sbr.rel (0) target = $region121
    $region120: #{tpu_custom_call.1} parent=1 // pred_region
      %s2566 = ssub.s32 1024, 1024
      %2567 = vsyncadd [#allocation4], %s2566
      %s2568 = sshll.u32 [#allocation19], 4
      %s2569 = int_to_ptr.vmem [resolvable:$true] %s2568
      %2574 = dma.vmem_to_hbm [thread:$0]  %s2569, 1024, %s19, [#allocation4], 256, 256, 16
    $region121: #{tpu_custom_call.1} parent=1 // pred_fallthru
      _
    // Predicated region
    $region122: #{tpu_custom_call.1} parent=1 // pred_check
      _
    $region123: #{tpu_custom_call.1} parent=1 // pred_check_branch
      %2576 = sbr.rel (0) target = $region125
    $region124: #{tpu_custom_call.1} parent=1 // pred_region
      %s2578 = ssub.s32 1024, 1024
      %2579 = vsyncadd [#allocation21], %s2578
      %s2580 = sshll.u32 [#allocation20], 4
      %s2581 = int_to_ptr.vmem [resolvable:$true] %s2580
      %2586 = dma.vmem_to_hbm [thread:$0]  %s2581, 1024, %s20, [#allocation21], 256, 256, 16
    $region125: #{tpu_custom_call.1} parent=1 // pred_fallthru
      _
    // Predicated region
    $region126: #{tpu_custom_call.1} parent=1 // pred_check
      _
    $region127: #{tpu_custom_call.1} parent=1 // pred_check_branch
      %2588 = sbr.rel (0) target = $region129
    $region128: #{tpu_custom_call.1} parent=1 // pred_region
      %2589 = dma.done [#allocation4], 1024
    $region129: #{tpu_custom_call.1} parent=1 // pred_fallthru
      _
    // Predicated region
    $region130: #{tpu_custom_call.1} parent=1 // pred_check
      _
    $region131: #{tpu_custom_call.1} parent=1 // pred_check_branch
      %2591 = sbr.rel (0) target = $region133
    $region132: #{tpu_custom_call.1} parent=1 // pred_region
      %2592 = dma.done [#allocation21], 1024
    $region133: #{tpu_custom_call.1} parent=1 // pred_fallthru
      _
    %2593 = vsyncpa [#allocation3], 1
    %2594 = vsyncpa [#allocation6], 1
    %2595 = vsyncpa [#allocation9], 1
    %2596 = vsyncpa [#allocation12], 1
    %2597 = vsyncpa [#allocation15], 1
    %2598 = vsyncpa [#allocation18], 1
    %2599 = vsyncpa [#allocation4], 1
    %2600 = vsyncpa [#allocation21], 1

</llo_original>
